<compile_context>
chip_gen: v7x
topology: tpu7x:2x2x1
jax: 0.10.0
libtpu: 0.0.40
codegen_flags: <defaults>
</compile_context>

<pallas_src>
import functools
import math

import jax
import jax.numpy as jnp
from jax.experimental import pallas as pl
from jax.experimental.pallas import tpu as pltpu

D_MODEL = 256     # module default d_model
N_HEAD = 4
N_LAYERS = 3
D_FF = 512
LN_EPS = 1e-5     # torch.nn.LayerNorm default

VMEM_LIMIT_BYTES = 32 * 1024 * 1024   # safe on v5e/v6e (128 MiB phys) and v7x (64 MiB)


def _layernorm_rows(y, gamma, beta, eps=LN_EPS):
    """Row-wise LayerNorm in f32. y: (R, D); gamma/beta: (1, D)."""
    mu = jnp.mean(y, axis=-1, keepdims=True)
    yc = y - mu
    var = jnp.mean(yc * yc, axis=-1, keepdims=True)
    return yc * jax.lax.rsqrt(var + eps) * gamma + beta


def _resident_spec(a):
    """Full-array block with a constant index_map → operand stays VMEM resident."""
    nd = a.ndim
    return pl.BlockSpec(a.shape, lambda *args, nd=nd: (0,) * nd)


# ------------------------- fused encoder layer (one kernel) -------------------------

def _encoder_layer_kernel(x_ref, wqkv_ref, bqkv_ref, wo_ref, bo_ref,
                          g1_ref, b1_ref, wff1_ref, bff1_ref,
                          wff2_ref, bff2_ref, g2_ref, b2_ref,
                          o_ref, *aw_refs, nhead, scale, need_weights):
    tm, L, D = x_ref.shape
    dh = D // nhead
    cd = x_ref.dtype                                    # MXU compute dtype (bf16)

    x = x_ref[...]                                      # (tm, L, D) cd
    xr = x.reshape(tm * L, D)                           # leading-dim merge (free)
    x_f32 = xr.astype(jnp.float32)

    # ---- QKV projection (MXU, f32 accumulate) ----
    qkv = jnp.dot(xr, wqkv_ref[...], preferred_element_type=jnp.float32)
    qkv = (qkv + bqkv_ref[...]).reshape(tm, L, 3 * D)   # (tm, L, 3D) f32

    # ---- multi-head attention with out_proj folded per head ----
    wo = wo_ref[...]                                    # (D, D) cd
    acc = bo_ref[...] + x_f32                           # out_proj bias + residual, f32
    if need_weights:
        aw_sum = jnp.zeros((tm, L, L), jnp.float32)
    for h in range(nhead):                              # static unrolled head loop
        q_h = qkv[:, :, h * dh:(h + 1) * dh].astype(cd)
        k_h = qkv[:, :, D + h * dh:D + (h + 1) * dh].astype(cd)
        v_h = qkv[:, :, 2 * D + h * dh:2 * D + (h + 1) * dh].astype(cd)
        s = jnp.einsum('bqd,bkd->bqk', q_h, k_h,
                       preferred_element_type=jnp.float32) * scale
        s = s - jnp.max(s, axis=-1, keepdims=True)
        e = jnp.exp(s)
        p = e * pl.reciprocal(jnp.sum(e, axis=-1, keepdims=True), approx=True)
        if need_weights:
            aw_sum = aw_sum + p
        a_h = jnp.einsum('bqk,bkd->bqd', p.astype(cd), v_h,
                         preferred_element_type=jnp.float32)          # (tm, L, dh)
        # out_proj(concat_h a_h) == sum_h a_h @ W_o[h*dh:(h+1)*dh, :]  (no concatenate)
        acc = acc + jnp.dot(a_h.reshape(tm * L, dh).astype(cd),
                            wo[h * dh:(h + 1) * dh, :],
                            preferred_element_type=jnp.float32)
    if need_weights:
        aw_refs[0][...] = (aw_sum * (1.0 / nhead)).astype(aw_refs[0].dtype)

    # ---- residual + LayerNorm1 (f32) ----
    x1 = _layernorm_rows(acc, g1_ref[...], b1_ref[...])                 # (tm*L, D) f32

    # ---- fused FFN: relu(x1 @ W1 + b1) @ W2 + b2, residual, LayerNorm2 ----
    h1 = jnp.dot(x1.astype(cd), wff1_ref[...], preferred_element_type=jnp.float32)
    h1 = jnp.maximum(h1 + bff1_ref[...], 0.0)
    y2 = jnp.dot(h1.astype(cd), wff2_ref[...], preferred_element_type=jnp.float32)
    y2 = y2 + bff2_ref[...] + x1
    x2 = _layernorm_rows(y2, g2_ref[...], b2_ref[...])

    o_ref[...] = x2.reshape(tm, L, D).astype(o_ref.dtype)


def encoder_layer(x, lp, *, nhead, need_weights, tm_max=64):
    """x: (M, L, D) in compute dtype.  Returns (x_out (M, L, D), attn_w or None)."""
    M, L, D = x.shape
    dh = D // nhead
    scale = 1.0 / math.sqrt(dh)
    tm = min(M, tm_max)
    grid = (pl.cdiv(M, tm),)
    cd = x.dtype

    operands = [
        x,
        lp["w_qkv"].astype(cd), lp["b_qkv"].reshape(1, -1),
        lp["w_o"].astype(cd), lp["b_o"].reshape(1, -1),
        lp["ln1_g"].reshape(1, -1), lp["ln1_b"].reshape(1, -1),
        lp["w_ff1"].astype(cd), lp["b_ff1"].reshape(1, -1),
        lp["w_ff2"].astype(cd), lp["b_ff2"].reshape(1, -1),
        lp["ln2_g"].reshape(1, -1), lp["ln2_b"].reshape(1, -1),
    ]
    in_specs = [pl.BlockSpec((tm, L, D), lambda i: (i, 0, 0))]
    in_specs += [_resident_spec(a) for a in operands[1:]]

    kernel = functools.partial(_encoder_layer_kernel, nhead=nhead, scale=scale,
                               need_weights=need_weights)
    compiler_params = pltpu.CompilerParams(
        dimension_semantics=("parallel",),
        vmem_limit_bytes=VMEM_LIMIT_BYTES)

    if need_weights:
        out, aw = pl.pallas_call(
            kernel,
            out_shape=(jax.ShapeDtypeStruct((M, L, D), cd),
                       jax.ShapeDtypeStruct((M, L, L), jnp.float32)),
            grid_spec=pltpu.PrefetchScalarGridSpec(
                num_scalar_prefetch=0, grid=grid,
                in_specs=in_specs,
                out_specs=(pl.BlockSpec((tm, L, D), lambda i: (i, 0, 0)),
                           pl.BlockSpec((tm, L, L), lambda i: (i, 0, 0)))),
            compiler_params=compiler_params,
        )(*operands)
        return out, aw

    out = pl.pallas_call(
        kernel,
        out_shape=jax.ShapeDtypeStruct((M, L, D), cd),
        grid_spec=pltpu.PrefetchScalarGridSpec(
            num_scalar_prefetch=0, grid=grid,
            in_specs=in_specs,
            out_specs=pl.BlockSpec((tm, L, D), lambda i: (i, 0, 0))),
        compiler_params=compiler_params,
    )(*operands)
    return out, None


# --------------------- fused final LayerNorm + mean over walks ----------------------

def _final_ln_mean_kernel(x_ref, g_ref, b_ref, o_ref, *, inv_l):
    tm, L, D = x_ref.shape
    x = x_ref[...].astype(jnp.float32).reshape(tm * L, D)
    y = _layernorm_rows(x, g_ref[...], b_ref[...])                      # f32
    o_ref[...] = (jnp.sum(y.reshape(tm, L, D), axis=1) * inv_l).astype(o_ref.dtype)


def final_layernorm_mean(x, gamma, beta, *, tm_max=128):
    """x: (M, L, D) -> (M, D) f32: LayerNorm each token, then mean over the L axis."""
    M, L, D = x.shape
    tm = M if M <= tm_max else tm_max                  # tm_max is a multiple of 8
    grid = (pl.cdiv(M, tm),)
    return pl.pallas_call(
        functools.partial(_final_ln_mean_kernel, inv_l=1.0 / L),
        out_shape=jax.ShapeDtypeStruct((M, D), jnp.float32),
        grid_spec=pltpu.PrefetchScalarGridSpec(
            num_scalar_prefetch=0, grid=grid,
            in_specs=[pl.BlockSpec((tm, L, D), lambda i: (i, 0, 0)),
                      pl.BlockSpec((1, D), lambda i: (0, 0)),
                      pl.BlockSpec((1, D), lambda i: (0, 0))],
            out_specs=pl.BlockSpec((tm, D), lambda i: (i, 0))),
        compiler_params=pltpu.CompilerParams(
            dimension_semantics=("parallel",),
            vmem_limit_bytes=VMEM_LIMIT_BYTES),
    )(x, gamma.reshape(1, -1), beta.reshape(1, -1))


# --------------------------------- full forward -------------------------------------

def walk_encoder_forward(walk_token_embed, params, *, nhead=N_HEAD,
                         compute_dtype=jnp.bfloat16):
    L, N, B, d_model = walk_token_embed.shape
    M = N * B
    # Batch-major layout once up front (one pass); all kernel work is (M, L, D) blocks.
    x = jnp.transpose(walk_token_embed.reshape(L, M, d_model), (1, 0, 2))
    x = x.astype(compute_dtype)                                         # (M, L, D)

    n_layers = len(params["layers"])
    attn_weights = None
    for li, lp in enumerate(params["layers"]):
        need_w = li == n_layers - 1                    # only the last layer's weights are kept
        x, aw = encoder_layer(x, lp, nhead=nhead, need_weights=need_w)
        if need_w:
            attn_weights = aw

    walk_repr = final_layernorm_mean(x, params["lnf_g"], params["lnf_b"])
    return walk_repr.reshape(N, B, d_model), attn_weights


# ------------------------------- params / reference ---------------------------------

def init_params(key, d_model=D_MODEL, d_ff=D_FF, n_layers=N_LAYERS):
    layers = []
    for _ in range(n_layers):
        key, k1, k2, k3, k4, k5, k6 = jax.random.split(key, 7)
        s_d = 1.0 / math.sqrt(d_model)
        s_f = 1.0 / math.sqrt(d_ff)
        layers.append(dict(
            w_qkv=jax.random.normal(k1, (d_model, 3 * d_model), jnp.float32) * s_d,
            b_qkv=jax.random.normal(k2, (3 * d_model,), jnp.float32) * 0.02,
            w_o=jax.random.normal(k3, (d_model, d_model), jnp.float32) * s_d,
            b_o=jnp.zeros((d_model,), jnp.float32),
            ln1_g=jnp.ones((d_model,), jnp.float32),
            ln1_b=jnp.zeros((d_model,), jnp.float32),
            w_ff1=jax.random.normal(k4, (d_model, d_ff), jnp.float32) * s_d,
            b_ff1=jax.random.normal(k5, (d_ff,), jnp.float32) * 0.02,
            w_ff2=jax.random.normal(k6, (d_ff, d_model), jnp.float32) * s_f,
            b_ff2=jnp.zeros((d_model,), jnp.float32),
            ln2_g=jnp.ones((d_model,), jnp.float32),
            ln2_b=jnp.zeros((d_model,), jnp.float32),
        ))
    return dict(layers=layers,
                lnf_g=jnp.ones((d_model,), jnp.float32),
                lnf_b=jnp.zeros((d_model,), jnp.float32))


def _reference_forward(walk_token_embed, params, *, nhead=N_HEAD):
    L, N, B, d_model = walk_token_embed.shape
    M = N * B
    dh = d_model // nhead
    scale = 1.0 / math.sqrt(dh)
    x = jnp.transpose(walk_token_embed.reshape(L, M, d_model), (1, 0, 2))   # (M, L, D)
    aw = None
    for lp in params["layers"]:
        qkv = x @ lp["w_qkv"] + lp["b_qkv"]
        q, k, v = jnp.split(qkv, 3, axis=-1)
        q = q.reshape(M, L, nhead, dh)
        k = k.reshape(M, L, nhead, dh)
        v = v.reshape(M, L, nhead, dh)
        s = jnp.einsum('mqhd,mkhd->mhqk', q, k) * scale
        p = jax.nn.softmax(s, axis=-1)
        aw = jnp.mean(p, axis=1)                                            # (M, L, L)
        a = jnp.einsum('mhqk,mkhd->mqhd', p, v).reshape(M, L, d_model)
        x = _layernorm_rows(x + a @ lp["w_o"] + lp["b_o"], lp["ln1_g"], lp["ln1_b"])
        h = jnp.maximum(x @ lp["w_ff1"] + lp["b_ff1"], 0.0)
        x = _layernorm_rows(x + h @ lp["w_ff2"] + lp["b_ff2"], lp["ln2_g"], lp["ln2_b"])
    x = _layernorm_rows(x, params["lnf_g"], params["lnf_b"])
    walk_repr = jnp.mean(x, axis=1).reshape(N, B, d_model)
    return walk_repr, aw


if __name__ == "__main__":
    L, N, B = 8, 2, 2          # walk length, num walks per program, batch
    key = jax.random.PRNGKey(0)
    k_x, k_p = jax.random.split(key)
    walk_token_embed = jax.random.normal(k_x, (L, N, B, D_MODEL), jnp.float32)
    params = init_params(k_p)

    walk_repr, attn_w = walk_encoder_forward(walk_token_embed, params)
    jax.block_until_ready((walk_repr, attn_w))

    ref_repr, ref_aw = _reference_forward(walk_token_embed, params)
    assert walk_repr.shape == (N, B, D_MODEL)
    assert attn_w.shape == (N * B, L, L)
    # Tolerances account for bf16 MXU operands / inter-layer activations (f32 reference).
    assert jnp.allclose(walk_repr.astype(jnp.float32), ref_repr, atol=1e-1, rtol=1e-1), \
        float(jnp.max(jnp.abs(walk_repr.astype(jnp.float32) - ref_repr)))
    assert jnp.allclose(attn_w, ref_aw, atol=7.5e-2, rtol=7.5e-2), \
        float(jnp.max(jnp.abs(attn_w - ref_aw)))
    assert jnp.allclose(jnp.sum(attn_w, axis=-1), 1.0, atol=1e-2), \
        "attention rows must sum to 1"

    print("KERNEL_OK")
</pallas_src>

<mosaic_0001>
module attributes {stable_mosaic.version = 11 : i64} {
  func.func @_encoder_layer_kernel(%arg0: i32, %arg1: memref<4x8x256xbf16, #tpu.memory_space<vmem>>, %arg2: memref<256x768xbf16, #tpu.memory_space<vmem>>, %arg3: memref<1x768xf32, #tpu.memory_space<vmem>>, %arg4: memref<256x256xbf16, #tpu.memory_space<vmem>>, %arg5: memref<1x256xf32, #tpu.memory_space<vmem>>, %arg6: memref<1x256xf32, #tpu.memory_space<vmem>>, %arg7: memref<1x256xf32, #tpu.memory_space<vmem>>, %arg8: memref<256x512xbf16, #tpu.memory_space<vmem>>, %arg9: memref<1x512xf32, #tpu.memory_space<vmem>>, %arg10: memref<512x256xbf16, #tpu.memory_space<vmem>>, %arg11: memref<1x256xf32, #tpu.memory_space<vmem>>, %arg12: memref<1x256xf32, #tpu.memory_space<vmem>>, %arg13: memref<1x256xf32, #tpu.memory_space<vmem>>, %arg14: memref<4x8x256xbf16, #tpu.memory_space<vmem>>) attributes {dimension_semantics = [#tpu.dimension_semantics<parallel>], iteration_bounds = array<i64: 1>, scalar_prefetch = 0 : i64, scratch_operands = 0 : i64, tpu.core_type = #tpu.core_type<tc>, window_params = [{transform_indices = @transform_0, window_bounds = array<i64: 4, 8, 256>}, {pipeline_mode = #tpu.pipeline_mode<synchronous>, transform_indices = @transform_1, window_bounds = array<i64: 256, 768>}, {pipeline_mode = #tpu.pipeline_mode<synchronous>, transform_indices = @transform_2, window_bounds = array<i64: 1, 768>}, {pipeline_mode = #tpu.pipeline_mode<synchronous>, transform_indices = @transform_3, window_bounds = array<i64: 256, 256>}, {pipeline_mode = #tpu.pipeline_mode<synchronous>, transform_indices = @transform_4, window_bounds = array<i64: 1, 256>}, {pipeline_mode = #tpu.pipeline_mode<synchronous>, transform_indices = @transform_5, window_bounds = array<i64: 1, 256>}, {pipeline_mode = #tpu.pipeline_mode<synchronous>, transform_indices = @transform_6, window_bounds = array<i64: 1, 256>}, {pipeline_mode = #tpu.pipeline_mode<synchronous>, transform_indices = @transform_7, window_bounds = array<i64: 256, 512>}, {pipeline_mode = #tpu.pipeline_mode<synchronous>, transform_indices = @transform_8, window_bounds = array<i64: 1, 512>}, {pipeline_mode = #tpu.pipeline_mode<synchronous>, transform_indices = @transform_9, window_bounds = array<i64: 512, 256>}, {pipeline_mode = #tpu.pipeline_mode<synchronous>, transform_indices = @transform_10, window_bounds = array<i64: 1, 256>}, {pipeline_mode = #tpu.pipeline_mode<synchronous>, transform_indices = @transform_11, window_bounds = array<i64: 1, 256>}, {pipeline_mode = #tpu.pipeline_mode<synchronous>, transform_indices = @transform_12, window_bounds = array<i64: 1, 256>}, {transform_indices = @transform_13, window_bounds = array<i64: 4, 8, 256>}]} {
    %c0 = arith.constant 0 : index
    %c0_0 = arith.constant 0 : index
    %c0_1 = arith.constant 0 : index
    %0 = vector.load %arg1[%c0, %c0_0, %c0_1] : memref<4x8x256xbf16, #tpu.memory_space<vmem>>, vector<4x8x256xbf16>
    %1 = vector.shape_cast %0 : vector<4x8x256xbf16> to vector<32x256xbf16>
    %2 = arith.extf %1 : vector<32x256xbf16> to vector<32x256xf32>
    %c0_2 = arith.constant 0 : index
    %c0_3 = arith.constant 0 : index
    %3 = vector.load %arg2[%c0_2, %c0_3] : memref<256x768xbf16, #tpu.memory_space<vmem>>, vector<256x768xbf16>
    %cst = arith.constant dense<0.000000e+00> : vector<32x768xf32>
    %4 = tpu.matmul %1, %3, %cst {dimension_numbers = #tpu.dot_dimension_numbers<[1], [0], [0], [1], [0, 0, 1, 1], [], []>} : vector<32x256xbf16>, vector<256x768xbf16>, vector<32x768xf32> -> vector<32x768xf32>
    %c0_4 = arith.constant 0 : index
    %c0_5 = arith.constant 0 : index
    %5 = vector.load %arg3[%c0_4, %c0_5] : memref<1x768xf32, #tpu.memory_space<vmem>>, vector<1x768xf32>
    %6 = vector.broadcast %5 : vector<1x768xf32> to vector<32x768xf32>
    %7 = arith.addf %4, %6 : vector<32x768xf32>
    %8 = vector.shape_cast %7 : vector<32x768xf32> to vector<4x8x768xf32>
    %c0_6 = arith.constant 0 : index
    %c0_7 = arith.constant 0 : index
    %9 = vector.load %arg4[%c0_6, %c0_7] : memref<256x256xbf16, #tpu.memory_space<vmem>>, vector<256x256xbf16>
    %c0_8 = arith.constant 0 : index
    %c0_9 = arith.constant 0 : index
    %10 = vector.load %arg5[%c0_8, %c0_9] : memref<1x256xf32, #tpu.memory_space<vmem>>, vector<1x256xf32>
    %11 = vector.broadcast %10 : vector<1x256xf32> to vector<32x256xf32>
    %12 = arith.addf %11, %2 : vector<32x256xf32>
    %13 = vector.extract_strided_slice %8 {offsets = [0, 0, 0], sizes = [4, 8, 64], strides = [1, 1, 1]} : vector<4x8x768xf32> to vector<4x8x64xf32>
    %14 = arith.truncf %13 : vector<4x8x64xf32> to vector<4x8x64xbf16>
    %15 = vector.extract_strided_slice %8 {offsets = [0, 0, 256], sizes = [4, 8, 64], strides = [1, 1, 1]} : vector<4x8x768xf32> to vector<4x8x64xf32>
    %16 = arith.truncf %15 : vector<4x8x64xf32> to vector<4x8x64xbf16>
    %17 = vector.extract_strided_slice %8 {offsets = [0, 0, 512], sizes = [4, 8, 64], strides = [1, 1, 1]} : vector<4x8x768xf32> to vector<4x8x64xf32>
    %18 = arith.truncf %17 : vector<4x8x64xf32> to vector<4x8x64xbf16>
    "tpu.trace_start"() <{level = 10 : i32, message = "bqd,bkd->bqk"}> : () -> ()
    %cst_10 = arith.constant dense<0.000000e+00> : vector<4x8x8xf32>
    %19 = tpu.matmul %14, %16, %cst_10 {dimension_numbers = #tpu.dot_dimension_numbers<[2], [2], [1], [1], [0, 0, 0, 1, 1, 1], [0], [0]>} : vector<4x8x64xbf16>, vector<4x8x64xbf16>, vector<4x8x8xf32> -> vector<4x8x8xf32>
    "tpu.trace_stop"() : () -> ()
    %cst_11 = arith.constant 1.250000e-01 : f32
    %20 = vector.broadcast %cst_11 : f32 to vector<4x8x8xf32>
    %21 = arith.mulf %19, %20 : vector<4x8x8xf32>
    %cst_12 = arith.constant dense<0xFF800000> : vector<4x8xf32>
    %22 = vector.multi_reduction <maximumf>, %21, %cst_12 [2] : vector<4x8x8xf32> to vector<4x8xf32>
    %23 = vector.shape_cast %22 : vector<4x8xf32> to vector<4x8x1xf32>
    %24 = vector.broadcast %23 : vector<4x8x1xf32> to vector<4x8x8xf32>
    %25 = arith.subf %21, %24 : vector<4x8x8xf32>
    %26 = math.exp %25 : vector<4x8x8xf32>
    %cst_13 = arith.constant dense<0.000000e+00> : vector<4x8xf32>
    %27 = vector.multi_reduction <add>, %26, %cst_13 [2] : vector<4x8x8xf32> to vector<4x8xf32>
    %28 = vector.shape_cast %27 : vector<4x8xf32> to vector<4x8x1xf32>
    %29 = tpu.reciprocal %28 {approx = true} : vector<4x8x1xf32> -> vector<4x8x1xf32>
    %30 = vector.broadcast %29 : vector<4x8x1xf32> to vector<4x8x8xf32>
    %31 = arith.mulf %26, %30 : vector<4x8x8xf32>
    %32 = arith.truncf %31 : vector<4x8x8xf32> to vector<4x8x8xbf16>
    "tpu.trace_start"() <{level = 10 : i32, message = "bqk,bkd->bqd"}> : () -> ()
    %cst_14 = arith.constant dense<0.000000e+00> : vector<4x8x64xf32>
    %33 = tpu.matmul %32, %18, %cst_14 {dimension_numbers = #tpu.dot_dimension_numbers<[2], [1], [1], [2], [0, 0, 0, 1, 1, 2], [0], [0]>} : vector<4x8x8xbf16>, vector<4x8x64xbf16>, vector<4x8x64xf32> -> vector<4x8x64xf32>
    "tpu.trace_stop"() : () -> ()
    %34 = vector.shape_cast %33 : vector<4x8x64xf32> to vector<32x64xf32>
    %35 = arith.truncf %34 : vector<32x64xf32> to vector<32x64xbf16>
    %36 = vector.extract_strided_slice %9 {offsets = [0, 0], sizes = [64, 256], strides = [1, 1]} : vector<256x256xbf16> to vector<64x256xbf16>
    %cst_15 = arith.constant dense<0.000000e+00> : vector<32x256xf32>
    %37 = tpu.matmul %35, %36, %cst_15 {dimension_numbers = #tpu.dot_dimension_numbers<[1], [0], [0], [1], [0, 0, 1, 1], [], []>} : vector<32x64xbf16>, vector<64x256xbf16>, vector<32x256xf32> -> vector<32x256xf32>
    %38 = arith.addf %12, %37 : vector<32x256xf32>
    %39 = vector.extract_strided_slice %8 {offsets = [0, 0, 64], sizes = [4, 8, 64], strides = [1, 1, 1]} : vector<4x8x768xf32> to vector<4x8x64xf32>
    %40 = arith.truncf %39 : vector<4x8x64xf32> to vector<4x8x64xbf16>
    %41 = vector.extract_strided_slice %8 {offsets = [0, 0, 320], sizes = [4, 8, 64], strides = [1, 1, 1]} : vector<4x8x768xf32> to vector<4x8x64xf32>
    %42 = arith.truncf %41 : vector<4x8x64xf32> to vector<4x8x64xbf16>
    %43 = vector.extract_strided_slice %8 {offsets = [0, 0, 576], sizes = [4, 8, 64], strides = [1, 1, 1]} : vector<4x8x768xf32> to vector<4x8x64xf32>
    %44 = arith.truncf %43 : vector<4x8x64xf32> to vector<4x8x64xbf16>
    "tpu.trace_start"() <{level = 10 : i32, message = "bqd,bkd->bqk"}> : () -> ()
    %cst_16 = arith.constant dense<0.000000e+00> : vector<4x8x8xf32>
    %45 = tpu.matmul %40, %42, %cst_16 {dimension_numbers = #tpu.dot_dimension_numbers<[2], [2], [1], [1], [0, 0, 0, 1, 1, 1], [0], [0]>} : vector<4x8x64xbf16>, vector<4x8x64xbf16>, vector<4x8x8xf32> -> vector<4x8x8xf32>
    "tpu.trace_stop"() : () -> ()
    %cst_17 = arith.constant 1.250000e-01 : f32
    %46 = vector.broadcast %cst_17 : f32 to vector<4x8x8xf32>
    %47 = arith.mulf %45, %46 : vector<4x8x8xf32>
    %cst_18 = arith.constant dense<0xFF800000> : vector<4x8xf32>
    %48 = vector.multi_reduction <maximumf>, %47, %cst_18 [2] : vector<4x8x8xf32> to vector<4x8xf32>
    %49 = vector.shape_cast %48 : vector<4x8xf32> to vector<4x8x1xf32>
    %50 = vector.broadcast %49 : vector<4x8x1xf32> to vector<4x8x8xf32>
    %51 = arith.subf %47, %50 : vector<4x8x8xf32>
    %52 = math.exp %51 : vector<4x8x8xf32>
    %cst_19 = arith.constant dense<0.000000e+00> : vector<4x8xf32>
    %53 = vector.multi_reduction <add>, %52, %cst_19 [2] : vector<4x8x8xf32> to vector<4x8xf32>
    %54 = vector.shape_cast %53 : vector<4x8xf32> to vector<4x8x1xf32>
    %55 = tpu.reciprocal %54 {approx = true} : vector<4x8x1xf32> -> vector<4x8x1xf32>
    %56 = vector.broadcast %55 : vector<4x8x1xf32> to vector<4x8x8xf32>
    %57 = arith.mulf %52, %56 : vector<4x8x8xf32>
    %58 = arith.truncf %57 : vector<4x8x8xf32> to vector<4x8x8xbf16>
    "tpu.trace_start"() <{level = 10 : i32, message = "bqk,bkd->bqd"}> : () -> ()
    %cst_20 = arith.constant dense<0.000000e+00> : vector<4x8x64xf32>
    %59 = tpu.matmul %58, %44, %cst_20 {dimension_numbers = #tpu.dot_dimension_numbers<[2], [1], [1], [2], [0, 0, 0, 1, 1, 2], [0], [0]>} : vector<4x8x8xbf16>, vector<4x8x64xbf16>, vector<4x8x64xf32> -> vector<4x8x64xf32>
    "tpu.trace_stop"() : () -> ()
    %60 = vector.shape_cast %59 : vector<4x8x64xf32> to vector<32x64xf32>
    %61 = arith.truncf %60 : vector<32x64xf32> to vector<32x64xbf16>
    %62 = vector.extract_strided_slice %9 {offsets = [64, 0], sizes = [64, 256], strides = [1, 1]} : vector<256x256xbf16> to vector<64x256xbf16>
    %cst_21 = arith.constant dense<0.000000e+00> : vector<32x256xf32>
    %63 = tpu.matmul %61, %62, %cst_21 {dimension_numbers = #tpu.dot_dimension_numbers<[1], [0], [0], [1], [0, 0, 1, 1], [], []>} : vector<32x64xbf16>, vector<64x256xbf16>, vector<32x256xf32> -> vector<32x256xf32>
    %64 = arith.addf %38, %63 : vector<32x256xf32>
    %65 = vector.extract_strided_slice %8 {offsets = [0, 0, 128], sizes = [4, 8, 64], strides = [1, 1, 1]} : vector<4x8x768xf32> to vector<4x8x64xf32>
    %66 = arith.truncf %65 : vector<4x8x64xf32> to vector<4x8x64xbf16>
    %67 = vector.extract_strided_slice %8 {offsets = [0, 0, 384], sizes = [4, 8, 64], strides = [1, 1, 1]} : vector<4x8x768xf32> to vector<4x8x64xf32>
    %68 = arith.truncf %67 : vector<4x8x64xf32> to vector<4x8x64xbf16>
    %69 = vector.extract_strided_slice %8 {offsets = [0, 0, 640], sizes = [4, 8, 64], strides = [1, 1, 1]} : vector<4x8x768xf32> to vector<4x8x64xf32>
    %70 = arith.truncf %69 : vector<4x8x64xf32> to vector<4x8x64xbf16>
    "tpu.trace_start"() <{level = 10 : i32, message = "bqd,bkd->bqk"}> : () -> ()
    %cst_22 = arith.constant dense<0.000000e+00> : vector<4x8x8xf32>
    %71 = tpu.matmul %66, %68, %cst_22 {dimension_numbers = #tpu.dot_dimension_numbers<[2], [2], [1], [1], [0, 0, 0, 1, 1, 1], [0], [0]>} : vector<4x8x64xbf16>, vector<4x8x64xbf16>, vector<4x8x8xf32> -> vector<4x8x8xf32>
    "tpu.trace_stop"() : () -> ()
    %cst_23 = arith.constant 1.250000e-01 : f32
    %72 = vector.broadcast %cst_23 : f32 to vector<4x8x8xf32>
    %73 = arith.mulf %71, %72 : vector<4x8x8xf32>
    %cst_24 = arith.constant dense<0xFF800000> : vector<4x8xf32>
    %74 = vector.multi_reduction <maximumf>, %73, %cst_24 [2] : vector<4x8x8xf32> to vector<4x8xf32>
    %75 = vector.shape_cast %74 : vector<4x8xf32> to vector<4x8x1xf32>
    %76 = vector.broadcast %75 : vector<4x8x1xf32> to vector<4x8x8xf32>
    %77 = arith.subf %73, %76 : vector<4x8x8xf32>
    %78 = math.exp %77 : vector<4x8x8xf32>
    %cst_25 = arith.constant dense<0.000000e+00> : vector<4x8xf32>
    %79 = vector.multi_reduction <add>, %78, %cst_25 [2] : vector<4x8x8xf32> to vector<4x8xf32>
    %80 = vector.shape_cast %79 : vector<4x8xf32> to vector<4x8x1xf32>
    %81 = tpu.reciprocal %80 {approx = true} : vector<4x8x1xf32> -> vector<4x8x1xf32>
    %82 = vector.broadcast %81 : vector<4x8x1xf32> to vector<4x8x8xf32>
    %83 = arith.mulf %78, %82 : vector<4x8x8xf32>
    %84 = arith.truncf %83 : vector<4x8x8xf32> to vector<4x8x8xbf16>
    "tpu.trace_start"() <{level = 10 : i32, message = "bqk,bkd->bqd"}> : () -> ()
    %cst_26 = arith.constant dense<0.000000e+00> : vector<4x8x64xf32>
    %85 = tpu.matmul %84, %70, %cst_26 {dimension_numbers = #tpu.dot_dimension_numbers<[2], [1], [1], [2], [0, 0, 0, 1, 1, 2], [0], [0]>} : vector<4x8x8xbf16>, vector<4x8x64xbf16>, vector<4x8x64xf32> -> vector<4x8x64xf32>
    "tpu.trace_stop"() : () -> ()
    %86 = vector.shape_cast %85 : vector<4x8x64xf32> to vector<32x64xf32>
    %87 = arith.truncf %86 : vector<32x64xf32> to vector<32x64xbf16>
    %88 = vector.extract_strided_slice %9 {offsets = [128, 0], sizes = [64, 256], strides = [1, 1]} : vector<256x256xbf16> to vector<64x256xbf16>
    %cst_27 = arith.constant dense<0.000000e+00> : vector<32x256xf32>
    %89 = tpu.matmul %87, %88, %cst_27 {dimension_numbers = #tpu.dot_dimension_numbers<[1], [0], [0], [1], [0, 0, 1, 1], [], []>} : vector<32x64xbf16>, vector<64x256xbf16>, vector<32x256xf32> -> vector<32x256xf32>
    %90 = arith.addf %64, %89 : vector<32x256xf32>
    %91 = vector.extract_strided_slice %8 {offsets = [0, 0, 192], sizes = [4, 8, 64], strides = [1, 1, 1]} : vector<4x8x768xf32> to vector<4x8x64xf32>
    %92 = arith.truncf %91 : vector<4x8x64xf32> to vector<4x8x64xbf16>
    %93 = vector.extract_strided_slice %8 {offsets = [0, 0, 448], sizes = [4, 8, 64], strides = [1, 1, 1]} : vector<4x8x768xf32> to vector<4x8x64xf32>
    %94 = arith.truncf %93 : vector<4x8x64xf32> to vector<4x8x64xbf16>
    %95 = vector.extract_strided_slice %8 {offsets = [0, 0, 704], sizes = [4, 8, 64], strides = [1, 1, 1]} : vector<4x8x768xf32> to vector<4x8x64xf32>
    %96 = arith.truncf %95 : vector<4x8x64xf32> to vector<4x8x64xbf16>
    "tpu.trace_start"() <{level = 10 : i32, message = "bqd,bkd->bqk"}> : () -> ()
    %cst_28 = arith.constant dense<0.000000e+00> : vector<4x8x8xf32>
    %97 = tpu.matmul %92, %94, %cst_28 {dimension_numbers = #tpu.dot_dimension_numbers<[2], [2], [1], [1], [0, 0, 0, 1, 1, 1], [0], [0]>} : vector<4x8x64xbf16>, vector<4x8x64xbf16>, vector<4x8x8xf32> -> vector<4x8x8xf32>
    "tpu.trace_stop"() : () -> ()
    %cst_29 = arith.constant 1.250000e-01 : f32
    %98 = vector.broadcast %cst_29 : f32 to vector<4x8x8xf32>
    %99 = arith.mulf %97, %98 : vector<4x8x8xf32>
    %cst_30 = arith.constant dense<0xFF800000> : vector<4x8xf32>
    %100 = vector.multi_reduction <maximumf>, %99, %cst_30 [2] : vector<4x8x8xf32> to vector<4x8xf32>
    %101 = vector.shape_cast %100 : vector<4x8xf32> to vector<4x8x1xf32>
    %102 = vector.broadcast %101 : vector<4x8x1xf32> to vector<4x8x8xf32>
    %103 = arith.subf %99, %102 : vector<4x8x8xf32>
    %104 = math.exp %103 : vector<4x8x8xf32>
    %cst_31 = arith.constant dense<0.000000e+00> : vector<4x8xf32>
    %105 = vector.multi_reduction <add>, %104, %cst_31 [2] : vector<4x8x8xf32> to vector<4x8xf32>
    %106 = vector.shape_cast %105 : vector<4x8xf32> to vector<4x8x1xf32>
    %107 = tpu.reciprocal %106 {approx = true} : vector<4x8x1xf32> -> vector<4x8x1xf32>
    %108 = vector.broadcast %107 : vector<4x8x1xf32> to vector<4x8x8xf32>
    %109 = arith.mulf %104, %108 : vector<4x8x8xf32>
    %110 = arith.truncf %109 : vector<4x8x8xf32> to vector<4x8x8xbf16>
    "tpu.trace_start"() <{level = 10 : i32, message = "bqk,bkd->bqd"}> : () -> ()
    %cst_32 = arith.constant dense<0.000000e+00> : vector<4x8x64xf32>
    %111 = tpu.matmul %110, %96, %cst_32 {dimension_numbers = #tpu.dot_dimension_numbers<[2], [1], [1], [2], [0, 0, 0, 1, 1, 2], [0], [0]>} : vector<4x8x8xbf16>, vector<4x8x64xbf16>, vector<4x8x64xf32> -> vector<4x8x64xf32>
    "tpu.trace_stop"() : () -> ()
    %112 = vector.shape_cast %111 : vector<4x8x64xf32> to vector<32x64xf32>
    %113 = arith.truncf %112 : vector<32x64xf32> to vector<32x64xbf16>
    %114 = vector.extract_strided_slice %9 {offsets = [192, 0], sizes = [64, 256], strides = [1, 1]} : vector<256x256xbf16> to vector<64x256xbf16>
    %cst_33 = arith.constant dense<0.000000e+00> : vector<32x256xf32>
    %115 = tpu.matmul %113, %114, %cst_33 {dimension_numbers = #tpu.dot_dimension_numbers<[1], [0], [0], [1], [0, 0, 1, 1], [], []>} : vector<32x64xbf16>, vector<64x256xbf16>, vector<32x256xf32> -> vector<32x256xf32>
    %116 = arith.addf %90, %115 : vector<32x256xf32>
    %c0_34 = arith.constant 0 : index
    %c0_35 = arith.constant 0 : index
    %117 = vector.load %arg6[%c0_34, %c0_35] : memref<1x256xf32, #tpu.memory_space<vmem>>, vector<1x256xf32>
    %c0_36 = arith.constant 0 : index
    %c0_37 = arith.constant 0 : index
    %118 = vector.load %arg7[%c0_36, %c0_37] : memref<1x256xf32, #tpu.memory_space<vmem>>, vector<1x256xf32>
    %cst_38 = arith.constant dense<0.000000e+00> : vector<32xf32>
    %119 = vector.multi_reduction <add>, %116, %cst_38 [1] : vector<32x256xf32> to vector<32xf32>
    %120 = vector.shape_cast %119 : vector<32xf32> to vector<32x1xf32>
    %cst_39 = arith.constant 2.560000e+02 : f32
    %121 = vector.broadcast %cst_39 : f32 to vector<32x1xf32>
    %122 = arith.divf %120, %121 : vector<32x1xf32>
    %123 = vector.broadcast %122 : vector<32x1xf32> to vector<32x256xf32>
    %124 = arith.subf %116, %123 : vector<32x256xf32>
    %125 = arith.mulf %124, %124 : vector<32x256xf32>
    %cst_40 = arith.constant dense<0.000000e+00> : vector<32xf32>
    %126 = vector.multi_reduction <add>, %125, %cst_40 [1] : vector<32x256xf32> to vector<32xf32>
    %127 = vector.shape_cast %126 : vector<32xf32> to vector<32x1xf32>
    %cst_41 = arith.constant 2.560000e+02 : f32
    %128 = vector.broadcast %cst_41 : f32 to vector<32x1xf32>
    %129 = arith.divf %127, %128 : vector<32x1xf32>
    %cst_42 = arith.constant 9.99999974E-6 : f32
    %130 = vector.broadcast %cst_42 : f32 to vector<32x1xf32>
    %131 = arith.addf %129, %130 : vector<32x1xf32>
    %132 = math.rsqrt %131 : vector<32x1xf32>
    %133 = vector.broadcast %132 : vector<32x1xf32> to vector<32x256xf32>
    %134 = arith.mulf %124, %133 : vector<32x256xf32>
    %135 = vector.broadcast %117 : vector<1x256xf32> to vector<32x256xf32>
    %136 = arith.mulf %134, %135 : vector<32x256xf32>
    %137 = vector.broadcast %118 : vector<1x256xf32> to vector<32x256xf32>
    %138 = arith.addf %136, %137 : vector<32x256xf32>
    %139 = arith.truncf %138 : vector<32x256xf32> to vector<32x256xbf16>
    %c0_43 = arith.constant 0 : index
    %c0_44 = arith.constant 0 : index
    %140 = vector.load %arg8[%c0_43, %c0_44] : memref<256x512xbf16, #tpu.memory_space<vmem>>, vector<256x512xbf16>
    %cst_45 = arith.constant dense<0.000000e+00> : vector<32x512xf32>
    %141 = tpu.matmul %139, %140, %cst_45 {dimension_numbers = #tpu.dot_dimension_numbers<[1], [0], [0], [1], [0, 0, 1, 1], [], []>} : vector<32x256xbf16>, vector<256x512xbf16>, vector<32x512xf32> -> vector<32x512xf32>
    %c0_46 = arith.constant 0 : index
    %c0_47 = arith.constant 0 : index
    %142 = vector.load %arg9[%c0_46, %c0_47] : memref<1x512xf32, #tpu.memory_space<vmem>>, vector<1x512xf32>
    %143 = vector.broadcast %142 : vector<1x512xf32> to vector<32x512xf32>
    %144 = arith.addf %141, %143 : vector<32x512xf32>
    %cst_48 = arith.constant 0.000000e+00 : f32
    %145 = vector.broadcast %cst_48 : f32 to vector<32x512xf32>
    %146 = arith.maximumf %144, %145 : vector<32x512xf32>
    %147 = arith.truncf %146 : vector<32x512xf32> to vector<32x512xbf16>
    %c0_49 = arith.constant 0 : index
    %c0_50 = arith.constant 0 : index
    %148 = vector.load %arg10[%c0_49, %c0_50] : memref<512x256xbf16, #tpu.memory_space<vmem>>, vector<512x256xbf16>
    %cst_51 = arith.constant dense<0.000000e+00> : vector<32x256xf32>
    %149 = tpu.matmul %147, %148, %cst_51 {dimension_numbers = #tpu.dot_dimension_numbers<[1], [0], [0], [1], [0, 0, 1, 1], [], []>} : vector<32x512xbf16>, vector<512x256xbf16>, vector<32x256xf32> -> vector<32x256xf32>
    %c0_52 = arith.constant 0 : index
    %c0_53 = arith.constant 0 : index
    %150 = vector.load %arg11[%c0_52, %c0_53] : memref<1x256xf32, #tpu.memory_space<vmem>>, vector<1x256xf32>
    %151 = vector.broadcast %150 : vector<1x256xf32> to vector<32x256xf32>
    %152 = arith.addf %149, %151 : vector<32x256xf32>
    %153 = arith.addf %152, %138 : vector<32x256xf32>
    %c0_54 = arith.constant 0 : index
    %c0_55 = arith.constant 0 : index
    %154 = vector.load %arg12[%c0_54, %c0_55] : memref<1x256xf32, #tpu.memory_space<vmem>>, vector<1x256xf32>
    %c0_56 = arith.constant 0 : index
    %c0_57 = arith.constant 0 : index
    %155 = vector.load %arg13[%c0_56, %c0_57] : memref<1x256xf32, #tpu.memory_space<vmem>>, vector<1x256xf32>
    %cst_58 = arith.constant dense<0.000000e+00> : vector<32xf32>
    %156 = vector.multi_reduction <add>, %153, %cst_58 [1] : vector<32x256xf32> to vector<32xf32>
    %157 = vector.shape_cast %156 : vector<32xf32> to vector<32x1xf32>
    %cst_59 = arith.constant 2.560000e+02 : f32
    %158 = vector.broadcast %cst_59 : f32 to vector<32x1xf32>
    %159 = arith.divf %157, %158 : vector<32x1xf32>
    %160 = vector.broadcast %159 : vector<32x1xf32> to vector<32x256xf32>
    %161 = arith.subf %153, %160 : vector<32x256xf32>
    %162 = arith.mulf %161, %161 : vector<32x256xf32>
    %cst_60 = arith.constant dense<0.000000e+00> : vector<32xf32>
    %163 = vector.multi_reduction <add>, %162, %cst_60 [1] : vector<32x256xf32> to vector<32xf32>
    %164 = vector.shape_cast %163 : vector<32xf32> to vector<32x1xf32>
    %cst_61 = arith.constant 2.560000e+02 : f32
    %165 = vector.broadcast %cst_61 : f32 to vector<32x1xf32>
    %166 = arith.divf %164, %165 : vector<32x1xf32>
    %cst_62 = arith.constant 9.99999974E-6 : f32
    %167 = vector.broadcast %cst_62 : f32 to vector<32x1xf32>
    %168 = arith.addf %166, %167 : vector<32x1xf32>
    %169 = math.rsqrt %168 : vector<32x1xf32>
    %170 = vector.broadcast %169 : vector<32x1xf32> to vector<32x256xf32>
    %171 = arith.mulf %161, %170 : vector<32x256xf32>
    %172 = vector.broadcast %154 : vector<1x256xf32> to vector<32x256xf32>
    %173 = arith.mulf %171, %172 : vector<32x256xf32>
    %174 = vector.broadcast %155 : vector<1x256xf32> to vector<32x256xf32>
    %175 = arith.addf %173, %174 : vector<32x256xf32>
    %176 = vector.shape_cast %175 : vector<32x256xf32> to vector<4x8x256xf32>
    %177 = arith.truncf %176 : vector<4x8x256xf32> to vector<4x8x256xbf16>
    %c0_63 = arith.constant 0 : index
    %c0_64 = arith.constant 0 : index
    %c0_65 = arith.constant 0 : index
    %178 = vector.load %arg14[%c0_63, %c0_64, %c0_65] : memref<4x8x256xbf16, #tpu.memory_space<vmem>>, vector<4x8x256xbf16>
    tpu.vector_store %arg14[%c0_63, %c0_64, %c0_65], %177 {strides = array<i32>} : memref<4x8x256xbf16, #tpu.memory_space<vmem>>, vector<4x8x256xbf16>,
    return
  }
  func.func @transform_0(%arg0: i32) -> (i32, i32, i32) {
    %c0_i32 = arith.constant 0 : i32
    %c0_i32_0 = arith.constant 0 : i32
    %c0_i32_1 = arith.constant 0 : i32
    return %arg0, %c0_i32, %c0_i32_0 : i32, i32, i32
  }
  func.func @transform_1(%arg0: i32) -> (i32, i32) {
    %c0_i32 = arith.constant 0 : i32
    %c0_i32_0 = arith.constant 0 : i32
    %c0_i32_1 = arith.constant 0 : i32
    return %c0_i32, %c0_i32_0 : i32, i32
  }
  func.func @transform_2(%arg0: i32) -> (i32, i32) {
    %c0_i32 = arith.constant 0 : i32
    %c0_i32_0 = arith.constant 0 : i32
    %c0_i32_1 = arith.constant 0 : i32
    return %c0_i32, %c0_i32_0 : i32, i32
  }
  func.func @transform_3(%arg0: i32) -> (i32, i32) {
    %c0_i32 = arith.constant 0 : i32
    %c0_i32_0 = arith.constant 0 : i32
    %c0_i32_1 = arith.constant 0 : i32
    return %c0_i32, %c0_i32_0 : i32, i32
  }
  func.func @transform_4(%arg0: i32) -> (i32, i32) {
    %c0_i32 = arith.constant 0 : i32
    %c0_i32_0 = arith.constant 0 : i32
    %c0_i32_1 = arith.constant 0 : i32
    return %c0_i32, %c0_i32_0 : i32, i32
  }
  func.func @transform_5(%arg0: i32) -> (i32, i32) {
    %c0_i32 = arith.constant 0 : i32
    %c0_i32_0 = arith.constant 0 : i32
    %c0_i32_1 = arith.constant 0 : i32
    return %c0_i32, %c0_i32_0 : i32, i32
  }
  func.func @transform_6(%arg0: i32) -> (i32, i32) {
    %c0_i32 = arith.constant 0 : i32
    %c0_i32_0 = arith.constant 0 : i32
    %c0_i32_1 = arith.constant 0 : i32
    return %c0_i32, %c0_i32_0 : i32, i32
  }
  func.func @transform_7(%arg0: i32) -> (i32, i32) {
    %c0_i32 = arith.constant 0 : i32
    %c0_i32_0 = arith.constant 0 : i32
    %c0_i32_1 = arith.constant 0 : i32
    return %c0_i32, %c0_i32_0 : i32, i32
  }
  func.func @transform_8(%arg0: i32) -> (i32, i32) {
    %c0_i32 = arith.constant 0 : i32
    %c0_i32_0 = arith.constant 0 : i32
    %c0_i32_1 = arith.constant 0 : i32
    return %c0_i32, %c0_i32_0 : i32, i32
  }
  func.func @transform_9(%arg0: i32) -> (i32, i32) {
    %c0_i32 = arith.constant 0 : i32
    %c0_i32_0 = arith.constant 0 : i32
    %c0_i32_1 = arith.constant 0 : i32
    return %c0_i32, %c0_i32_0 : i32, i32
  }
  func.func @transform_10(%arg0: i32) -> (i32, i32) {
    %c0_i32 = arith.constant 0 : i32
    %c0_i32_0 = arith.constant 0 : i32
    %c0_i32_1 = arith.constant 0 : i32
    return %c0_i32, %c0_i32_0 : i32, i32
  }
  func.func @transform_11(%arg0: i32) -> (i32, i32) {
    %c0_i32 = arith.constant 0 : i32
    %c0_i32_0 = arith.constant 0 : i32
    %c0_i32_1 = arith.constant 0 : i32
    return %c0_i32, %c0_i32_0 : i32, i32
  }
  func.func @transform_12(%arg0: i32) -> (i32, i32) {
    %c0_i32 = arith.constant 0 : i32
    %c0_i32_0 = arith.constant 0 : i32
    %c0_i32_1 = arith.constant 0 : i32
    return %c0_i32, %c0_i32_0 : i32, i32
  }
  func.func @transform_13(%arg0: i32) -> (i32, i32, i32) {
    %c0_i32 = arith.constant 0 : i32
    %c0_i32_0 = arith.constant 0 : i32
    %c0_i32_1 = arith.constant 0 : i32
    return %arg0, %c0_i32, %c0_i32_0 : i32, i32, i32
  }
}

</mosaic_0001>

<llo_original>
// kernel: tpu_custom_call.1
$region0: #{tpu_custom_call.1}
  #allocation0 [shape = 'u32[]', space=smem, size = 0x4, offset = 0x4, fixed_abs, tag = 'smem constant byte address 0x4 - core index']
  #allocation1 [shape = 'u32[144,128]{1,0:T(1,128)}', space=vmem, size = 0x12000, scoped, tag = 'internal scratch']
  %s0 = inlined_call_operand.hbm [shape: bf16[4,8,256], index: 0, kind: input, shape index: {}]
  %s1 = inlined_call_operand.hbm [shape: bf16[256,768], index: 1, kind: input, shape index: {}]
  %s2 = inlined_call_operand.vmem [shape: f32[1,768], index: 2, kind: input, shape index: {}]
  %s3 = inlined_call_operand.hbm [shape: bf16[256,256], index: 3, kind: input, shape index: {}]
  %s4 = inlined_call_operand.vmem [shape: f32[1,256], index: 4, kind: input, shape index: {}]
  %s5 = inlined_call_operand.vmem [shape: f32[1,256], index: 5, kind: input, shape index: {}]
  %s6 = inlined_call_operand.vmem [shape: f32[1,256], index: 6, kind: input, shape index: {}]
  %s7 = inlined_call_operand.hbm [shape: bf16[256,512], index: 7, kind: input, shape index: {}]
  %s8 = inlined_call_operand.vmem [shape: f32[1,512], index: 8, kind: input, shape index: {}]
  %s9 = inlined_call_operand.hbm [shape: bf16[512,256], index: 9, kind: input, shape index: {}]
  %s10 = inlined_call_operand.vmem [shape: f32[1,256], index: 10, kind: input, shape index: {}]
  %s11 = inlined_call_operand.vmem [shape: f32[1,256], index: 11, kind: input, shape index: {}]
  %s12 = inlined_call_operand.vmem [shape: f32[1,256], index: 12, kind: input, shape index: {}]
  %s13 = inlined_call_operand.hbm [shape: bf16[4,8,256], index: 13, kind: output, shape index: {}]
  %s14 = sld [smem:[#allocation0]]
  $region82: #{tpu_custom_call.1} parent=0
    _
  %s16 = ssub.s32 1, %s14
  %s17 = scalar_select 0, %s16, %s14
  $region1: #{tpu_custom_call.1} parent=0
    #allocation2 [shape = 'u8[16384]{0}', space=vmem, size = 0x4000, scoped, tag = 'input window, operand 0, single buffered']
    #allocation3 [shape = 's32[1]{0}', space=sflag, size = 0x4, scoped, tag = 'scoped memory for tpu_custom_call.1']
    #allocation4 [shape = 's32[1]{0}', space=sflag, size = 0x4, scoped, tag = 'scoped memory for tpu_custom_call.1']
    #allocation5 [shape = 'u8[393216]{0}', space=vmem, size = 0x60000, scoped, tag = 'input window, operand 1, single buffered']
    #allocation6 [shape = 's32[1]{0}', space=sflag, size = 0x4, scoped, tag = 'scoped memory for tpu_custom_call.1']
    #allocation7 [shape = 'u8[131072]{0}', space=vmem, size = 0x20000, scoped, tag = 'input window, operand 3, single buffered']
    #allocation8 [shape = 'u8[262144]{0}', space=vmem, size = 0x40000, scoped, tag = 'input window, operand 7, single buffered']
    #allocation9 [shape = 's32[1]{0}', space=sflag, size = 0x4, scoped, tag = 'scoped memory for tpu_custom_call.1']
    #allocation10 [shape = 'u8[262144]{0}', space=vmem, size = 0x40000, scoped, tag = 'input window, operand 9, single buffered']
    #allocation11 [shape = 'u8[16384]{0}', space=vmem, size = 0x4000, scoped, tag = 'output window, operand 0, single buffered']
    %18 = vsyncpa [#allocation3], 0
    %19 = vsyncpa [#allocation6], 0
    %20 = vsyncpa [#allocation9], 0
    %21 = vsyncpa [#allocation4], 0
    // Predicated region
    $region2: #{tpu_custom_call.1} parent=1 // pred_check
      _
    $region3: #{tpu_custom_call.1} parent=1 // pred_check_branch
      %23 = sbr.rel (0) target = $region5
    $region4: #{tpu_custom_call.1} parent=1 // pred_region
      %s25 = ssub.s32 512, 512
      %26 = vsyncadd [#allocation3], %s25
      %s27 = sshll.u32 [#allocation2], 4
      %s28 = int_to_ptr.vmem [resolvable:$true] %s27
      %33 = dma.hbm_to_vmem [thread:$0]  %s0, 512, %s28, [#allocation3], 128, 128, 8
    $region5: #{tpu_custom_call.1} parent=1 // pred_fallthru
      _
    // Predicated region
    $region6: #{tpu_custom_call.1} parent=1 // pred_check
      _
    $region7: #{tpu_custom_call.1} parent=1 // pred_check_branch
      %35 = sbr.rel (0) target = $region9
    $region8: #{tpu_custom_call.1} parent=1 // pred_region
      %s37 = ssub.s32 12288, 12288
      %38 = vsyncadd [#allocation6], %s37
      %s39 = sshll.u32 [#allocation5], 4
      %s40 = int_to_ptr.vmem [resolvable:$true] %s39
      %45 = dma.hbm_to_vmem [thread:$0]  %s1, 12288, %s40, [#allocation6], 384, 384, 24
    $region9: #{tpu_custom_call.1} parent=1 // pred_fallthru
      _
    // Predicated region
    $region10: #{tpu_custom_call.1} parent=1 // pred_check
      _
    $region11: #{tpu_custom_call.1} parent=1 // pred_check_branch
      %47 = sbr.rel (0) target = $region13
    $region12: #{tpu_custom_call.1} parent=1 // pred_region
      _
    $region13: #{tpu_custom_call.1} parent=1 // pred_fallthru
      _
    // Predicated region
    $region14: #{tpu_custom_call.1} parent=1 // pred_check
      _
    $region15: #{tpu_custom_call.1} parent=1 // pred_check_branch
      %49 = sbr.rel (0) target = $region17
    $region16: #{tpu_custom_call.1} parent=1 // pred_region
      %s51 = ssub.s32 4096, 4096
      %52 = vsyncadd [#allocation6], %s51
      %s53 = sshll.u32 [#allocation7], 4
      %s54 = int_to_ptr.vmem [resolvable:$true] %s53
      %59 = dma.hbm_to_vmem [thread:$0]  %s3, 4096, %s54, [#allocation6], 128, 128, 8
    $region17: #{tpu_custom_call.1} parent=1 // pred_fallthru
      _
    // Predicated region
    $region18: #{tpu_custom_call.1} parent=1 // pred_check
      _
    $region19: #{tpu_custom_call.1} parent=1 // pred_check_branch
      %61 = sbr.rel (0) target = $region21
    $region20: #{tpu_custom_call.1} parent=1 // pred_region
      _
    $region21: #{tpu_custom_call.1} parent=1 // pred_fallthru
      _
    // Predicated region
    $region22: #{tpu_custom_call.1} parent=1 // pred_check
      _
    $region23: #{tpu_custom_call.1} parent=1 // pred_check_branch
      %63 = sbr.rel (0) target = $region25
    $region24: #{tpu_custom_call.1} parent=1 // pred_region
      _
    $region25: #{tpu_custom_call.1} parent=1 // pred_fallthru
      _
    // Predicated region
    $region26: #{tpu_custom_call.1} parent=1 // pred_check
      _
    $region27: #{tpu_custom_call.1} parent=1 // pred_check_branch
      %65 = sbr.rel (0) target = $region29
    $region28: #{tpu_custom_call.1} parent=1 // pred_region
      _
    $region29: #{tpu_custom_call.1} parent=1 // pred_fallthru
      _
    // Predicated region
    $region30: #{tpu_custom_call.1} parent=1 // pred_check
      _
    $region31: #{tpu_custom_call.1} parent=1 // pred_check_branch
      %67 = sbr.rel (0) target = $region33
    $region32: #{tpu_custom_call.1} parent=1 // pred_region
      %s69 = ssub.s32 8192, 8192
      %70 = vsyncadd [#allocation9], %s69
      %s71 = sshll.u32 [#allocation8], 4
      %s72 = int_to_ptr.vmem [resolvable:$true] %s71
      %77 = dma.hbm_to_vmem [thread:$0]  %s7, 8192, %s72, [#allocation9], 256, 256, 16
    $region33: #{tpu_custom_call.1} parent=1 // pred_fallthru
      _
    // Predicated region
    $region34: #{tpu_custom_call.1} parent=1 // pred_check
      _
    $region35: #{tpu_custom_call.1} parent=1 // pred_check_branch
      %79 = sbr.rel (0) target = $region37
    $region36: #{tpu_custom_call.1} parent=1 // pred_region
      _
    $region37: #{tpu_custom_call.1} parent=1 // pred_fallthru
      _
    // Predicated region
    $region38: #{tpu_custom_call.1} parent=1 // pred_check
      _
    $region39: #{tpu_custom_call.1} parent=1 // pred_check_branch
      %81 = sbr.rel (0) target = $region41
    $region40: #{tpu_custom_call.1} parent=1 // pred_region
      %s83 = ssub.s32 8192, 8192
      %84 = vsyncadd [#allocation9], %s83
      %s85 = sshll.u32 [#allocation10], 4
      %s86 = int_to_ptr.vmem [resolvable:$true] %s85
      %91 = dma.hbm_to_vmem [thread:$0]  %s9, 8192, %s86, [#allocation9], 128, 128, 8
    $region41: #{tpu_custom_call.1} parent=1 // pred_fallthru
      _
    // Predicated region
    $region42: #{tpu_custom_call.1} parent=1 // pred_check
      _
    $region43: #{tpu_custom_call.1} parent=1 // pred_check_branch
      %93 = sbr.rel (0) target = $region45
    $region44: #{tpu_custom_call.1} parent=1 // pred_region
      _
    $region45: #{tpu_custom_call.1} parent=1 // pred_fallthru
      _
    // Predicated region
    $region46: #{tpu_custom_call.1} parent=1 // pred_check
      _
    $region47: #{tpu_custom_call.1} parent=1 // pred_check_branch
      %95 = sbr.rel (0) target = $region49
    $region48: #{tpu_custom_call.1} parent=1 // pred_region
      _
    $region49: #{tpu_custom_call.1} parent=1 // pred_fallthru
      _
    // Predicated region
    $region50: #{tpu_custom_call.1} parent=1 // pred_check
      _
    $region51: #{tpu_custom_call.1} parent=1 // pred_check_branch
      %97 = sbr.rel (0) target = $region53
    $region52: #{tpu_custom_call.1} parent=1 // pred_region
      _
    $region53: #{tpu_custom_call.1} parent=1 // pred_fallthru
      _
    // Predicated region
    $region54: #{tpu_custom_call.1} parent=1 // pred_check
      _
    $region55: #{tpu_custom_call.1} parent=1 // pred_check_branch
      %99 = sbr.rel (0) target = $region57
    $region56: #{tpu_custom_call.1} parent=1 // pred_region
      %100 = dma.done [#allocation3], 512
    $region57: #{tpu_custom_call.1} parent=1 // pred_fallthru
      _
    // Predicated region
    $region58: #{tpu_custom_call.1} parent=1 // pred_check
      _
    $region59: #{tpu_custom_call.1} parent=1 // pred_check_branch
      %102 = sbr.rel (0) target = $region61
    $region60: #{tpu_custom_call.1} parent=1 // pred_region
      %103 = dma.done [#allocation6], 12288
    $region61: #{tpu_custom_call.1} parent=1 // pred_fallthru
      _
    // Predicated region
    $region62: #{tpu_custom_call.1} parent=1 // pred_check
      _
    $region63: #{tpu_custom_call.1} parent=1 // pred_check_branch
      %105 = sbr.rel (0) target = $region65
    $region64: #{tpu_custom_call.1} parent=1 // pred_region
      %106 = dma.done [#allocation6], 4096
    $region65: #{tpu_custom_call.1} parent=1 // pred_fallthru
      _
    // Predicated region
    $region66: #{tpu_custom_call.1} parent=1 // pred_check
      _
    $region67: #{tpu_custom_call.1} parent=1 // pred_check_branch
      %108 = sbr.rel (0) target = $region69
    $region68: #{tpu_custom_call.1} parent=1 // pred_region
      %109 = dma.done [#allocation9], 8192
    $region69: #{tpu_custom_call.1} parent=1 // pred_fallthru
      _
    // Predicated region
    $region70: #{tpu_custom_call.1} parent=1 // pred_check
      _
    $region71: #{tpu_custom_call.1} parent=1 // pred_check_branch
      %111 = sbr.rel (0) target = $region73
    $region72: #{tpu_custom_call.1} parent=1 // pred_region
      %112 = dma.done [#allocation9], 8192
    $region73: #{tpu_custom_call.1} parent=1 // pred_fallthru
      _
    %v114 = vld [vmem:[#allocation2] sm:$0xff]
    %v115 = vld [vmem:[#allocation2 + $0x8] sm:$0xff]
    %v116 = vld [vmem:[#allocation2 + $0x10] sm:$0xff]
    %v117 = vld [vmem:[#allocation2 + $0x18] sm:$0xff]
    %v118 = vunpack.c.l.bf16 %v114
    %v119 = vunpack.c.h.bf16 %v114
    %v120 = vunpack.c.l.bf16 %v115
    %v121 = vunpack.c.h.bf16 %v115
    %v122 = vunpack.c.l.bf16 %v116
    %v123 = vunpack.c.h.bf16 %v116
    %v124 = vunpack.c.l.bf16 %v117
    %v125 = vunpack.c.h.bf16 %v117
    %v126 = vld [vmem:[#allocation5] sm:$0xff]
    %v127 = vld [vmem:[#allocation5 + $0x8] sm:$0xff]
    %v128 = vld [vmem:[#allocation5 + $0x10] sm:$0xff]
    %v129 = vld [vmem:[#allocation5 + $0x18] sm:$0xff]
    %v130 = vld [vmem:[#allocation5 + $0x20] sm:$0xff]
    %v131 = vld [vmem:[#allocation5 + $0x28] sm:$0xff]
    %v132 = vld [vmem:[#allocation5 + $0x30] sm:$0xff]
    %v133 = vld [vmem:[#allocation5 + $0x38] sm:$0xff]
    %v134 = vld [vmem:[#allocation5 + $0x40] sm:$0xff]
    %v135 = vld [vmem:[#allocation5 + $0x48] sm:$0xff]
    %v136 = vld [vmem:[#allocation5 + $0x50] sm:$0xff]
    %v137 = vld [vmem:[#allocation5 + $0x58] sm:$0xff]
    %v138 = vld [vmem:[#allocation5 + $0x60] sm:$0xff]
    %v139 = vld [vmem:[#allocation5 + $0x68] sm:$0xff]
    %v140 = vld [vmem:[#allocation5 + $0x70] sm:$0xff]
    %v141 = vld [vmem:[#allocation5 + $0x78] sm:$0xff]
    %v142 = vld [vmem:[#allocation5 + $0x80] sm:$0xff]
    %v143 = vld [vmem:[#allocation5 + $0x88] sm:$0xff]
    %v144 = vld [vmem:[#allocation5 + $0x90] sm:$0xff]
    %v145 = vld [vmem:[#allocation5 + $0x98] sm:$0xff]
    %v146 = vld [vmem:[#allocation5 + $0xa0] sm:$0xff]
    %v147 = vld [vmem:[#allocation5 + $0xa8] sm:$0xff]
    %v148 = vld [vmem:[#allocation5 + $0xb0] sm:$0xff]
    %v149 = vld [vmem:[#allocation5 + $0xb8] sm:$0xff]
    %v150 = vld [vmem:[#allocation5 + $0xc0] sm:$0xff]
    %v151 = vld [vmem:[#allocation5 + $0xc8] sm:$0xff]
    %v152 = vld [vmem:[#allocation5 + $0xd0] sm:$0xff]
    %v153 = vld [vmem:[#allocation5 + $0xd8] sm:$0xff]
    %v154 = vld [vmem:[#allocation5 + $0xe0] sm:$0xff]
    %v155 = vld [vmem:[#allocation5 + $0xe8] sm:$0xff]
    %v156 = vld [vmem:[#allocation5 + $0xf0] sm:$0xff]
    %v157 = vld [vmem:[#allocation5 + $0xf8] sm:$0xff]
    %v158 = vld [vmem:[#allocation5 + $0x100] sm:$0xff]
    %v159 = vld [vmem:[#allocation5 + $0x108] sm:$0xff]
    %v160 = vld [vmem:[#allocation5 + $0x110] sm:$0xff]
    %v161 = vld [vmem:[#allocation5 + $0x118] sm:$0xff]
    %v162 = vld [vmem:[#allocation5 + $0x120] sm:$0xff]
    %v163 = vld [vmem:[#allocation5 + $0x128] sm:$0xff]
    %v164 = vld [vmem:[#allocation5 + $0x130] sm:$0xff]
    %v165 = vld [vmem:[#allocation5 + $0x138] sm:$0xff]
    %v166 = vld [vmem:[#allocation5 + $0x140] sm:$0xff]
    %v167 = vld [vmem:[#allocation5 + $0x148] sm:$0xff]
    %v168 = vld [vmem:[#allocation5 + $0x150] sm:$0xff]
    %v169 = vld [vmem:[#allocation5 + $0x158] sm:$0xff]
    %v170 = vld [vmem:[#allocation5 + $0x160] sm:$0xff]
    %v171 = vld [vmem:[#allocation5 + $0x168] sm:$0xff]
    %v172 = vld [vmem:[#allocation5 + $0x170] sm:$0xff]
    %v173 = vld [vmem:[#allocation5 + $0x178] sm:$0xff]
    %v174 = vld [vmem:[#allocation5 + $0x180] sm:$0xff]
    %v175 = vld [vmem:[#allocation5 + $0x188] sm:$0xff]
    %v176 = vld [vmem:[#allocation5 + $0x190] sm:$0xff]
    %v177 = vld [vmem:[#allocation5 + $0x198] sm:$0xff]
    %v178 = vld [vmem:[#allocation5 + $0x1a0] sm:$0xff]
    %v179 = vld [vmem:[#allocation5 + $0x1a8] sm:$0xff]
    %v180 = vld [vmem:[#allocation5 + $0x1b0] sm:$0xff]
    %v181 = vld [vmem:[#allocation5 + $0x1b8] sm:$0xff]
    %v182 = vld [vmem:[#allocation5 + $0x1c0] sm:$0xff]
    %v183 = vld [vmem:[#allocation5 + $0x1c8] sm:$0xff]
    %v184 = vld [vmem:[#allocation5 + $0x1d0] sm:$0xff]
    %v185 = vld [vmem:[#allocation5 + $0x1d8] sm:$0xff]
    %v186 = vld [vmem:[#allocation5 + $0x1e0] sm:$0xff]
    %v187 = vld [vmem:[#allocation5 + $0x1e8] sm:$0xff]
    %v188 = vld [vmem:[#allocation5 + $0x1f0] sm:$0xff]
    %v189 = vld [vmem:[#allocation5 + $0x1f8] sm:$0xff]
    %v190 = vld [vmem:[#allocation5 + $0x200] sm:$0xff]
    %v191 = vld [vmem:[#allocation5 + $0x208] sm:$0xff]
    %v192 = vld [vmem:[#allocation5 + $0x210] sm:$0xff]
    %v193 = vld [vmem:[#allocation5 + $0x218] sm:$0xff]
    %v194 = vld [vmem:[#allocation5 + $0x220] sm:$0xff]
    %v195 = vld [vmem:[#allocation5 + $0x228] sm:$0xff]
    %v196 = vld [vmem:[#allocation5 + $0x230] sm:$0xff]
    %v197 = vld [vmem:[#allocation5 + $0x238] sm:$0xff]
    %v198 = vld [vmem:[#allocation5 + $0x240] sm:$0xff]
    %v199 = vld [vmem:[#allocation5 + $0x248] sm:$0xff]
    %v200 = vld [vmem:[#allocation5 + $0x250] sm:$0xff]
    %v201 = vld [vmem:[#allocation5 + $0x258] sm:$0xff]
    %v202 = vld [vmem:[#allocation5 + $0x260] sm:$0xff]
    %v203 = vld [vmem:[#allocation5 + $0x268] sm:$0xff]
    %v204 = vld [vmem:[#allocation5 + $0x270] sm:$0xff]
    %v205 = vld [vmem:[#allocation5 + $0x278] sm:$0xff]
    %v206 = vld [vmem:[#allocation5 + $0x280] sm:$0xff]
    %v207 = vld [vmem:[#allocation5 + $0x288] sm:$0xff]
    %v208 = vld [vmem:[#allocation5 + $0x290] sm:$0xff]
    %v209 = vld [vmem:[#allocation5 + $0x298] sm:$0xff]
    %v210 = vld [vmem:[#allocation5 + $0x2a0] sm:$0xff]
    %v211 = vld [vmem:[#allocation5 + $0x2a8] sm:$0xff]
    %v212 = vld [vmem:[#allocation5 + $0x2b0] sm:$0xff]
    %v213 = vld [vmem:[#allocation5 + $0x2b8] sm:$0xff]
    %v214 = vld [vmem:[#allocation5 + $0x2c0] sm:$0xff]
    %v215 = vld [vmem:[#allocation5 + $0x2c8] sm:$0xff]
    %v216 = vld [vmem:[#allocation5 + $0x2d0] sm:$0xff]
    %v217 = vld [vmem:[#allocation5 + $0x2d8] sm:$0xff]
    %v218 = vld [vmem:[#allocation5 + $0x2e0] sm:$0xff]
    %v219 = vld [vmem:[#allocation5 + $0x2e8] sm:$0xff]
    %v220 = vld [vmem:[#allocation5 + $0x2f0] sm:$0xff]
    %v221 = vld [vmem:[#allocation5 + $0x2f8] sm:$0xff]
    %v222 = vld [vmem:[%s2] sm:$0x3f]
    %v224 = vlaneseq
    %v225 = vshrl.u32 %v224, 7
    %v226 = vsub.s32 0, %v225
    %v227 = vrot.slane %v222, %v226
    %v228 = vlaneseq
    %v229 = vshrl.u32 %v228, 7
    %v230 = vsub.s32 1, %v229
    %v231 = vrot.slane %v222, %v230
    %v232 = vlaneseq
    %v233 = vshrl.u32 %v232, 7
    %v234 = vsub.s32 2, %v233
    %v235 = vrot.slane %v222, %v234
    %v236 = vlaneseq
    %v237 = vshrl.u32 %v236, 7
    %v238 = vsub.s32 3, %v237
    %v239 = vrot.slane %v222, %v238
    %v240 = vlaneseq
    %v241 = vshrl.u32 %v240, 7
    %v242 = vsub.s32 4, %v241
    %v243 = vrot.slane %v222, %v242
    %v244 = vlaneseq
    %v245 = vshrl.u32 %v244, 7
    %v246 = vsub.s32 5, %v245
    %v247 = vrot.slane %v222, %v246
    %v258 = vunpack.c.l.b16 %v114
    %v259 = vunpack.c.h.b16 %v114
    %v260 = vunpack.c.l.b16 %v115
    %v261 = vunpack.c.h.b16 %v115
    %v262 = vunpack.c.l.b16 %v116
    %v263 = vunpack.c.h.b16 %v116
    %v264 = vunpack.c.l.b16 %v117
    %v265 = vunpack.c.h.b16 %v117
    %v266 = vpack.c.b16 %v260, %v258
    %v267 = vpack.c.b16 %v261, %v259
    %v268 = vpack.c.b16 %v264, %v262
    %v269 = vpack.c.b16 %v265, %v263
    %v370 = vunpack.c.l.b16 %v126
    %v371 = vunpack.c.h.b16 %v126
    %v372 = vunpack.c.l.b16 %v127
    %v373 = vunpack.c.h.b16 %v127
    %v374 = vunpack.c.l.b16 %v128
    %v375 = vunpack.c.h.b16 %v128
    %v376 = vunpack.c.l.b16 %v129
    %v377 = vunpack.c.h.b16 %v129
    %v378 = vunpack.c.l.b16 %v130
    %v379 = vunpack.c.h.b16 %v130
    %v380 = vunpack.c.l.b16 %v131
    %v381 = vunpack.c.h.b16 %v131
    %v382 = vunpack.c.l.b16 %v132
    %v383 = vunpack.c.h.b16 %v132
    %v384 = vunpack.c.l.b16 %v133
    %v385 = vunpack.c.h.b16 %v133
    %v386 = vunpack.c.l.b16 %v134
    %v387 = vunpack.c.h.b16 %v134
    %v388 = vunpack.c.l.b16 %v135
    %v389 = vunpack.c.h.b16 %v135
    %v390 = vunpack.c.l.b16 %v136
    %v391 = vunpack.c.h.b16 %v136
    %v392 = vunpack.c.l.b16 %v137
    %v393 = vunpack.c.h.b16 %v137
    %v394 = vunpack.c.l.b16 %v138
    %v395 = vunpack.c.h.b16 %v138
    %v396 = vunpack.c.l.b16 %v139
    %v397 = vunpack.c.h.b16 %v139
    %v398 = vunpack.c.l.b16 %v140
    %v399 = vunpack.c.h.b16 %v140
    %v400 = vunpack.c.l.b16 %v141
    %v401 = vunpack.c.h.b16 %v141
    %v402 = vunpack.c.l.b16 %v142
    %v403 = vunpack.c.h.b16 %v142
    %v404 = vunpack.c.l.b16 %v143
    %v405 = vunpack.c.h.b16 %v143
    %v406 = vunpack.c.l.b16 %v144
    %v407 = vunpack.c.h.b16 %v144
    %v408 = vunpack.c.l.b16 %v145
    %v409 = vunpack.c.h.b16 %v145
    %v410 = vunpack.c.l.b16 %v146
    %v411 = vunpack.c.h.b16 %v146
    %v412 = vunpack.c.l.b16 %v147
    %v413 = vunpack.c.h.b16 %v147
    %v414 = vunpack.c.l.b16 %v148
    %v415 = vunpack.c.h.b16 %v148
    %v416 = vunpack.c.l.b16 %v149
    %v417 = vunpack.c.h.b16 %v149
    %v418 = vunpack.c.l.b16 %v150
    %v419 = vunpack.c.h.b16 %v150
    %v420 = vunpack.c.l.b16 %v151
    %v421 = vunpack.c.h.b16 %v151
    %v422 = vunpack.c.l.b16 %v152
    %v423 = vunpack.c.h.b16 %v152
    %v424 = vunpack.c.l.b16 %v153
    %v425 = vunpack.c.h.b16 %v153
    %v426 = vunpack.c.l.b16 %v154
    %v427 = vunpack.c.h.b16 %v154
    %v428 = vunpack.c.l.b16 %v155
    %v429 = vunpack.c.h.b16 %v155
    %v430 = vunpack.c.l.b16 %v156
    %v431 = vunpack.c.h.b16 %v156
    %v432 = vunpack.c.l.b16 %v157
    %v433 = vunpack.c.h.b16 %v157
    %v434 = vunpack.c.l.b16 %v158
    %v435 = vunpack.c.h.b16 %v158
    %v436 = vunpack.c.l.b16 %v159
    %v437 = vunpack.c.h.b16 %v159
    %v438 = vunpack.c.l.b16 %v160
    %v439 = vunpack.c.h.b16 %v160
    %v440 = vunpack.c.l.b16 %v161
    %v441 = vunpack.c.h.b16 %v161
    %v442 = vunpack.c.l.b16 %v162
    %v443 = vunpack.c.h.b16 %v162
    %v444 = vunpack.c.l.b16 %v163
    %v445 = vunpack.c.h.b16 %v163
    %v446 = vunpack.c.l.b16 %v164
    %v447 = vunpack.c.h.b16 %v164
    %v448 = vunpack.c.l.b16 %v165
    %v449 = vunpack.c.h.b16 %v165
    %v450 = vunpack.c.l.b16 %v166
    %v451 = vunpack.c.h.b16 %v166
    %v452 = vunpack.c.l.b16 %v167
    %v453 = vunpack.c.h.b16 %v167
    %v454 = vunpack.c.l.b16 %v168
    %v455 = vunpack.c.h.b16 %v168
    %v456 = vunpack.c.l.b16 %v169
    %v457 = vunpack.c.h.b16 %v169
    %v458 = vunpack.c.l.b16 %v170
    %v459 = vunpack.c.h.b16 %v170
    %v460 = vunpack.c.l.b16 %v171
    %v461 = vunpack.c.h.b16 %v171
    %v462 = vunpack.c.l.b16 %v172
    %v463 = vunpack.c.h.b16 %v172
    %v464 = vunpack.c.l.b16 %v173
    %v465 = vunpack.c.h.b16 %v173
    %v466 = vunpack.c.l.b16 %v174
    %v467 = vunpack.c.h.b16 %v174
    %v468 = vunpack.c.l.b16 %v175
    %v469 = vunpack.c.h.b16 %v175
    %v470 = vunpack.c.l.b16 %v176
    %v471 = vunpack.c.h.b16 %v176
    %v472 = vunpack.c.l.b16 %v177
    %v473 = vunpack.c.h.b16 %v177
    %v474 = vunpack.c.l.b16 %v178
    %v475 = vunpack.c.h.b16 %v178
    %v476 = vunpack.c.l.b16 %v179
    %v477 = vunpack.c.h.b16 %v179
    %v478 = vunpack.c.l.b16 %v180
    %v479 = vunpack.c.h.b16 %v180
    %v480 = vunpack.c.l.b16 %v181
    %v481 = vunpack.c.h.b16 %v181
    %v482 = vunpack.c.l.b16 %v182
    %v483 = vunpack.c.h.b16 %v182
    %v484 = vunpack.c.l.b16 %v183
    %v485 = vunpack.c.h.b16 %v183
    %v486 = vunpack.c.l.b16 %v184
    %v487 = vunpack.c.h.b16 %v184
    %v488 = vunpack.c.l.b16 %v185
    %v489 = vunpack.c.h.b16 %v185
    %v490 = vunpack.c.l.b16 %v186
    %v491 = vunpack.c.h.b16 %v186
    %v492 = vunpack.c.l.b16 %v187
    %v493 = vunpack.c.h.b16 %v187
    %v494 = vunpack.c.l.b16 %v188
    %v495 = vunpack.c.h.b16 %v188
    %v496 = vunpack.c.l.b16 %v189
    %v497 = vunpack.c.h.b16 %v189
    %v498 = vunpack.c.l.b16 %v190
    %v499 = vunpack.c.h.b16 %v190
    %v500 = vunpack.c.l.b16 %v191
    %v501 = vunpack.c.h.b16 %v191
    %v502 = vunpack.c.l.b16 %v192
    %v503 = vunpack.c.h.b16 %v192
    %v504 = vunpack.c.l.b16 %v193
    %v505 = vunpack.c.h.b16 %v193
    %v506 = vunpack.c.l.b16 %v194
    %v507 = vunpack.c.h.b16 %v194
    %v508 = vunpack.c.l.b16 %v195
    %v509 = vunpack.c.h.b16 %v195
    %v510 = vunpack.c.l.b16 %v196
    %v511 = vunpack.c.h.b16 %v196
    %v512 = vunpack.c.l.b16 %v197
    %v513 = vunpack.c.h.b16 %v197
    %v514 = vunpack.c.l.b16 %v198
    %v515 = vunpack.c.h.b16 %v198
    %v516 = vunpack.c.l.b16 %v199
    %v517 = vunpack.c.h.b16 %v199
    %v518 = vunpack.c.l.b16 %v200
    %v519 = vunpack.c.h.b16 %v200
    %v520 = vunpack.c.l.b16 %v201
    %v521 = vunpack.c.h.b16 %v201
    %v522 = vunpack.c.l.b16 %v202
    %v523 = vunpack.c.h.b16 %v202
    %v524 = vunpack.c.l.b16 %v203
    %v525 = vunpack.c.h.b16 %v203
    %v526 = vunpack.c.l.b16 %v204
    %v527 = vunpack.c.h.b16 %v204
    %v528 = vunpack.c.l.b16 %v205
    %v529 = vunpack.c.h.b16 %v205
    %v530 = vunpack.c.l.b16 %v206
    %v531 = vunpack.c.h.b16 %v206
    %v532 = vunpack.c.l.b16 %v207
    %v533 = vunpack.c.h.b16 %v207
    %v534 = vunpack.c.l.b16 %v208
    %v535 = vunpack.c.h.b16 %v208
    %v536 = vunpack.c.l.b16 %v209
    %v537 = vunpack.c.h.b16 %v209
    %v538 = vunpack.c.l.b16 %v210
    %v539 = vunpack.c.h.b16 %v210
    %v540 = vunpack.c.l.b16 %v211
    %v541 = vunpack.c.h.b16 %v211
    %v542 = vunpack.c.l.b16 %v212
    %v543 = vunpack.c.h.b16 %v212
    %v544 = vunpack.c.l.b16 %v213
    %v545 = vunpack.c.h.b16 %v213
    %v546 = vunpack.c.l.b16 %v214
    %v547 = vunpack.c.h.b16 %v214
    %v548 = vunpack.c.l.b16 %v215
    %v549 = vunpack.c.h.b16 %v215
    %v550 = vunpack.c.l.b16 %v216
    %v551 = vunpack.c.h.b16 %v216
    %v552 = vunpack.c.l.b16 %v217
    %v553 = vunpack.c.h.b16 %v217
    %v554 = vunpack.c.l.b16 %v218
    %v555 = vunpack.c.h.b16 %v218
    %v556 = vunpack.c.l.b16 %v219
    %v557 = vunpack.c.h.b16 %v219
    %v558 = vunpack.c.l.b16 %v220
    %v559 = vunpack.c.h.b16 %v220
    %v560 = vunpack.c.l.b16 %v221
    %v561 = vunpack.c.h.b16 %v221
    %v562 = vpack.c.b16 %v376, %v370
    %v563 = vpack.c.b16 %v377, %v371
    %v564 = vpack.c.b16 %v378, %v372
    %v565 = vpack.c.b16 %v379, %v373
    %v566 = vpack.c.b16 %v380, %v374
    %v567 = vpack.c.b16 %v381, %v375
    %v568 = vpack.c.b16 %v388, %v382
    %v569 = vpack.c.b16 %v389, %v383
    %v570 = vpack.c.b16 %v390, %v384
    %v571 = vpack.c.b16 %v391, %v385
    %v572 = vpack.c.b16 %v392, %v386
    %v573 = vpack.c.b16 %v393, %v387
    %v574 = vpack.c.b16 %v400, %v394
    %v575 = vpack.c.b16 %v401, %v395
    %v576 = vpack.c.b16 %v402, %v396
    %v577 = vpack.c.b16 %v403, %v397
    %v578 = vpack.c.b16 %v404, %v398
    %v579 = vpack.c.b16 %v405, %v399
    %v580 = vpack.c.b16 %v412, %v406
    %v581 = vpack.c.b16 %v413, %v407
    %v582 = vpack.c.b16 %v414, %v408
    %v583 = vpack.c.b16 %v415, %v409
    %v584 = vpack.c.b16 %v416, %v410
    %v585 = vpack.c.b16 %v417, %v411
    %v586 = vpack.c.b16 %v424, %v418
    %v587 = vpack.c.b16 %v425, %v419
    %v588 = vpack.c.b16 %v426, %v420
    %v589 = vpack.c.b16 %v427, %v421
    %v590 = vpack.c.b16 %v428, %v422
    %v591 = vpack.c.b16 %v429, %v423
    %v592 = vpack.c.b16 %v436, %v430
    %v593 = vpack.c.b16 %v437, %v431
    %v594 = vpack.c.b16 %v438, %v432
    %v595 = vpack.c.b16 %v439, %v433
    %v596 = vpack.c.b16 %v440, %v434
    %v597 = vpack.c.b16 %v441, %v435
    %v598 = vpack.c.b16 %v448, %v442
    %v599 = vpack.c.b16 %v449, %v443
    %v600 = vpack.c.b16 %v450, %v444
    %v601 = vpack.c.b16 %v451, %v445
    %v602 = vpack.c.b16 %v452, %v446
    %v603 = vpack.c.b16 %v453, %v447
    %v604 = vpack.c.b16 %v460, %v454
    %v605 = vpack.c.b16 %v461, %v455
    %v606 = vpack.c.b16 %v462, %v456
    %v607 = vpack.c.b16 %v463, %v457
    %v608 = vpack.c.b16 %v464, %v458
    %v609 = vpack.c.b16 %v465, %v459
    %v610 = vpack.c.b16 %v472, %v466
    %v611 = vpack.c.b16 %v473, %v467
    %v612 = vpack.c.b16 %v474, %v468
    %v613 = vpack.c.b16 %v475, %v469
    %v614 = vpack.c.b16 %v476, %v470
    %v615 = vpack.c.b16 %v477, %v471
    %v616 = vpack.c.b16 %v484, %v478
    %v617 = vpack.c.b16 %v485, %v479
    %v618 = vpack.c.b16 %v486, %v480
    %v619 = vpack.c.b16 %v487, %v481
    %v620 = vpack.c.b16 %v488, %v482
    %v621 = vpack.c.b16 %v489, %v483
    %v622 = vpack.c.b16 %v496, %v490
    %v623 = vpack.c.b16 %v497, %v491
    %v624 = vpack.c.b16 %v498, %v492
    %v625 = vpack.c.b16 %v499, %v493
    %v626 = vpack.c.b16 %v500, %v494
    %v627 = vpack.c.b16 %v501, %v495
    %v628 = vpack.c.b16 %v508, %v502
    %v629 = vpack.c.b16 %v509, %v503
    %v630 = vpack.c.b16 %v510, %v504
    %v631 = vpack.c.b16 %v511, %v505
    %v632 = vpack.c.b16 %v512, %v506
    %v633 = vpack.c.b16 %v513, %v507
    %v634 = vpack.c.b16 %v520, %v514
    %v635 = vpack.c.b16 %v521, %v515
    %v636 = vpack.c.b16 %v522, %v516
    %v637 = vpack.c.b16 %v523, %v517
    %v638 = vpack.c.b16 %v524, %v518
    %v639 = vpack.c.b16 %v525, %v519
    %v640 = vpack.c.b16 %v532, %v526
    %v641 = vpack.c.b16 %v533, %v527
    %v642 = vpack.c.b16 %v534, %v528
    %v643 = vpack.c.b16 %v535, %v529
    %v644 = vpack.c.b16 %v536, %v530
    %v645 = vpack.c.b16 %v537, %v531
    %v646 = vpack.c.b16 %v544, %v538
    %v647 = vpack.c.b16 %v545, %v539
    %v648 = vpack.c.b16 %v546, %v540
    %v649 = vpack.c.b16 %v547, %v541
    %v650 = vpack.c.b16 %v548, %v542
    %v651 = vpack.c.b16 %v549, %v543
    %v652 = vpack.c.b16 %v556, %v550
    %v653 = vpack.c.b16 %v557, %v551
    %v654 = vpack.c.b16 %v558, %v552
    %v655 = vpack.c.b16 %v559, %v553
    %v656 = vpack.c.b16 %v560, %v554
    %v657 = vpack.c.b16 %v561, %v555
    %754 = vmatprep.subr.bf16.mxu0 %v563
    %755 = vmatpush1.bf16.msra.mxu0 %v562
    %756 = vmatprep.subr.bf16.mxu0 %v569
    %757 = vmatpush1.bf16.msra.mxu0 %v568
    %758 = vmatprep.subr.bf16.mxu0 %v575
    %759 = vmatpush1.bf16.msra.mxu0 %v574
    %760 = vmatprep.subr.bf16.mxu0 %v581
    %761 = vmatpush1.bf16.msra.mxu0 %v580
    %762 = vmatprep.subr.bf16.mxu0 %v587
    %763 = vmatpush1.bf16.msra.mxu0 %v586
    %764 = vmatprep.subr.bf16.mxu0 %v593
    %765 = vmatpush1.bf16.msra.mxu0 %v592
    %766 = vmatprep.subr.bf16.mxu0 %v599
    %767 = vmatpush1.bf16.msra.mxu0 %v598
    %768 = vmatprep.subr.bf16.mxu0 %v605
    %769 = vmatpush1.bf16.msra.mxu0 %v604
    %770 = vmatprep.subr.bf16.mxu0 %v611
    %771 = vmatpush1.bf16.msra.mxu0 %v610
    %772 = vmatprep.subr.bf16.mxu0 %v617
    %773 = vmatpush1.bf16.msra.mxu0 %v616
    %774 = vmatprep.subr.bf16.mxu0 %v623
    %775 = vmatpush1.bf16.msra.mxu0 %v622
    %776 = vmatprep.subr.bf16.mxu0 %v629
    %777 = vmatpush1.bf16.msra.mxu0 %v628
    %778 = vmatprep.subr.bf16.mxu0 %v635
    %779 = vmatpush1.bf16.msra.mxu0 %v634
    %780 = vmatprep.subr.bf16.mxu0 %v641
    %781 = vmatpush1.bf16.msra.mxu0 %v640
    %782 = vmatprep.subr.bf16.mxu0 %v647
    %783 = vmatpush1.bf16.msra.mxu0 %v646
    %784 = vmatprep.subr.bf16.mxu0 %v653
    %785 = vmatpush1.bf16.msra.mxu0 %v652
    %786 = vmatprep.mubr.bf16.mxu0 %v267
    %787 = vmatmul.mubr.bf16.gmra.mrb[0].mxu0 %v266
    %v788 = vpop.f32.mrb[0].mxu0
    %v789 = vadd.f32 %v227, %v788
    %v790 = vpop.f32.mrb[0].mxu0
    %v791 = vadd.f32 %v231, %v790
    %v792 = vpop.f32.mrb[0].mxu0
    %v793 = vadd.f32 %v227, %v792
    %v794 = vpop.f32.mrb[0].mxu0
    %v795 = vadd.f32 %v231, %v794
    %796 = vmatprep.mubr.bf16.mxu0 %v269
    %797 = vmatmul.mubr.bf16.gmra.mrb[0].mxu0 %v268
    %v798 = vpop.f32.mrb[0].mxu0
    %v799 = vadd.f32 %v227, %v798
    %v800 = vpop.f32.mrb[0].mxu0
    %v801 = vadd.f32 %v231, %v800
    %v802 = vpop.f32.mrb[0].mxu0
    %v803 = vadd.f32 %v227, %v802
    %v804 = vpop.f32.mrb[0].mxu0
    %v805 = vadd.f32 %v231, %v804
    %806 = vdwg.mxu0
    %807 = vmatprep.subr.bf16.mxu0 %v565
    %808 = vmatpush1.bf16.msra.mxu0 %v564
    %809 = vmatprep.subr.bf16.mxu0 %v571
    %810 = vmatpush1.bf16.msra.mxu0 %v570
    %811 = vmatprep.subr.bf16.mxu0 %v577
    %812 = vmatpush1.bf16.msra.mxu0 %v576
    %813 = vmatprep.subr.bf16.mxu0 %v583
    %814 = vmatpush1.bf16.msra.mxu0 %v582
    %815 = vmatprep.subr.bf16.mxu0 %v589
    %816 = vmatpush1.bf16.msra.mxu0 %v588
    %817 = vmatprep.subr.bf16.mxu0 %v595
    %818 = vmatpush1.bf16.msra.mxu0 %v594
    %819 = vmatprep.subr.bf16.mxu0 %v601
    %820 = vmatpush1.bf16.msra.mxu0 %v600
    %821 = vmatprep.subr.bf16.mxu0 %v607
    %822 = vmatpush1.bf16.msra.mxu0 %v606
    %823 = vmatprep.subr.bf16.mxu0 %v613
    %824 = vmatpush1.bf16.msra.mxu0 %v612
    %825 = vmatprep.subr.bf16.mxu0 %v619
    %826 = vmatpush1.bf16.msra.mxu0 %v618
    %827 = vmatprep.subr.bf16.mxu0 %v625
    %828 = vmatpush1.bf16.msra.mxu0 %v624
    %829 = vmatprep.subr.bf16.mxu0 %v631
    %830 = vmatpush1.bf16.msra.mxu0 %v630
    %831 = vmatprep.subr.bf16.mxu0 %v637
    %832 = vmatpush1.bf16.msra.mxu0 %v636
    %833 = vmatprep.subr.bf16.mxu0 %v643
    %834 = vmatpush1.bf16.msra.mxu0 %v642
    %835 = vmatprep.subr.bf16.mxu0 %v649
    %836 = vmatpush1.bf16.msra.mxu0 %v648
    %837 = vmatprep.subr.bf16.mxu0 %v655
    %838 = vmatpush1.bf16.msra.mxu0 %v654
    %839 = vmatprep.mubr.bf16.mxu0 %v267
    %840 = vmatmul.mubr.bf16.gmra.mrb[0].mxu0 %v266
    %v841 = vpop.f32.mrb[0].mxu0
    %v842 = vadd.f32 %v235, %v841
    %v843 = vpop.f32.mrb[0].mxu0
    %v844 = vadd.f32 %v239, %v843
    %v845 = vpop.f32.mrb[0].mxu0
    %v846 = vadd.f32 %v235, %v845
    %v847 = vpop.f32.mrb[0].mxu0
    %v848 = vadd.f32 %v239, %v847
    %849 = vmatprep.mubr.bf16.mxu0 %v269
    %850 = vmatmul.mubr.bf16.gmra.mrb[0].mxu0 %v268
    %v851 = vpop.f32.mrb[0].mxu0
    %v852 = vadd.f32 %v235, %v851
    %v853 = vpop.f32.mrb[0].mxu0
    %v854 = vadd.f32 %v239, %v853
    %v855 = vpop.f32.mrb[0].mxu0
    %v856 = vadd.f32 %v235, %v855
    %v857 = vpop.f32.mrb[0].mxu0
    %v858 = vadd.f32 %v239, %v857
    %859 = vdwg.mxu0
    %860 = vmatprep.subr.bf16.mxu0 %v567
    %861 = vmatpush1.bf16.msra.mxu0 %v566
    %862 = vmatprep.subr.bf16.mxu0 %v573
    %863 = vmatpush1.bf16.msra.mxu0 %v572
    %864 = vmatprep.subr.bf16.mxu0 %v579
    %865 = vmatpush1.bf16.msra.mxu0 %v578
    %866 = vmatprep.subr.bf16.mxu0 %v585
    %867 = vmatpush1.bf16.msra.mxu0 %v584
    %868 = vmatprep.subr.bf16.mxu0 %v591
    %869 = vmatpush1.bf16.msra.mxu0 %v590
    %870 = vmatprep.subr.bf16.mxu0 %v597
    %871 = vmatpush1.bf16.msra.mxu0 %v596
    %872 = vmatprep.subr.bf16.mxu0 %v603
    %873 = vmatpush1.bf16.msra.mxu0 %v602
    %874 = vmatprep.subr.bf16.mxu0 %v609
    %875 = vmatpush1.bf16.msra.mxu0 %v608
    %876 = vmatprep.subr.bf16.mxu0 %v615
    %877 = vmatpush1.bf16.msra.mxu0 %v614
    %878 = vmatprep.subr.bf16.mxu0 %v621
    %879 = vmatpush1.bf16.msra.mxu0 %v620
    %880 = vmatprep.subr.bf16.mxu0 %v627
    %881 = vmatpush1.bf16.msra.mxu0 %v626
    %882 = vmatprep.subr.bf16.mxu0 %v633
    %883 = vmatpush1.bf16.msra.mxu0 %v632
    %884 = vmatprep.subr.bf16.mxu0 %v639
    %885 = vmatpush1.bf16.msra.mxu0 %v638
    %886 = vmatprep.subr.bf16.mxu0 %v645
    %887 = vmatpush1.bf16.msra.mxu0 %v644
    %888 = vmatprep.subr.bf16.mxu0 %v651
    %889 = vmatpush1.bf16.msra.mxu0 %v650
    %890 = vmatprep.subr.bf16.mxu0 %v657
    %891 = vmatpush1.bf16.msra.mxu0 %v656
    %892 = vmatprep.mubr.bf16.mxu0 %v267
    %893 = vmatmul.mubr.bf16.gmra.mrb[0].mxu0 %v266
    %v894 = vpop.f32.mrb[0].mxu0
    %v895 = vadd.f32 %v243, %v894
    %v896 = vpop.f32.mrb[0].mxu0
    %v897 = vadd.f32 %v247, %v896
    %v898 = vpop.f32.mrb[0].mxu0
    %v899 = vadd.f32 %v243, %v898
    %v900 = vpop.f32.mrb[0].mxu0
    %v901 = vadd.f32 %v247, %v900
    %902 = vmatprep.mubr.bf16.mxu0 %v269
    %903 = vmatmul.mubr.bf16.gmra.mrb[0].mxu0 %v268
    %v904 = vpop.f32.mrb[0].mxu0
    %v905 = vadd.f32 %v243, %v904
    %v906 = vpop.f32.mrb[0].mxu0
    %v907 = vadd.f32 %v247, %v906
    %v908 = vpop.f32.mrb[0].mxu0
    %v909 = vadd.f32 %v243, %v908
    %v910 = vpop.f32.mrb[0].mxu0
    %v911 = vadd.f32 %v247, %v910
    %912 = vdwg.mxu0
    %v913 = vld [vmem:[#allocation7] sm:$0xff]
    %v914 = vld [vmem:[#allocation7 + $0x8] sm:$0xff]
    %v915 = vld [vmem:[#allocation7 + $0x10] sm:$0xff]
    %v916 = vld [vmem:[#allocation7 + $0x18] sm:$0xff]
    %v917 = vld [vmem:[#allocation7 + $0x20] sm:$0xff]
    %v918 = vld [vmem:[#allocation7 + $0x28] sm:$0xff]
    %v919 = vld [vmem:[#allocation7 + $0x30] sm:$0xff]
    %v920 = vld [vmem:[#allocation7 + $0x38] sm:$0xff]
    %v921 = vld [vmem:[#allocation7 + $0x40] sm:$0xff]
    %v922 = vld [vmem:[#allocation7 + $0x48] sm:$0xff]
    %v923 = vld [vmem:[#allocation7 + $0x50] sm:$0xff]
    %v924 = vld [vmem:[#allocation7 + $0x58] sm:$0xff]
    %v925 = vld [vmem:[#allocation7 + $0x60] sm:$0xff]
    %v926 = vld [vmem:[#allocation7 + $0x68] sm:$0xff]
    %v927 = vld [vmem:[#allocation7 + $0x70] sm:$0xff]
    %v928 = vld [vmem:[#allocation7 + $0x78] sm:$0xff]
    %v929 = vld [vmem:[#allocation7 + $0x80] sm:$0xff]
    %v930 = vld [vmem:[#allocation7 + $0x88] sm:$0xff]
    %v931 = vld [vmem:[#allocation7 + $0x90] sm:$0xff]
    %v932 = vld [vmem:[#allocation7 + $0x98] sm:$0xff]
    %v933 = vld [vmem:[#allocation7 + $0xa0] sm:$0xff]
    %v934 = vld [vmem:[#allocation7 + $0xa8] sm:$0xff]
    %v935 = vld [vmem:[#allocation7 + $0xb0] sm:$0xff]
    %v936 = vld [vmem:[#allocation7 + $0xb8] sm:$0xff]
    %v937 = vld [vmem:[#allocation7 + $0xc0] sm:$0xff]
    %v938 = vld [vmem:[#allocation7 + $0xc8] sm:$0xff]
    %v939 = vld [vmem:[#allocation7 + $0xd0] sm:$0xff]
    %v940 = vld [vmem:[#allocation7 + $0xd8] sm:$0xff]
    %v941 = vld [vmem:[#allocation7 + $0xe0] sm:$0xff]
    %v942 = vld [vmem:[#allocation7 + $0xe8] sm:$0xff]
    %v943 = vld [vmem:[#allocation7 + $0xf0] sm:$0xff]
    %v944 = vld [vmem:[#allocation7 + $0xf8] sm:$0xff]
    %v945 = vld [vmem:[%s4] sm:$0x3]
    %v947 = vlaneseq
    %v948 = vshrl.u32 %v947, 7
    %v949 = vsub.s32 0, %v948
    %v950 = vrot.slane %v945, %v949
    %v951 = vlaneseq
    %v952 = vshrl.u32 %v951, 7
    %v953 = vsub.s32 1, %v952
    %v954 = vrot.slane %v945, %v953
    %v957 = vadd.f32 %v950, %v118
    %v958 = vadd.f32 %v954, %v119
    %v959 = vadd.f32 %v950, %v120
    %v960 = vadd.f32 %v954, %v121
    %v961 = vadd.f32 %v950, %v122
    %v962 = vadd.f32 %v954, %v123
    %v963 = vadd.f32 %v950, %v124
    %v964 = vadd.f32 %v954, %v125
    %v965 = vpack.c.bf16 %v789, %v789
    %v966 = vpack.c.bf16 %v793, %v793
    %v967 = vpack.c.bf16 %v799, %v799
    %v968 = vpack.c.bf16 %v803, %v803
    %v969 = vpack.c.bf16 %v842, %v842
    %v970 = vpack.c.bf16 %v846, %v846
    %v971 = vpack.c.bf16 %v852, %v852
    %v972 = vpack.c.bf16 %v856, %v856
    %v973 = vpack.c.bf16 %v895, %v895
    %v974 = vpack.c.bf16 %v899, %v899
    %v975 = vpack.c.bf16 %v905, %v905
    %v976 = vpack.c.bf16 %v909, %v909
    %vm977 = vcmask 523264
    %v979 = vsel %vm977, %v965, 0
    %v982 = vsel %vm977, %v969, 0
    %984 = vmatprep.subr.bf16.mxu0 0
    %985 = vmatpush1.bf16.xpose.msra.mxu0 %v982
    %986 = vmatprep.subr.bf16.mxu0 0
    %987 = vmatpush1.bf16.xpose.msra.mxu0 0
    %988 = vmatprep.subr.bf16.mxu0 0
    %989 = vmatpush1.bf16.xpose.msra.mxu0 0
    %990 = vmatprep.subr.bf16.mxu0 0
    %991 = vmatpush1.bf16.xpose.msra.mxu0 0
    %992 = vmatprep.subr.bf16.mxu0 0
    %993 = vmatpush1.bf16.xpose.msra.mxu0 0
    %994 = vmatprep.subr.bf16.mxu0 0
    %995 = vmatpush1.bf16.xpose.msra.mxu0 0
    %996 = vmatprep.subr.bf16.mxu0 0
    %997 = vmatpush1.bf16.xpose.msra.mxu0 0
    %998 = vmatprep.subr.bf16.mxu0 0
    %999 = vmatpush1.bf16.xpose.msra.mxu0 0
    %1000 = vmatprep.subr.bf16.mxu0 0
    %1001 = vmatpush1.bf16.xpose.msra.mxu0 0
    %1002 = vmatprep.subr.bf16.mxu0 0
    %1003 = vmatpush1.bf16.xpose.msra.mxu0 0
    %1004 = vmatprep.subr.bf16.mxu0 0
    %1005 = vmatpush1.bf16.xpose.msra.mxu0 0
    %1006 = vmatprep.subr.bf16.mxu0 0
    %1007 = vmatpush1.bf16.xpose.msra.mxu0 0
    %1008 = vmatprep.subr.bf16.mxu0 0
    %1009 = vmatpush1.bf16.xpose.msra.mxu0 0
    %1010 = vmatprep.subr.bf16.mxu0 0
    %1011 = vmatpush1.bf16.xpose.msra.mxu0 0
    %1012 = vmatprep.subr.bf16.mxu0 0
    %1013 = vmatpush1.bf16.xpose.msra.mxu0 0
    %1014 = vmatprep.subr.bf16.mxu0 0
    %1015 = vmatpush1.bf16.xpose.msra.mxu0 0
    %1016 = vmatprep.mubr.bf16.mxu0 0
    %1017 = vmatmul.mubr.bf16.gmra.mrb[0].mxu0 %v979
    %v1018 = vpop.f32.mrb[0].mxu0
    %v1019 = vadd.f32 0.0, %v1018
    %v1020 = vpop.f32.mrb[0].mxu0
    %v1021 = vpop.f32.mrb[0].mxu0
    %v1022 = vpop.f32.mrb[0].mxu0
    %1023 = vdwg.mxu0
    %v1025 = vsel %vm977, %v966, 0
    %v1028 = vsel %vm977, %v970, 0
    %1030 = vmatprep.subr.bf16.mxu0 0
    %1031 = vmatpush1.bf16.xpose.msra.mxu0 %v1028
    %1032 = vmatprep.subr.bf16.mxu0 0
    %1033 = vmatpush1.bf16.xpose.msra.mxu0 0
    %1034 = vmatprep.subr.bf16.mxu0 0
    %1035 = vmatpush1.bf16.xpose.msra.mxu0 0
    %1036 = vmatprep.subr.bf16.mxu0 0
    %1037 = vmatpush1.bf16.xpose.msra.mxu0 0
    %1038 = vmatprep.subr.bf16.mxu0 0
    %1039 = vmatpush1.bf16.xpose.msra.mxu0 0
    %1040 = vmatprep.subr.bf16.mxu0 0
    %1041 = vmatpush1.bf16.xpose.msra.mxu0 0
    %1042 = vmatprep.subr.bf16.mxu0 0
    %1043 = vmatpush1.bf16.xpose.msra.mxu0 0
    %1044 = vmatprep.subr.bf16.mxu0 0
    %1045 = vmatpush1.bf16.xpose.msra.mxu0 0
    %1046 = vmatprep.subr.bf16.mxu0 0
    %1047 = vmatpush1.bf16.xpose.msra.mxu0 0
    %1048 = vmatprep.subr.bf16.mxu0 0
    %1049 = vmatpush1.bf16.xpose.msra.mxu0 0
    %1050 = vmatprep.subr.bf16.mxu0 0
    %1051 = vmatpush1.bf16.xpose.msra.mxu0 0
    %1052 = vmatprep.subr.bf16.mxu0 0
    %1053 = vmatpush1.bf16.xpose.msra.mxu0 0
    %1054 = vmatprep.subr.bf16.mxu0 0
    %1055 = vmatpush1.bf16.xpose.msra.mxu0 0
    %1056 = vmatprep.subr.bf16.mxu0 0
    %1057 = vmatpush1.bf16.xpose.msra.mxu0 0
    %1058 = vmatprep.subr.bf16.mxu0 0
    %1059 = vmatpush1.bf16.xpose.msra.mxu0 0
    %1060 = vmatprep.subr.bf16.mxu0 0
    %1061 = vmatpush1.bf16.xpose.msra.mxu0 0
    %1062 = vmatprep.mubr.bf16.mxu0 0
    %1063 = vmatmul.mubr.bf16.gmra.mrb[0].mxu0 %v1025
    %v1064 = vpop.f32.mrb[0].mxu0
    %v1065 = vadd.f32 0.0, %v1064
    %v1066 = vpop.f32.mrb[0].mxu0
    %v1067 = vpop.f32.mrb[0].mxu0
    %v1068 = vpop.f32.mrb[0].mxu0
    %1069 = vdwg.mxu0
    %v1071 = vsel %vm977, %v967, 0
    %v1074 = vsel %vm977, %v971, 0
    %1076 = vmatprep.subr.bf16.mxu0 0
    %1077 = vmatpush1.bf16.xpose.msra.mxu0 %v1074
    %1078 = vmatprep.subr.bf16.mxu0 0
    %1079 = vmatpush1.bf16.xpose.msra.mxu0 0
    %1080 = vmatprep.subr.bf16.mxu0 0
    %1081 = vmatpush1.bf16.xpose.msra.mxu0 0
    %1082 = vmatprep.subr.bf16.mxu0 0
    %1083 = vmatpush1.bf16.xpose.msra.mxu0 0
    %1084 = vmatprep.subr.bf16.mxu0 0
    %1085 = vmatpush1.bf16.xpose.msra.mxu0 0
    %1086 = vmatprep.subr.bf16.mxu0 0
    %1087 = vmatpush1.bf16.xpose.msra.mxu0 0
    %1088 = vmatprep.subr.bf16.mxu0 0
    %1089 = vmatpush1.bf16.xpose.msra.mxu0 0
    %1090 = vmatprep.subr.bf16.mxu0 0
    %1091 = vmatpush1.bf16.xpose.msra.mxu0 0
    %1092 = vmatprep.subr.bf16.mxu0 0
    %1093 = vmatpush1.bf16.xpose.msra.mxu0 0
    %1094 = vmatprep.subr.bf16.mxu0 0
    %1095 = vmatpush1.bf16.xpose.msra.mxu0 0
    %1096 = vmatprep.subr.bf16.mxu0 0
    %1097 = vmatpush1.bf16.xpose.msra.mxu0 0
    %1098 = vmatprep.subr.bf16.mxu0 0
    %1099 = vmatpush1.bf16.xpose.msra.mxu0 0
    %1100 = vmatprep.subr.bf16.mxu0 0
    %1101 = vmatpush1.bf16.xpose.msra.mxu0 0
    %1102 = vmatprep.subr.bf16.mxu0 0
    %1103 = vmatpush1.bf16.xpose.msra.mxu0 0
    %1104 = vmatprep.subr.bf16.mxu0 0
    %1105 = vmatpush1.bf16.xpose.msra.mxu0 0
    %1106 = vmatprep.subr.bf16.mxu0 0
    %1107 = vmatpush1.bf16.xpose.msra.mxu0 0
    %1108 = vmatprep.mubr.bf16.mxu0 0
    %1109 = vmatmul.mubr.bf16.gmra.mrb[0].mxu0 %v1071
    %v1110 = vpop.f32.mrb[0].mxu0
    %v1111 = vadd.f32 0.0, %v1110
    %v1112 = vpop.f32.mrb[0].mxu0
    %v1113 = vpop.f32.mrb[0].mxu0
    %v1114 = vpop.f32.mrb[0].mxu0
    %1115 = vdwg.mxu0
    %v1117 = vsel %vm977, %v968, 0
    %v1120 = vsel %vm977, %v972, 0
    %1122 = vmatprep.subr.bf16.mxu0 0
    %1123 = vmatpush1.bf16.xpose.msra.mxu0 %v1120
    %1124 = vmatprep.subr.bf16.mxu0 0
    %1125 = vmatpush1.bf16.xpose.msra.mxu0 0
    %1126 = vmatprep.subr.bf16.mxu0 0
    %1127 = vmatpush1.bf16.xpose.msra.mxu0 0
    %1128 = vmatprep.subr.bf16.mxu0 0
    %1129 = vmatpush1.bf16.xpose.msra.mxu0 0
    %1130 = vmatprep.subr.bf16.mxu0 0
    %1131 = vmatpush1.bf16.xpose.msra.mxu0 0
    %1132 = vmatprep.subr.bf16.mxu0 0
    %1133 = vmatpush1.bf16.xpose.msra.mxu0 0
    %1134 = vmatprep.subr.bf16.mxu0 0
    %1135 = vmatpush1.bf16.xpose.msra.mxu0 0
    %1136 = vmatprep.subr.bf16.mxu0 0
    %1137 = vmatpush1.bf16.xpose.msra.mxu0 0
    %1138 = vmatprep.subr.bf16.mxu0 0
    %1139 = vmatpush1.bf16.xpose.msra.mxu0 0
    %1140 = vmatprep.subr.bf16.mxu0 0
    %1141 = vmatpush1.bf16.xpose.msra.mxu0 0
    %1142 = vmatprep.subr.bf16.mxu0 0
    %1143 = vmatpush1.bf16.xpose.msra.mxu0 0
    %1144 = vmatprep.subr.bf16.mxu0 0
    %1145 = vmatpush1.bf16.xpose.msra.mxu0 0
    %1146 = vmatprep.subr.bf16.mxu0 0
    %1147 = vmatpush1.bf16.xpose.msra.mxu0 0
    %1148 = vmatprep.subr.bf16.mxu0 0
    %1149 = vmatpush1.bf16.xpose.msra.mxu0 0
    %1150 = vmatprep.subr.bf16.mxu0 0
    %1151 = vmatpush1.bf16.xpose.msra.mxu0 0
    %1152 = vmatprep.subr.bf16.mxu0 0
    %1153 = vmatpush1.bf16.xpose.msra.mxu0 0
    %1154 = vmatprep.mubr.bf16.mxu0 0
    %1155 = vmatmul.mubr.bf16.gmra.mrb[0].mxu0 %v1117
    %v1156 = vpop.f32.mrb[0].mxu0
    %v1157 = vadd.f32 0.0, %v1156
    %v1158 = vpop.f32.mrb[0].mxu0
    %v1159 = vpop.f32.mrb[0].mxu0
    %v1160 = vpop.f32.mrb[0].mxu0
    %1161 = vdwg.mxu0
    %v1162 = vmul.f32 %v1019, 0.125
    %v1163 = vmul.f32 %v1065, 0.125
    %v1164 = vmul.f32 %v1111, 0.125
    %v1165 = vmul.f32 %v1157, 0.125
    %vm1166 = vcmask 64512
    %v1167 = vsel %vm1166, %v1162, -inf
    %1168 = vmax.xlane.f32.xlu0 %v1167
    %v1169 = vpop.xlane.xlu0 %1168
    %v1170 = vsel %vm1166, %v1163, -inf
    %1171 = vmax.xlane.f32.xlu0 %v1170
    %v1172 = vpop.xlane.xlu0 %1171
    %v1173 = vsel %vm1166, %v1164, -inf
    %1174 = vmax.xlane.f32.xlu0 %v1173
    %v1175 = vpop.xlane.xlu0 %1174
    %v1176 = vsel %vm1166, %v1165, -inf
    %1177 = vmax.xlane.f32.xlu0 %v1176
    %v1178 = vpop.xlane.xlu0 %1177
    %v1179 = vsub.f32 %v1162, %v1169
    %v1180 = vsub.f32 %v1163, %v1172
    %v1181 = vsub.f32 %v1164, %v1175
    %v1182 = vsub.f32 %v1165, %v1178
    %v1183 = vmul.f32 %v1179, 1.442695
    %v1184 = vpow.pop %v1183
    %v1185 = vmul.f32 %v1180, 1.442695
    %v1186 = vpow.pop %v1185
    %v1187 = vmul.f32 %v1181, 1.442695
    %v1188 = vpow.pop %v1187
    %v1189 = vmul.f32 %v1182, 1.442695
    %v1190 = vpow.pop %v1189
    %v1191 = vsel %vm1166, %v1184, 0.0
    %1192 = vadd.xlane.f32.xlu0 %v1191
    %v1193 = vpop.xlane.xlu0 %1192
    %v1194 = vsel %vm1166, %v1186, 0.0
    %1195 = vadd.xlane.f32.xlu0 %v1194
    %v1196 = vpop.xlane.xlu0 %1195
    %v1197 = vsel %vm1166, %v1188, 0.0
    %1198 = vadd.xlane.f32.xlu0 %v1197
    %v1199 = vpop.xlane.xlu0 %1198
    %v1200 = vsel %vm1166, %v1190, 0.0
    %1201 = vadd.xlane.f32.xlu0 %v1200
    %v1202 = vpop.xlane.xlu0 %1201
    %v1203 = vrcp.pop %v1193
    %v1204 = vrcp.pop %v1196
    %v1205 = vrcp.pop %v1199
    %v1206 = vrcp.pop %v1202
    %v1207 = vmul.f32 %v1184, %v1203
    %v1208 = vmul.f32 %v1186, %v1204
    %v1209 = vmul.f32 %v1188, %v1205
    %v1210 = vmul.f32 %v1190, %v1206
    %v1211 = vpack.c.bf16 %v1207, %v1207
    %v1212 = vpack.c.bf16 %v1208, %v1208
    %v1213 = vpack.c.bf16 %v1209, %v1209
    %v1214 = vpack.c.bf16 %v1210, %v1210
    %v1216 = vsel %vm1166, %v1211, 0
    %vm1218 = vcmask 1043456
    %v1220 = vsel %vm1218, %v973, 0
    %1222 = vmatprep.subr.bf16.mxu0 0
    %1223 = vmatpush1.bf16.msra.mxu0 %v1220
    %1224 = vmatprep.subr.bf16.mxu0 0
    %1225 = vmatpush1.bf16.msra.mxu0 0
    %1226 = vmatprep.subr.bf16.mxu0 0
    %1227 = vmatpush1.bf16.msra.mxu0 0
    %1228 = vmatprep.subr.bf16.mxu0 0
    %1229 = vmatpush1.bf16.msra.mxu0 0
    %1230 = vmatprep.subr.bf16.mxu0 0
    %1231 = vmatpush1.bf16.msra.mxu0 0
    %1232 = vmatprep.subr.bf16.mxu0 0
    %1233 = vmatpush1.bf16.msra.mxu0 0
    %1234 = vmatprep.subr.bf16.mxu0 0
    %1235 = vmatpush1.bf16.msra.mxu0 0
    %1236 = vmatprep.subr.bf16.mxu0 0
    %1237 = vmatpush1.bf16.msra.mxu0 0
    %1238 = vmatprep.subr.bf16.mxu0 0
    %1239 = vmatpush1.bf16.msra.mxu0 0
    %1240 = vmatprep.subr.bf16.mxu0 0
    %1241 = vmatpush1.bf16.msra.mxu0 0
    %1242 = vmatprep.subr.bf16.mxu0 0
    %1243 = vmatpush1.bf16.msra.mxu0 0
    %1244 = vmatprep.subr.bf16.mxu0 0
    %1245 = vmatpush1.bf16.msra.mxu0 0
    %1246 = vmatprep.subr.bf16.mxu0 0
    %1247 = vmatpush1.bf16.msra.mxu0 0
    %1248 = vmatprep.subr.bf16.mxu0 0
    %1249 = vmatpush1.bf16.msra.mxu0 0
    %1250 = vmatprep.subr.bf16.mxu0 0
    %1251 = vmatpush1.bf16.msra.mxu0 0
    %1252 = vmatprep.subr.bf16.mxu0 0
    %1253 = vmatpush1.bf16.msra.mxu0 0
    %1254 = vmatprep.mubr.bf16.mxu0 0
    %1255 = vmatmul.mubr.bf16.gmra.mrb[0].mxu0 %v1216
    %v1256 = vpop.f32.mrb[0].mxu0
    %v1257 = vadd.f32 0.0, %v1256
    %v1258 = vpop.f32.mrb[0].mxu0
    %v1259 = vpop.f32.mrb[0].mxu0
    %v1260 = vpop.f32.mrb[0].mxu0
    %1261 = vdwg.mxu0
    %v1263 = vsel %vm1166, %v1212, 0
    %v1266 = vsel %vm1218, %v974, 0
    %1268 = vmatprep.subr.bf16.mxu0 0
    %1269 = vmatpush1.bf16.msra.mxu0 %v1266
    %1270 = vmatprep.subr.bf16.mxu0 0
    %1271 = vmatpush1.bf16.msra.mxu0 0
    %1272 = vmatprep.subr.bf16.mxu0 0
    %1273 = vmatpush1.bf16.msra.mxu0 0
    %1274 = vmatprep.subr.bf16.mxu0 0
    %1275 = vmatpush1.bf16.msra.mxu0 0
    %1276 = vmatprep.subr.bf16.mxu0 0
    %1277 = vmatpush1.bf16.msra.mxu0 0
    %1278 = vmatprep.subr.bf16.mxu0 0
    %1279 = vmatpush1.bf16.msra.mxu0 0
    %1280 = vmatprep.subr.bf16.mxu0 0
    %1281 = vmatpush1.bf16.msra.mxu0 0
    %1282 = vmatprep.subr.bf16.mxu0 0
    %1283 = vmatpush1.bf16.msra.mxu0 0
    %1284 = vmatprep.subr.bf16.mxu0 0
    %1285 = vmatpush1.bf16.msra.mxu0 0
    %1286 = vmatprep.subr.bf16.mxu0 0
    %1287 = vmatpush1.bf16.msra.mxu0 0
    %1288 = vmatprep.subr.bf16.mxu0 0
    %1289 = vmatpush1.bf16.msra.mxu0 0
    %1290 = vmatprep.subr.bf16.mxu0 0
    %1291 = vmatpush1.bf16.msra.mxu0 0
    %1292 = vmatprep.subr.bf16.mxu0 0
    %1293 = vmatpush1.bf16.msra.mxu0 0
    %1294 = vmatprep.subr.bf16.mxu0 0
    %1295 = vmatpush1.bf16.msra.mxu0 0
    %1296 = vmatprep.subr.bf16.mxu0 0
    %1297 = vmatpush1.bf16.msra.mxu0 0
    %1298 = vmatprep.subr.bf16.mxu0 0
    %1299 = vmatpush1.bf16.msra.mxu0 0
    %1300 = vmatprep.mubr.bf16.mxu0 0
    %1301 = vmatmul.mubr.bf16.gmra.mrb[0].mxu0 %v1263
    %v1302 = vpop.f32.mrb[0].mxu0
    %v1303 = vadd.f32 0.0, %v1302
    %v1304 = vpop.f32.mrb[0].mxu0
    %v1305 = vpop.f32.mrb[0].mxu0
    %v1306 = vpop.f32.mrb[0].mxu0
    %1307 = vdwg.mxu0
    %v1309 = vsel %vm1166, %v1213, 0
    %v1312 = vsel %vm1218, %v975, 0
    %1314 = vmatprep.subr.bf16.mxu0 0
    %1315 = vmatpush1.bf16.msra.mxu0 %v1312
    %1316 = vmatprep.subr.bf16.mxu0 0
    %1317 = vmatpush1.bf16.msra.mxu0 0
    %1318 = vmatprep.subr.bf16.mxu0 0
    %1319 = vmatpush1.bf16.msra.mxu0 0
    %1320 = vmatprep.subr.bf16.mxu0 0
    %1321 = vmatpush1.bf16.msra.mxu0 0
    %1322 = vmatprep.subr.bf16.mxu0 0
    %1323 = vmatpush1.bf16.msra.mxu0 0
    %1324 = vmatprep.subr.bf16.mxu0 0
    %1325 = vmatpush1.bf16.msra.mxu0 0
    %1326 = vmatprep.subr.bf16.mxu0 0
    %1327 = vmatpush1.bf16.msra.mxu0 0
    %1328 = vmatprep.subr.bf16.mxu0 0
    %1329 = vmatpush1.bf16.msra.mxu0 0
    %1330 = vmatprep.subr.bf16.mxu0 0
    %1331 = vmatpush1.bf16.msra.mxu0 0
    %1332 = vmatprep.subr.bf16.mxu0 0
    %1333 = vmatpush1.bf16.msra.mxu0 0
    %1334 = vmatprep.subr.bf16.mxu0 0
    %1335 = vmatpush1.bf16.msra.mxu0 0
    %1336 = vmatprep.subr.bf16.mxu0 0
    %1337 = vmatpush1.bf16.msra.mxu0 0
    %1338 = vmatprep.subr.bf16.mxu0 0
    %1339 = vmatpush1.bf16.msra.mxu0 0
    %1340 = vmatprep.subr.bf16.mxu0 0
    %1341 = vmatpush1.bf16.msra.mxu0 0
    %1342 = vmatprep.subr.bf16.mxu0 0
    %1343 = vmatpush1.bf16.msra.mxu0 0
    %1344 = vmatprep.subr.bf16.mxu0 0
    %1345 = vmatpush1.bf16.msra.mxu0 0
    %1346 = vmatprep.mubr.bf16.mxu0 0
    %1347 = vmatmul.mubr.bf16.gmra.mrb[0].mxu0 %v1309
    %v1348 = vpop.f32.mrb[0].mxu0
    %v1349 = vadd.f32 0.0, %v1348
    %v1350 = vpop.f32.mrb[0].mxu0
    %v1351 = vpop.f32.mrb[0].mxu0
    %v1352 = vpop.f32.mrb[0].mxu0
    %1353 = vdwg.mxu0
    %v1355 = vsel %vm1166, %v1214, 0
    %v1358 = vsel %vm1218, %v976, 0
    %1360 = vmatprep.subr.bf16.mxu0 0
    %1361 = vmatpush1.bf16.msra.mxu0 %v1358
    %1362 = vmatprep.subr.bf16.mxu0 0
    %1363 = vmatpush1.bf16.msra.mxu0 0
    %1364 = vmatprep.subr.bf16.mxu0 0
    %1365 = vmatpush1.bf16.msra.mxu0 0
    %1366 = vmatprep.subr.bf16.mxu0 0
    %1367 = vmatpush1.bf16.msra.mxu0 0
    %1368 = vmatprep.subr.bf16.mxu0 0
    %1369 = vmatpush1.bf16.msra.mxu0 0
    %1370 = vmatprep.subr.bf16.mxu0 0
    %1371 = vmatpush1.bf16.msra.mxu0 0
    %1372 = vmatprep.subr.bf16.mxu0 0
    %1373 = vmatpush1.bf16.msra.mxu0 0
    %1374 = vmatprep.subr.bf16.mxu0 0
    %1375 = vmatpush1.bf16.msra.mxu0 0
    %1376 = vmatprep.subr.bf16.mxu0 0
    %1377 = vmatpush1.bf16.msra.mxu0 0
    %1378 = vmatprep.subr.bf16.mxu0 0
    %1379 = vmatpush1.bf16.msra.mxu0 0
    %1380 = vmatprep.subr.bf16.mxu0 0
    %1381 = vmatpush1.bf16.msra.mxu0 0
    %1382 = vmatprep.subr.bf16.mxu0 0
    %1383 = vmatpush1.bf16.msra.mxu0 0
    %1384 = vmatprep.subr.bf16.mxu0 0
    %1385 = vmatpush1.bf16.msra.mxu0 0
    %1386 = vmatprep.subr.bf16.mxu0 0
    %1387 = vmatpush1.bf16.msra.mxu0 0
    %1388 = vmatprep.subr.bf16.mxu0 0
    %1389 = vmatpush1.bf16.msra.mxu0 0
    %1390 = vmatprep.subr.bf16.mxu0 0
    %1391 = vmatpush1.bf16.msra.mxu0 0
    %1392 = vmatprep.mubr.bf16.mxu0 0
    %1393 = vmatmul.mubr.bf16.gmra.mrb[0].mxu0 %v1355
    %v1394 = vpop.f32.mrb[0].mxu0
    %v1395 = vadd.f32 0.0, %v1394
    %v1396 = vpop.f32.mrb[0].mxu0
    %v1397 = vpop.f32.mrb[0].mxu0
    %v1398 = vpop.f32.mrb[0].mxu0
    %1399 = vdwg.mxu0
    %v1400 = vpack.c.bf16 %v1303, %v1257
    %v1401 = vpack.c.bf16 %v1395, %v1349
    %v1410 = vunpack.c.l.b16 %v913
    %v1411 = vunpack.c.h.b16 %v913
    %v1412 = vunpack.c.l.b16 %v914
    %v1413 = vunpack.c.h.b16 %v914
    %v1414 = vunpack.c.l.b16 %v915
    %v1415 = vunpack.c.h.b16 %v915
    %v1416 = vunpack.c.l.b16 %v916
    %v1417 = vunpack.c.h.b16 %v916
    %v1418 = vunpack.c.l.b16 %v917
    %v1419 = vunpack.c.h.b16 %v917
    %v1420 = vunpack.c.l.b16 %v918
    %v1421 = vunpack.c.h.b16 %v918
    %v1422 = vunpack.c.l.b16 %v919
    %v1423 = vunpack.c.h.b16 %v919
    %v1424 = vunpack.c.l.b16 %v920
    %v1425 = vunpack.c.h.b16 %v920
    %v1426 = vpack.c.b16 %v1412, %v1410
    %v1427 = vpack.c.b16 %v1413, %v1411
    %v1428 = vpack.c.b16 %v1416, %v1414
    %v1429 = vpack.c.b16 %v1417, %v1415
    %v1430 = vpack.c.b16 %v1420, %v1418
    %v1431 = vpack.c.b16 %v1421, %v1419
    %v1432 = vpack.c.b16 %v1424, %v1422
    %v1433 = vpack.c.b16 %v1425, %v1423
    %v1443 = vsel %vm977, %v1400, 0
    %v1446 = vsel %vm977, %v1401, 0
    %1448 = vmatprep.subr.bf16.mxu0 %v1427
    %1449 = vmatpush1.bf16.msra.mxu0 %v1426
    %1450 = vmatprep.subr.bf16.mxu0 %v1429
    %1451 = vmatpush1.bf16.msra.mxu0 %v1428
    %1452 = vmatprep.subr.bf16.mxu0 %v1431
    %1453 = vmatpush1.bf16.msra.mxu0 %v1430
    %1454 = vmatprep.subr.bf16.mxu0 %v1433
    %1455 = vmatpush1.bf16.msra.mxu0 %v1432
    %1456 = vmatprep.subr.bf16.mxu0 0
    %1457 = vmatpush1.bf16.msra.mxu0 0
    %1458 = vmatprep.subr.bf16.mxu0 0
    %1459 = vmatpush1.bf16.msra.mxu0 0
    %1460 = vmatprep.subr.bf16.mxu0 0
    %1461 = vmatpush1.bf16.msra.mxu0 0
    %1462 = vmatprep.subr.bf16.mxu0 0
    %1463 = vmatpush1.bf16.msra.mxu0 0
    %1464 = vmatprep.subr.bf16.mxu0 0
    %1465 = vmatpush1.bf16.msra.mxu0 0
    %1466 = vmatprep.subr.bf16.mxu0 0
    %1467 = vmatpush1.bf16.msra.mxu0 0
    %1468 = vmatprep.subr.bf16.mxu0 0
    %1469 = vmatpush1.bf16.msra.mxu0 0
    %1470 = vmatprep.subr.bf16.mxu0 0
    %1471 = vmatpush1.bf16.msra.mxu0 0
    %1472 = vmatprep.subr.bf16.mxu0 0
    %1473 = vmatpush1.bf16.msra.mxu0 0
    %1474 = vmatprep.subr.bf16.mxu0 0
    %1475 = vmatpush1.bf16.msra.mxu0 0
    %1476 = vmatprep.subr.bf16.mxu0 0
    %1477 = vmatpush1.bf16.msra.mxu0 0
    %1478 = vmatprep.subr.bf16.mxu0 0
    %1479 = vmatpush1.bf16.msra.mxu0 0
    %1480 = vmatprep.mubr.bf16.mxu0 0
    %1481 = vmatmul.mubr.bf16.gmra.mrb[0].mxu0 %v1443
    %v1482 = vpop.f32.mrb[0].mxu0
    %v1483 = vadd.f32 0.0, %v1482
    %v1484 = vpop.f32.mrb[0].mxu0
    %v1485 = vadd.f32 0.0, %v1484
    %v1486 = vpop.f32.mrb[0].mxu0
    %v1487 = vadd.f32 0.0, %v1486
    %v1488 = vpop.f32.mrb[0].mxu0
    %v1489 = vadd.f32 0.0, %v1488
    %1490 = vmatprep.mubr.bf16.mxu0 0
    %1491 = vmatmul.mubr.bf16.gmra.mrb[0].mxu0 %v1446
    %v1492 = vpop.f32.mrb[0].mxu0
    %v1493 = vadd.f32 0.0, %v1492
    %v1494 = vpop.f32.mrb[0].mxu0
    %v1495 = vadd.f32 0.0, %v1494
    %v1496 = vpop.f32.mrb[0].mxu0
    %v1497 = vadd.f32 0.0, %v1496
    %v1498 = vpop.f32.mrb[0].mxu0
    %v1499 = vadd.f32 0.0, %v1498
    %1500 = vdwg.mxu0
    %v1501 = vadd.f32 %v957, %v1483
    %v1502 = vadd.f32 %v958, %v1485
    %v1503 = vadd.f32 %v959, %v1487
    %v1504 = vadd.f32 %v960, %v1489
    %v1505 = vadd.f32 %v961, %v1493
    %v1506 = vadd.f32 %v962, %v1495
    %v1507 = vadd.f32 %v963, %v1497
    %v1508 = vadd.f32 %v964, %v1499
    %1510 = vrot.lane.b32.xlu0 %v965, 64
    %v1511 = vpop.permute.xlu0 %1510
    %1513 = vrot.lane.b32.xlu0 %v969, 64
    %v1514 = vpop.permute.xlu0 %1513
    %v1516 = vsel %vm977, %v1511, 0
    %v1519 = vsel %vm977, %v1514, 0
    %1521 = vmatprep.subr.bf16.mxu0 0
    %1522 = vmatpush1.bf16.xpose.msra.mxu0 %v1519
    %1523 = vmatprep.subr.bf16.mxu0 0
    %1524 = vmatpush1.bf16.xpose.msra.mxu0 0
    %1525 = vmatprep.subr.bf16.mxu0 0
    %1526 = vmatpush1.bf16.xpose.msra.mxu0 0
    %1527 = vmatprep.subr.bf16.mxu0 0
    %1528 = vmatpush1.bf16.xpose.msra.mxu0 0
    %1529 = vmatprep.subr.bf16.mxu0 0
    %1530 = vmatpush1.bf16.xpose.msra.mxu0 0
    %1531 = vmatprep.subr.bf16.mxu0 0
    %1532 = vmatpush1.bf16.xpose.msra.mxu0 0
    %1533 = vmatprep.subr.bf16.mxu0 0
    %1534 = vmatpush1.bf16.xpose.msra.mxu0 0
    %1535 = vmatprep.subr.bf16.mxu0 0
    %1536 = vmatpush1.bf16.xpose.msra.mxu0 0
    %1537 = vmatprep.subr.bf16.mxu0 0
    %1538 = vmatpush1.bf16.xpose.msra.mxu0 0
    %1539 = vmatprep.subr.bf16.mxu0 0
    %1540 = vmatpush1.bf16.xpose.msra.mxu0 0
    %1541 = vmatprep.subr.bf16.mxu0 0
    %1542 = vmatpush1.bf16.xpose.msra.mxu0 0
    %1543 = vmatprep.subr.bf16.mxu0 0
    %1544 = vmatpush1.bf16.xpose.msra.mxu0 0
    %1545 = vmatprep.subr.bf16.mxu0 0
    %1546 = vmatpush1.bf16.xpose.msra.mxu0 0
    %1547 = vmatprep.subr.bf16.mxu0 0
    %1548 = vmatpush1.bf16.xpose.msra.mxu0 0
    %1549 = vmatprep.subr.bf16.mxu0 0
    %1550 = vmatpush1.bf16.xpose.msra.mxu0 0
    %1551 = vmatprep.subr.bf16.mxu0 0
    %1552 = vmatpush1.bf16.xpose.msra.mxu0 0
    %1553 = vmatprep.mubr.bf16.mxu0 0
    %1554 = vmatmul.mubr.bf16.gmra.mrb[0].mxu0 %v1516
    %v1555 = vpop.f32.mrb[0].mxu0
    %v1556 = vadd.f32 0.0, %v1555
    %v1557 = vpop.f32.mrb[0].mxu0
    %v1558 = vpop.f32.mrb[0].mxu0
    %v1559 = vpop.f32.mrb[0].mxu0
    %1560 = vdwg.mxu0
    %1562 = vrot.lane.b32.xlu0 %v966, 64
    %v1563 = vpop.permute.xlu0 %1562
    %1565 = vrot.lane.b32.xlu0 %v970, 64
    %v1566 = vpop.permute.xlu0 %1565
    %v1568 = vsel %vm977, %v1563, 0
    %v1571 = vsel %vm977, %v1566, 0
    %1573 = vmatprep.subr.bf16.mxu0 0
    %1574 = vmatpush1.bf16.xpose.msra.mxu0 %v1571
    %1575 = vmatprep.subr.bf16.mxu0 0
    %1576 = vmatpush1.bf16.xpose.msra.mxu0 0
    %1577 = vmatprep.subr.bf16.mxu0 0
    %1578 = vmatpush1.bf16.xpose.msra.mxu0 0
    %1579 = vmatprep.subr.bf16.mxu0 0
    %1580 = vmatpush1.bf16.xpose.msra.mxu0 0
    %1581 = vmatprep.subr.bf16.mxu0 0
    %1582 = vmatpush1.bf16.xpose.msra.mxu0 0
    %1583 = vmatprep.subr.bf16.mxu0 0
    %1584 = vmatpush1.bf16.xpose.msra.mxu0 0
    %1585 = vmatprep.subr.bf16.mxu0 0
    %1586 = vmatpush1.bf16.xpose.msra.mxu0 0
    %1587 = vmatprep.subr.bf16.mxu0 0
    %1588 = vmatpush1.bf16.xpose.msra.mxu0 0
    %1589 = vmatprep.subr.bf16.mxu0 0
    %1590 = vmatpush1.bf16.xpose.msra.mxu0 0
    %1591 = vmatprep.subr.bf16.mxu0 0
    %1592 = vmatpush1.bf16.xpose.msra.mxu0 0
    %1593 = vmatprep.subr.bf16.mxu0 0
    %1594 = vmatpush1.bf16.xpose.msra.mxu0 0
    %1595 = vmatprep.subr.bf16.mxu0 0
    %1596 = vmatpush1.bf16.xpose.msra.mxu0 0
    %1597 = vmatprep.subr.bf16.mxu0 0
    %1598 = vmatpush1.bf16.xpose.msra.mxu0 0
    %1599 = vmatprep.subr.bf16.mxu0 0
    %1600 = vmatpush1.bf16.xpose.msra.mxu0 0
    %1601 = vmatprep.subr.bf16.mxu0 0
    %1602 = vmatpush1.bf16.xpose.msra.mxu0 0
    %1603 = vmatprep.subr.bf16.mxu0 0
    %1604 = vmatpush1.bf16.xpose.msra.mxu0 0
    %1605 = vmatprep.mubr.bf16.mxu0 0
    %1606 = vmatmul.mubr.bf16.gmra.mrb[0].mxu0 %v1568
    %v1607 = vpop.f32.mrb[0].mxu0
    %v1608 = vadd.f32 0.0, %v1607
    %v1609 = vpop.f32.mrb[0].mxu0
    %v1610 = vpop.f32.mrb[0].mxu0
    %v1611 = vpop.f32.mrb[0].mxu0
    %1612 = vdwg.mxu0
    %1614 = vrot.lane.b32.xlu0 %v967, 64
    %v1615 = vpop.permute.xlu0 %1614
    %1617 = vrot.lane.b32.xlu0 %v971, 64
    %v1618 = vpop.permute.xlu0 %1617
    %v1620 = vsel %vm977, %v1615, 0
    %v1623 = vsel %vm977, %v1618, 0
    %1625 = vmatprep.subr.bf16.mxu0 0
    %1626 = vmatpush1.bf16.xpose.msra.mxu0 %v1623
    %1627 = vmatprep.subr.bf16.mxu0 0
    %1628 = vmatpush1.bf16.xpose.msra.mxu0 0
    %1629 = vmatprep.subr.bf16.mxu0 0
    %1630 = vmatpush1.bf16.xpose.msra.mxu0 0
    %1631 = vmatprep.subr.bf16.mxu0 0
    %1632 = vmatpush1.bf16.xpose.msra.mxu0 0
    %1633 = vmatprep.subr.bf16.mxu0 0
    %1634 = vmatpush1.bf16.xpose.msra.mxu0 0
    %1635 = vmatprep.subr.bf16.mxu0 0
    %1636 = vmatpush1.bf16.xpose.msra.mxu0 0
    %1637 = vmatprep.subr.bf16.mxu0 0
    %1638 = vmatpush1.bf16.xpose.msra.mxu0 0
    %1639 = vmatprep.subr.bf16.mxu0 0
    %1640 = vmatpush1.bf16.xpose.msra.mxu0 0
    %1641 = vmatprep.subr.bf16.mxu0 0
    %1642 = vmatpush1.bf16.xpose.msra.mxu0 0
    %1643 = vmatprep.subr.bf16.mxu0 0
    %1644 = vmatpush1.bf16.xpose.msra.mxu0 0
    %1645 = vmatprep.subr.bf16.mxu0 0
    %1646 = vmatpush1.bf16.xpose.msra.mxu0 0
    %1647 = vmatprep.subr.bf16.mxu0 0
    %1648 = vmatpush1.bf16.xpose.msra.mxu0 0
    %1649 = vmatprep.subr.bf16.mxu0 0
    %1650 = vmatpush1.bf16.xpose.msra.mxu0 0
    %1651 = vmatprep.subr.bf16.mxu0 0
    %1652 = vmatpush1.bf16.xpose.msra.mxu0 0
    %1653 = vmatprep.subr.bf16.mxu0 0
    %1654 = vmatpush1.bf16.xpose.msra.mxu0 0
    %1655 = vmatprep.subr.bf16.mxu0 0
    %1656 = vmatpush1.bf16.xpose.msra.mxu0 0
    %1657 = vmatprep.mubr.bf16.mxu0 0
    %1658 = vmatmul.mubr.bf16.gmra.mrb[0].mxu0 %v1620
    %v1659 = vpop.f32.mrb[0].mxu0
    %v1660 = vadd.f32 0.0, %v1659
    %v1661 = vpop.f32.mrb[0].mxu0
    %v1662 = vpop.f32.mrb[0].mxu0
    %v1663 = vpop.f32.mrb[0].mxu0
    %1664 = vdwg.mxu0
    %1666 = vrot.lane.b32.xlu0 %v968, 64
    %v1667 = vpop.permute.xlu0 %1666
    %1669 = vrot.lane.b32.xlu0 %v972, 64
    %v1670 = vpop.permute.xlu0 %1669
    %v1672 = vsel %vm977, %v1667, 0
    %v1675 = vsel %vm977, %v1670, 0
    %1677 = vmatprep.subr.bf16.mxu0 0
    %1678 = vmatpush1.bf16.xpose.msra.mxu0 %v1675
    %1679 = vmatprep.subr.bf16.mxu0 0
    %1680 = vmatpush1.bf16.xpose.msra.mxu0 0
    %1681 = vmatprep.subr.bf16.mxu0 0
    %1682 = vmatpush1.bf16.xpose.msra.mxu0 0
    %1683 = vmatprep.subr.bf16.mxu0 0
    %1684 = vmatpush1.bf16.xpose.msra.mxu0 0
    %1685 = vmatprep.subr.bf16.mxu0 0
    %1686 = vmatpush1.bf16.xpose.msra.mxu0 0
    %1687 = vmatprep.subr.bf16.mxu0 0
    %1688 = vmatpush1.bf16.xpose.msra.mxu0 0
    %1689 = vmatprep.subr.bf16.mxu0 0
    %1690 = vmatpush1.bf16.xpose.msra.mxu0 0
    %1691 = vmatprep.subr.bf16.mxu0 0
    %1692 = vmatpush1.bf16.xpose.msra.mxu0 0
    %1693 = vmatprep.subr.bf16.mxu0 0
    %1694 = vmatpush1.bf16.xpose.msra.mxu0 0
    %1695 = vmatprep.subr.bf16.mxu0 0
    %1696 = vmatpush1.bf16.xpose.msra.mxu0 0
    %1697 = vmatprep.subr.bf16.mxu0 0
    %1698 = vmatpush1.bf16.xpose.msra.mxu0 0
    %1699 = vmatprep.subr.bf16.mxu0 0
    %1700 = vmatpush1.bf16.xpose.msra.mxu0 0
    %1701 = vmatprep.subr.bf16.mxu0 0
    %1702 = vmatpush1.bf16.xpose.msra.mxu0 0
    %1703 = vmatprep.subr.bf16.mxu0 0
    %1704 = vmatpush1.bf16.xpose.msra.mxu0 0
    %1705 = vmatprep.subr.bf16.mxu0 0
    %1706 = vmatpush1.bf16.xpose.msra.mxu0 0
    %1707 = vmatprep.subr.bf16.mxu0 0
    %1708 = vmatpush1.bf16.xpose.msra.mxu0 0
    %1709 = vmatprep.mubr.bf16.mxu0 0
    %1710 = vmatmul.mubr.bf16.gmra.mrb[0].mxu0 %v1672
    %v1711 = vpop.f32.mrb[0].mxu0
    %v1712 = vadd.f32 0.0, %v1711
    %v1713 = vpop.f32.mrb[0].mxu0
    %v1714 = vpop.f32.mrb[0].mxu0
    %v1715 = vpop.f32.mrb[0].mxu0
    %1716 = vdwg.mxu0
    %v1717 = vmul.f32 %v1556, 0.125
    %v1718 = vmul.f32 %v1608, 0.125
    %v1719 = vmul.f32 %v1660, 0.125
    %v1720 = vmul.f32 %v1712, 0.125
    %v1721 = vsel %vm1166, %v1717, -inf
    %1722 = vmax.xlane.f32.xlu0 %v1721
    %v1723 = vpop.xlane.xlu0 %1722
    %v1724 = vsel %vm1166, %v1718, -inf
    %1725 = vmax.xlane.f32.xlu0 %v1724
    %v1726 = vpop.xlane.xlu0 %1725
    %v1727 = vsel %vm1166, %v1719, -inf
    %1728 = vmax.xlane.f32.xlu0 %v1727
    %v1729 = vpop.xlane.xlu0 %1728
    %v1730 = vsel %vm1166, %v1720, -inf
    %1731 = vmax.xlane.f32.xlu0 %v1730
    %v1732 = vpop.xlane.xlu0 %1731
    %v1733 = vsub.f32 %v1717, %v1723
    %v1734 = vsub.f32 %v1718, %v1726
    %v1735 = vsub.f32 %v1719, %v1729
    %v1736 = vsub.f32 %v1720, %v1732
    %v1737 = vmul.f32 %v1733, 1.442695
    %v1738 = vpow.pop %v1737
    %v1739 = vmul.f32 %v1734, 1.442695
    %v1740 = vpow.pop %v1739
    %v1741 = vmul.f32 %v1735, 1.442695
    %v1742 = vpow.pop %v1741
    %v1743 = vmul.f32 %v1736, 1.442695
    %v1744 = vpow.pop %v1743
    %v1745 = vsel %vm1166, %v1738, 0.0
    %1746 = vadd.xlane.f32.xlu0 %v1745
    %v1747 = vpop.xlane.xlu0 %1746
    %v1748 = vsel %vm1166, %v1740, 0.0
    %1749 = vadd.xlane.f32.xlu0 %v1748
    %v1750 = vpop.xlane.xlu0 %1749
    %v1751 = vsel %vm1166, %v1742, 0.0
    %1752 = vadd.xlane.f32.xlu0 %v1751
    %v1753 = vpop.xlane.xlu0 %1752
    %v1754 = vsel %vm1166, %v1744, 0.0
    %1755 = vadd.xlane.f32.xlu0 %v1754
    %v1756 = vpop.xlane.xlu0 %1755
    %v1757 = vrcp.pop %v1747
    %v1758 = vrcp.pop %v1750
    %v1759 = vrcp.pop %v1753
    %v1760 = vrcp.pop %v1756
    %v1761 = vmul.f32 %v1738, %v1757
    %v1762 = vmul.f32 %v1740, %v1758
    %v1763 = vmul.f32 %v1742, %v1759
    %v1764 = vmul.f32 %v1744, %v1760
    %v1765 = vpack.c.bf16 %v1761, %v1761
    %v1766 = vpack.c.bf16 %v1762, %v1762
    %v1767 = vpack.c.bf16 %v1763, %v1763
    %v1768 = vpack.c.bf16 %v1764, %v1764
    %1770 = vrot.lane.b32.xlu0 %v973, 64
    %v1771 = vpop.permute.xlu0 %1770
    %v1773 = vsel %vm1166, %v1765, 0
    %v1776 = vsel %vm1218, %v1771, 0
    %1778 = vmatprep.subr.bf16.mxu0 0
    %1779 = vmatpush1.bf16.msra.mxu0 %v1776
    %1780 = vmatprep.subr.bf16.mxu0 0
    %1781 = vmatpush1.bf16.msra.mxu0 0
    %1782 = vmatprep.subr.bf16.mxu0 0
    %1783 = vmatpush1.bf16.msra.mxu0 0
    %1784 = vmatprep.subr.bf16.mxu0 0
    %1785 = vmatpush1.bf16.msra.mxu0 0
    %1786 = vmatprep.subr.bf16.mxu0 0
    %1787 = vmatpush1.bf16.msra.mxu0 0
    %1788 = vmatprep.subr.bf16.mxu0 0
    %1789 = vmatpush1.bf16.msra.mxu0 0
    %1790 = vmatprep.subr.bf16.mxu0 0
    %1791 = vmatpush1.bf16.msra.mxu0 0
    %1792 = vmatprep.subr.bf16.mxu0 0
    %1793 = vmatpush1.bf16.msra.mxu0 0
    %1794 = vmatprep.subr.bf16.mxu0 0
    %1795 = vmatpush1.bf16.msra.mxu0 0
    %1796 = vmatprep.subr.bf16.mxu0 0
    %1797 = vmatpush1.bf16.msra.mxu0 0
    %1798 = vmatprep.subr.bf16.mxu0 0
    %1799 = vmatpush1.bf16.msra.mxu0 0
    %1800 = vmatprep.subr.bf16.mxu0 0
    %1801 = vmatpush1.bf16.msra.mxu0 0
    %1802 = vmatprep.subr.bf16.mxu0 0
    %1803 = vmatpush1.bf16.msra.mxu0 0
    %1804 = vmatprep.subr.bf16.mxu0 0
    %1805 = vmatpush1.bf16.msra.mxu0 0
    %1806 = vmatprep.subr.bf16.mxu0 0
    %1807 = vmatpush1.bf16.msra.mxu0 0
    %1808 = vmatprep.subr.bf16.mxu0 0
    %1809 = vmatpush1.bf16.msra.mxu0 0
    %1810 = vmatprep.mubr.bf16.mxu0 0
    %1811 = vmatmul.mubr.bf16.gmra.mrb[0].mxu0 %v1773
    %v1812 = vpop.f32.mrb[0].mxu0
    %v1813 = vadd.f32 0.0, %v1812
    %v1814 = vpop.f32.mrb[0].mxu0
    %v1815 = vpop.f32.mrb[0].mxu0
    %v1816 = vpop.f32.mrb[0].mxu0
    %1817 = vdwg.mxu0
    %1819 = vrot.lane.b32.xlu0 %v974, 64
    %v1820 = vpop.permute.xlu0 %1819
    %v1822 = vsel %vm1166, %v1766, 0
    %v1825 = vsel %vm1218, %v1820, 0
    %1827 = vmatprep.subr.bf16.mxu0 0
    %1828 = vmatpush1.bf16.msra.mxu0 %v1825
    %1829 = vmatprep.subr.bf16.mxu0 0
    %1830 = vmatpush1.bf16.msra.mxu0 0
    %1831 = vmatprep.subr.bf16.mxu0 0
    %1832 = vmatpush1.bf16.msra.mxu0 0
    %1833 = vmatprep.subr.bf16.mxu0 0
    %1834 = vmatpush1.bf16.msra.mxu0 0
    %1835 = vmatprep.subr.bf16.mxu0 0
    %1836 = vmatpush1.bf16.msra.mxu0 0
    %1837 = vmatprep.subr.bf16.mxu0 0
    %1838 = vmatpush1.bf16.msra.mxu0 0
    %1839 = vmatprep.subr.bf16.mxu0 0
    %1840 = vmatpush1.bf16.msra.mxu0 0
    %1841 = vmatprep.subr.bf16.mxu0 0
    %1842 = vmatpush1.bf16.msra.mxu0 0
    %1843 = vmatprep.subr.bf16.mxu0 0
    %1844 = vmatpush1.bf16.msra.mxu0 0
    %1845 = vmatprep.subr.bf16.mxu0 0
    %1846 = vmatpush1.bf16.msra.mxu0 0
    %1847 = vmatprep.subr.bf16.mxu0 0
    %1848 = vmatpush1.bf16.msra.mxu0 0
    %1849 = vmatprep.subr.bf16.mxu0 0
    %1850 = vmatpush1.bf16.msra.mxu0 0
    %1851 = vmatprep.subr.bf16.mxu0 0
    %1852 = vmatpush1.bf16.msra.mxu0 0
    %1853 = vmatprep.subr.bf16.mxu0 0
    %1854 = vmatpush1.bf16.msra.mxu0 0
    %1855 = vmatprep.subr.bf16.mxu0 0
    %1856 = vmatpush1.bf16.msra.mxu0 0
    %1857 = vmatprep.subr.bf16.mxu0 0
    %1858 = vmatpush1.bf16.msra.mxu0 0
    %1859 = vmatprep.mubr.bf16.mxu0 0
    %1860 = vmatmul.mubr.bf16.gmra.mrb[0].mxu0 %v1822
    %v1861 = vpop.f32.mrb[0].mxu0
    %v1862 = vadd.f32 0.0, %v1861
    %v1863 = vpop.f32.mrb[0].mxu0
    %v1864 = vpop.f32.mrb[0].mxu0
    %v1865 = vpop.f32.mrb[0].mxu0
    %1866 = vdwg.mxu0
    %1868 = vrot.lane.b32.xlu0 %v975, 64
    %v1869 = vpop.permute.xlu0 %1868
    %v1871 = vsel %vm1166, %v1767, 0
    %v1874 = vsel %vm1218, %v1869, 0
    %1876 = vmatprep.subr.bf16.mxu0 0
    %1877 = vmatpush1.bf16.msra.mxu0 %v1874
    %1878 = vmatprep.subr.bf16.mxu0 0
    %1879 = vmatpush1.bf16.msra.mxu0 0
    %1880 = vmatprep.subr.bf16.mxu0 0
    %1881 = vmatpush1.bf16.msra.mxu0 0
    %1882 = vmatprep.subr.bf16.mxu0 0
    %1883 = vmatpush1.bf16.msra.mxu0 0
    %1884 = vmatprep.subr.bf16.mxu0 0
    %1885 = vmatpush1.bf16.msra.mxu0 0
    %1886 = vmatprep.subr.bf16.mxu0 0
    %1887 = vmatpush1.bf16.msra.mxu0 0
    %1888 = vmatprep.subr.bf16.mxu0 0
    %1889 = vmatpush1.bf16.msra.mxu0 0
    %1890 = vmatprep.subr.bf16.mxu0 0
    %1891 = vmatpush1.bf16.msra.mxu0 0
    %1892 = vmatprep.subr.bf16.mxu0 0
    %1893 = vmatpush1.bf16.msra.mxu0 0
    %1894 = vmatprep.subr.bf16.mxu0 0
    %1895 = vmatpush1.bf16.msra.mxu0 0
    %1896 = vmatprep.subr.bf16.mxu0 0
    %1897 = vmatpush1.bf16.msra.mxu0 0
    %1898 = vmatprep.subr.bf16.mxu0 0
    %1899 = vmatpush1.bf16.msra.mxu0 0
    %1900 = vmatprep.subr.bf16.mxu0 0
    %1901 = vmatpush1.bf16.msra.mxu0 0
    %1902 = vmatprep.subr.bf16.mxu0 0
    %1903 = vmatpush1.bf16.msra.mxu0 0
    %1904 = vmatprep.subr.bf16.mxu0 0
    %1905 = vmatpush1.bf16.msra.mxu0 0
    %1906 = vmatprep.subr.bf16.mxu0 0
    %1907 = vmatpush1.bf16.msra.mxu0 0
    %1908 = vmatprep.mubr.bf16.mxu0 0
    %1909 = vmatmul.mubr.bf16.gmra.mrb[0].mxu0 %v1871
    %v1910 = vpop.f32.mrb[0].mxu0
    %v1911 = vadd.f32 0.0, %v1910
    %v1912 = vpop.f32.mrb[0].mxu0
    %v1913 = vpop.f32.mrb[0].mxu0
    %v1914 = vpop.f32.mrb[0].mxu0
    %1915 = vdwg.mxu0
    %1917 = vrot.lane.b32.xlu0 %v976, 64
    %v1918 = vpop.permute.xlu0 %1917
    %v1920 = vsel %vm1166, %v1768, 0
    %v1923 = vsel %vm1218, %v1918, 0
    %1925 = vmatprep.subr.bf16.mxu0 0
    %1926 = vmatpush1.bf16.msra.mxu0 %v1923
    %1927 = vmatprep.subr.bf16.mxu0 0
    %1928 = vmatpush1.bf16.msra.mxu0 0
    %1929 = vmatprep.subr.bf16.mxu0 0
    %1930 = vmatpush1.bf16.msra.mxu0 0
    %1931 = vmatprep.subr.bf16.mxu0 0
    %1932 = vmatpush1.bf16.msra.mxu0 0
    %1933 = vmatprep.subr.bf16.mxu0 0
    %1934 = vmatpush1.bf16.msra.mxu0 0
    %1935 = vmatprep.subr.bf16.mxu0 0
    %1936 = vmatpush1.bf16.msra.mxu0 0
    %1937 = vmatprep.subr.bf16.mxu0 0
    %1938 = vmatpush1.bf16.msra.mxu0 0
    %1939 = vmatprep.subr.bf16.mxu0 0
    %1940 = vmatpush1.bf16.msra.mxu0 0
    %1941 = vmatprep.subr.bf16.mxu0 0
    %1942 = vmatpush1.bf16.msra.mxu0 0
    %1943 = vmatprep.subr.bf16.mxu0 0
    %1944 = vmatpush1.bf16.msra.mxu0 0
    %1945 = vmatprep.subr.bf16.mxu0 0
    %1946 = vmatpush1.bf16.msra.mxu0 0
    %1947 = vmatprep.subr.bf16.mxu0 0
    %1948 = vmatpush1.bf16.msra.mxu0 0
    %1949 = vmatprep.subr.bf16.mxu0 0
    %1950 = vmatpush1.bf16.msra.mxu0 0
    %1951 = vmatprep.subr.bf16.mxu0 0
    %1952 = vmatpush1.bf16.msra.mxu0 0
    %1953 = vmatprep.subr.bf16.mxu0 0
    %1954 = vmatpush1.bf16.msra.mxu0 0
    %1955 = vmatprep.subr.bf16.mxu0 0
    %1956 = vmatpush1.bf16.msra.mxu0 0
    %1957 = vmatprep.mubr.bf16.mxu0 0
    %1958 = vmatmul.mubr.bf16.gmra.mrb[0].mxu0 %v1920
    %v1959 = vpop.f32.mrb[0].mxu0
    %v1960 = vadd.f32 0.0, %v1959
    %v1961 = vpop.f32.mrb[0].mxu0
    %v1962 = vpop.f32.mrb[0].mxu0
    %v1963 = vpop.f32.mrb[0].mxu0
    %1964 = vdwg.mxu0
    %v1965 = vpack.c.bf16 %v1862, %v1813
    %v1966 = vpack.c.bf16 %v1960, %v1911
    %v1975 = vunpack.c.l.b16 %v921
    %v1976 = vunpack.c.h.b16 %v921
    %v1977 = vunpack.c.l.b16 %v922
    %v1978 = vunpack.c.h.b16 %v922
    %v1979 = vunpack.c.l.b16 %v923
    %v1980 = vunpack.c.h.b16 %v923
    %v1981 = vunpack.c.l.b16 %v924
    %v1982 = vunpack.c.h.b16 %v924
    %v1983 = vunpack.c.l.b16 %v925
    %v1984 = vunpack.c.h.b16 %v925
    %v1985 = vunpack.c.l.b16 %v926
    %v1986 = vunpack.c.h.b16 %v926
    %v1987 = vunpack.c.l.b16 %v927
    %v1988 = vunpack.c.h.b16 %v927
    %v1989 = vunpack.c.l.b16 %v928
    %v1990 = vunpack.c.h.b16 %v928
    %v1991 = vpack.c.b16 %v1977, %v1975
    %v1992 = vpack.c.b16 %v1978, %v1976
    %v1993 = vpack.c.b16 %v1981, %v1979
    %v1994 = vpack.c.b16 %v1982, %v1980
    %v1995 = vpack.c.b16 %v1985, %v1983
    %v1996 = vpack.c.b16 %v1986, %v1984
    %v1997 = vpack.c.b16 %v1989, %v1987
    %v1998 = vpack.c.b16 %v1990, %v1988
    %v2008 = vsel %vm977, %v1965, 0
    %v2011 = vsel %vm977, %v1966, 0
    %2013 = vmatprep.subr.bf16.mxu0 %v1992
    %2014 = vmatpush1.bf16.msra.mxu0 %v1991
    %2015 = vmatprep.subr.bf16.mxu0 %v1994
    %2016 = vmatpush1.bf16.msra.mxu0 %v1993
    %2017 = vmatprep.subr.bf16.mxu0 %v1996
    %2018 = vmatpush1.bf16.msra.mxu0 %v1995
    %2019 = vmatprep.subr.bf16.mxu0 %v1998
    %2020 = vmatpush1.bf16.msra.mxu0 %v1997
    %2021 = vmatprep.subr.bf16.mxu0 0
    %2022 = vmatpush1.bf16.msra.mxu0 0
    %2023 = vmatprep.subr.bf16.mxu0 0
    %2024 = vmatpush1.bf16.msra.mxu0 0
    %2025 = vmatprep.subr.bf16.mxu0 0
    %2026 = vmatpush1.bf16.msra.mxu0 0
    %2027 = vmatprep.subr.bf16.mxu0 0
    %2028 = vmatpush1.bf16.msra.mxu0 0
    %2029 = vmatprep.subr.bf16.mxu0 0
    %2030 = vmatpush1.bf16.msra.mxu0 0
    %2031 = vmatprep.subr.bf16.mxu0 0
    %2032 = vmatpush1.bf16.msra.mxu0 0
    %2033 = vmatprep.subr.bf16.mxu0 0
    %2034 = vmatpush1.bf16.msra.mxu0 0
    %2035 = vmatprep.subr.bf16.mxu0 0
    %2036 = vmatpush1.bf16.msra.mxu0 0
    %2037 = vmatprep.subr.bf16.mxu0 0
    %2038 = vmatpush1.bf16.msra.mxu0 0
    %2039 = vmatprep.subr.bf16.mxu0 0
    %2040 = vmatpush1.bf16.msra.mxu0 0
    %2041 = vmatprep.subr.bf16.mxu0 0
    %2042 = vmatpush1.bf16.msra.mxu0 0
    %2043 = vmatprep.subr.bf16.mxu0 0
    %2044 = vmatpush1.bf16.msra.mxu0 0
    %2045 = vmatprep.mubr.bf16.mxu0 0
    %2046 = vmatmul.mubr.bf16.gmra.mrb[0].mxu0 %v2008
    %v2047 = vpop.f32.mrb[0].mxu0
    %v2048 = vadd.f32 0.0, %v2047
    %v2049 = vpop.f32.mrb[0].mxu0
    %v2050 = vadd.f32 0.0, %v2049
    %v2051 = vpop.f32.mrb[0].mxu0
    %v2052 = vadd.f32 0.0, %v2051
    %v2053 = vpop.f32.mrb[0].mxu0
    %v2054 = vadd.f32 0.0, %v2053
    %2055 = vmatprep.mubr.bf16.mxu0 0
    %2056 = vmatmul.mubr.bf16.gmra.mrb[0].mxu0 %v2011
    %v2057 = vpop.f32.mrb[0].mxu0
    %v2058 = vadd.f32 0.0, %v2057
    %v2059 = vpop.f32.mrb[0].mxu0
    %v2060 = vadd.f32 0.0, %v2059
    %v2061 = vpop.f32.mrb[0].mxu0
    %v2062 = vadd.f32 0.0, %v2061
    %v2063 = vpop.f32.mrb[0].mxu0
    %v2064 = vadd.f32 0.0, %v2063
    %2065 = vdwg.mxu0
    %v2066 = vadd.f32 %v1501, %v2048
    %v2067 = vadd.f32 %v1502, %v2050
    %v2068 = vadd.f32 %v1503, %v2052
    %v2069 = vadd.f32 %v1504, %v2054
    %v2070 = vadd.f32 %v1505, %v2058
    %v2071 = vadd.f32 %v1506, %v2060
    %v2072 = vadd.f32 %v1507, %v2062
    %v2073 = vadd.f32 %v1508, %v2064
    %v2074 = vpack.c.bf16 %v791, %v791
    %v2075 = vpack.c.bf16 %v795, %v795
    %v2076 = vpack.c.bf16 %v801, %v801
    %v2077 = vpack.c.bf16 %v805, %v805
    %v2078 = vpack.c.bf16 %v844, %v844
    %v2079 = vpack.c.bf16 %v848, %v848
    %v2080 = vpack.c.bf16 %v854, %v854
    %v2081 = vpack.c.bf16 %v858, %v858
    %v2082 = vpack.c.bf16 %v897, %v897
    %v2083 = vpack.c.bf16 %v901, %v901
    %v2084 = vpack.c.bf16 %v907, %v907
    %v2085 = vpack.c.bf16 %v911, %v911
    %v2087 = vsel %vm977, %v2074, 0
    %v2090 = vsel %vm977, %v2078, 0
    %2092 = vmatprep.subr.bf16.mxu0 0
    %2093 = vmatpush1.bf16.xpose.msra.mxu0 %v2090
    %2094 = vmatprep.subr.bf16.mxu0 0
    %2095 = vmatpush1.bf16.xpose.msra.mxu0 0
    %2096 = vmatprep.subr.bf16.mxu0 0
    %2097 = vmatpush1.bf16.xpose.msra.mxu0 0
    %2098 = vmatprep.subr.bf16.mxu0 0
    %2099 = vmatpush1.bf16.xpose.msra.mxu0 0
    %2100 = vmatprep.subr.bf16.mxu0 0
    %2101 = vmatpush1.bf16.xpose.msra.mxu0 0
    %2102 = vmatprep.subr.bf16.mxu0 0
    %2103 = vmatpush1.bf16.xpose.msra.mxu0 0
    %2104 = vmatprep.subr.bf16.mxu0 0
    %2105 = vmatpush1.bf16.xpose.msra.mxu0 0
    %2106 = vmatprep.subr.bf16.mxu0 0
    %2107 = vmatpush1.bf16.xpose.msra.mxu0 0
    %2108 = vmatprep.subr.bf16.mxu0 0
    %2109 = vmatpush1.bf16.xpose.msra.mxu0 0
    %2110 = vmatprep.subr.bf16.mxu0 0
    %2111 = vmatpush1.bf16.xpose.msra.mxu0 0
    %2112 = vmatprep.subr.bf16.mxu0 0
    %2113 = vmatpush1.bf16.xpose.msra.mxu0 0
    %2114 = vmatprep.subr.bf16.mxu0 0
    %2115 = vmatpush1.bf16.xpose.msra.mxu0 0
    %2116 = vmatprep.subr.bf16.mxu0 0
    %2117 = vmatpush1.bf16.xpose.msra.mxu0 0
    %2118 = vmatprep.subr.bf16.mxu0 0
    %2119 = vmatpush1.bf16.xpose.msra.mxu0 0
    %2120 = vmatprep.subr.bf16.mxu0 0
    %2121 = vmatpush1.bf16.xpose.msra.mxu0 0
    %2122 = vmatprep.subr.bf16.mxu0 0
    %2123 = vmatpush1.bf16.xpose.msra.mxu0 0
    %2124 = vmatprep.mubr.bf16.mxu0 0
    %2125 = vmatmul.mubr.bf16.gmra.mrb[0].mxu0 %v2087
    %v2126 = vpop.f32.mrb[0].mxu0
    %v2127 = vadd.f32 0.0, %v2126
    %v2128 = vpop.f32.mrb[0].mxu0
    %v2129 = vpop.f32.mrb[0].mxu0
    %v2130 = vpop.f32.mrb[0].mxu0
    %2131 = vdwg.mxu0
    %v2133 = vsel %vm977, %v2075, 0
    %v2136 = vsel %vm977, %v2079, 0
    %2138 = vmatprep.subr.bf16.mxu0 0
    %2139 = vmatpush1.bf16.xpose.msra.mxu0 %v2136
    %2140 = vmatprep.subr.bf16.mxu0 0
    %2141 = vmatpush1.bf16.xpose.msra.mxu0 0
    %2142 = vmatprep.subr.bf16.mxu0 0
    %2143 = vmatpush1.bf16.xpose.msra.mxu0 0
    %2144 = vmatprep.subr.bf16.mxu0 0
    %2145 = vmatpush1.bf16.xpose.msra.mxu0 0
    %2146 = vmatprep.subr.bf16.mxu0 0
    %2147 = vmatpush1.bf16.xpose.msra.mxu0 0
    %2148 = vmatprep.subr.bf16.mxu0 0
    %2149 = vmatpush1.bf16.xpose.msra.mxu0 0
    %2150 = vmatprep.subr.bf16.mxu0 0
    %2151 = vmatpush1.bf16.xpose.msra.mxu0 0
    %2152 = vmatprep.subr.bf16.mxu0 0
    %2153 = vmatpush1.bf16.xpose.msra.mxu0 0
    %2154 = vmatprep.subr.bf16.mxu0 0
    %2155 = vmatpush1.bf16.xpose.msra.mxu0 0
    %2156 = vmatprep.subr.bf16.mxu0 0
    %2157 = vmatpush1.bf16.xpose.msra.mxu0 0
    %2158 = vmatprep.subr.bf16.mxu0 0
    %2159 = vmatpush1.bf16.xpose.msra.mxu0 0
    %2160 = vmatprep.subr.bf16.mxu0 0
    %2161 = vmatpush1.bf16.xpose.msra.mxu0 0
    %2162 = vmatprep.subr.bf16.mxu0 0
    %2163 = vmatpush1.bf16.xpose.msra.mxu0 0
    %2164 = vmatprep.subr.bf16.mxu0 0
    %2165 = vmatpush1.bf16.xpose.msra.mxu0 0
    %2166 = vmatprep.subr.bf16.mxu0 0
    %2167 = vmatpush1.bf16.xpose.msra.mxu0 0
    %2168 = vmatprep.subr.bf16.mxu0 0
    %2169 = vmatpush1.bf16.xpose.msra.mxu0 0
    %2170 = vmatprep.mubr.bf16.mxu0 0
    %2171 = vmatmul.mubr.bf16.gmra.mrb[0].mxu0 %v2133
    %v2172 = vpop.f32.mrb[0].mxu0
    %v2173 = vadd.f32 0.0, %v2172
    %v2174 = vpop.f32.mrb[0].mxu0
    %v2175 = vpop.f32.mrb[0].mxu0
    %v2176 = vpop.f32.mrb[0].mxu0
    %2177 = vdwg.mxu0
    %v2179 = vsel %vm977, %v2076, 0
    %v2182 = vsel %vm977, %v2080, 0
    %2184 = vmatprep.subr.bf16.mxu0 0
    %2185 = vmatpush1.bf16.xpose.msra.mxu0 %v2182
    %2186 = vmatprep.subr.bf16.mxu0 0
    %2187 = vmatpush1.bf16.xpose.msra.mxu0 0
    %2188 = vmatprep.subr.bf16.mxu0 0
    %2189 = vmatpush1.bf16.xpose.msra.mxu0 0
    %2190 = vmatprep.subr.bf16.mxu0 0
    %2191 = vmatpush1.bf16.xpose.msra.mxu0 0
    %2192 = vmatprep.subr.bf16.mxu0 0
    %2193 = vmatpush1.bf16.xpose.msra.mxu0 0
    %2194 = vmatprep.subr.bf16.mxu0 0
    %2195 = vmatpush1.bf16.xpose.msra.mxu0 0
    %2196 = vmatprep.subr.bf16.mxu0 0
    %2197 = vmatpush1.bf16.xpose.msra.mxu0 0
    %2198 = vmatprep.subr.bf16.mxu0 0
    %2199 = vmatpush1.bf16.xpose.msra.mxu0 0
    %2200 = vmatprep.subr.bf16.mxu0 0
    %2201 = vmatpush1.bf16.xpose.msra.mxu0 0
    %2202 = vmatprep.subr.bf16.mxu0 0
    %2203 = vmatpush1.bf16.xpose.msra.mxu0 0
    %2204 = vmatprep.subr.bf16.mxu0 0
    %2205 = vmatpush1.bf16.xpose.msra.mxu0 0
    %2206 = vmatprep.subr.bf16.mxu0 0
    %2207 = vmatpush1.bf16.xpose.msra.mxu0 0
    %2208 = vmatprep.subr.bf16.mxu0 0
    %2209 = vmatpush1.bf16.xpose.msra.mxu0 0
    %2210 = vmatprep.subr.bf16.mxu0 0
    %2211 = vmatpush1.bf16.xpose.msra.mxu0 0
    %2212 = vmatprep.subr.bf16.mxu0 0
    %2213 = vmatpush1.bf16.xpose.msra.mxu0 0
    %2214 = vmatprep.subr.bf16.mxu0 0
    %2215 = vmatpush1.bf16.xpose.msra.mxu0 0
    %2216 = vmatprep.mubr.bf16.mxu0 0
    %2217 = vmatmul.mubr.bf16.gmra.mrb[0].mxu0 %v2179
    %v2218 = vpop.f32.mrb[0].mxu0
    %v2219 = vadd.f32 0.0, %v2218
    %v2220 = vpop.f32.mrb[0].mxu0
    %v2221 = vpop.f32.mrb[0].mxu0
    %v2222 = vpop.f32.mrb[0].mxu0
    %2223 = vdwg.mxu0
    %v2225 = vsel %vm977, %v2077, 0
    %v2228 = vsel %vm977, %v2081, 0
    %2230 = vmatprep.subr.bf16.mxu0 0
    %2231 = vmatpush1.bf16.xpose.msra.mxu0 %v2228
    %2232 = vmatprep.subr.bf16.mxu0 0
    %2233 = vmatpush1.bf16.xpose.msra.mxu0 0
    %2234 = vmatprep.subr.bf16.mxu0 0
    %2235 = vmatpush1.bf16.xpose.msra.mxu0 0
    %2236 = vmatprep.subr.bf16.mxu0 0
    %2237 = vmatpush1.bf16.xpose.msra.mxu0 0
    %2238 = vmatprep.subr.bf16.mxu0 0
    %2239 = vmatpush1.bf16.xpose.msra.mxu0 0
    %2240 = vmatprep.subr.bf16.mxu0 0
    %2241 = vmatpush1.bf16.xpose.msra.mxu0 0
    %2242 = vmatprep.subr.bf16.mxu0 0
    %2243 = vmatpush1.bf16.xpose.msra.mxu0 0
    %2244 = vmatprep.subr.bf16.mxu0 0
    %2245 = vmatpush1.bf16.xpose.msra.mxu0 0
    %2246 = vmatprep.subr.bf16.mxu0 0
    %2247 = vmatpush1.bf16.xpose.msra.mxu0 0
    %2248 = vmatprep.subr.bf16.mxu0 0
    %2249 = vmatpush1.bf16.xpose.msra.mxu0 0
    %2250 = vmatprep.subr.bf16.mxu0 0
    %2251 = vmatpush1.bf16.xpose.msra.mxu0 0
    %2252 = vmatprep.subr.bf16.mxu0 0
    %2253 = vmatpush1.bf16.xpose.msra.mxu0 0
    %2254 = vmatprep.subr.bf16.mxu0 0
    %2255 = vmatpush1.bf16.xpose.msra.mxu0 0
    %2256 = vmatprep.subr.bf16.mxu0 0
    %2257 = vmatpush1.bf16.xpose.msra.mxu0 0
    %2258 = vmatprep.subr.bf16.mxu0 0
    %2259 = vmatpush1.bf16.xpose.msra.mxu0 0
    %2260 = vmatprep.subr.bf16.mxu0 0
    %2261 = vmatpush1.bf16.xpose.msra.mxu0 0
    %2262 = vmatprep.mubr.bf16.mxu0 0
    %2263 = vmatmul.mubr.bf16.gmra.mrb[0].mxu0 %v2225
    %v2264 = vpop.f32.mrb[0].mxu0
    %v2265 = vadd.f32 0.0, %v2264
    %v2266 = vpop.f32.mrb[0].mxu0
    %v2267 = vpop.f32.mrb[0].mxu0
    %v2268 = vpop.f32.mrb[0].mxu0
    %2269 = vdwg.mxu0
    %v2270 = vmul.f32 %v2127, 0.125
    %v2271 = vmul.f32 %v2173, 0.125
    %v2272 = vmul.f32 %v2219, 0.125
    %v2273 = vmul.f32 %v2265, 0.125
    %v2274 = vsel %vm1166, %v2270, -inf
    %2275 = vmax.xlane.f32.xlu0 %v2274
    %v2276 = vpop.xlane.xlu0 %2275
    %v2277 = vsel %vm1166, %v2271, -inf
    %2278 = vmax.xlane.f32.xlu0 %v2277
    %v2279 = vpop.xlane.xlu0 %2278
    %v2280 = vsel %vm1166, %v2272, -inf
    %2281 = vmax.xlane.f32.xlu0 %v2280
    %v2282 = vpop.xlane.xlu0 %2281
    %v2283 = vsel %vm1166, %v2273, -inf
    %2284 = vmax.xlane.f32.xlu0 %v2283
    %v2285 = vpop.xlane.xlu0 %2284
    %v2286 = vsub.f32 %v2270, %v2276
    %v2287 = vsub.f32 %v2271, %v2279
    %v2288 = vsub.f32 %v2272, %v2282
    %v2289 = vsub.f32 %v2273, %v2285
    %v2290 = vmul.f32 %v2286, 1.442695
    %v2291 = vpow.pop %v2290
    %v2292 = vmul.f32 %v2287, 1.442695
    %v2293 = vpow.pop %v2292
    %v2294 = vmul.f32 %v2288, 1.442695
    %v2295 = vpow.pop %v2294
    %v2296 = vmul.f32 %v2289, 1.442695
    %v2297 = vpow.pop %v2296
    %v2298 = vsel %vm1166, %v2291, 0.0
    %2299 = vadd.xlane.f32.xlu0 %v2298
    %v2300 = vpop.xlane.xlu0 %2299
    %v2301 = vsel %vm1166, %v2293, 0.0
    %2302 = vadd.xlane.f32.xlu0 %v2301
    %v2303 = vpop.xlane.xlu0 %2302
    %v2304 = vsel %vm1166, %v2295, 0.0
    %2305 = vadd.xlane.f32.xlu0 %v2304
    %v2306 = vpop.xlane.xlu0 %2305
    %v2307 = vsel %vm1166, %v2297, 0.0
    %2308 = vadd.xlane.f32.xlu0 %v2307
    %v2309 = vpop.xlane.xlu0 %2308
    %v2310 = vrcp.pop %v2300
    %v2311 = vrcp.pop %v2303
    %v2312 = vrcp.pop %v2306
    %v2313 = vrcp.pop %v2309
    %v2314 = vmul.f32 %v2291, %v2310
    %v2315 = vmul.f32 %v2293, %v2311
    %v2316 = vmul.f32 %v2295, %v2312
    %v2317 = vmul.f32 %v2297, %v2313
    %v2318 = vpack.c.bf16 %v2314, %v2314
    %v2319 = vpack.c.bf16 %v2315, %v2315
    %v2320 = vpack.c.bf16 %v2316, %v2316
    %v2321 = vpack.c.bf16 %v2317, %v2317
    %v2323 = vsel %vm1166, %v2318, 0
    %v2326 = vsel %vm1218, %v2082, 0
    %2328 = vmatprep.subr.bf16.mxu0 0
    %2329 = vmatpush1.bf16.msra.mxu0 %v2326
    %2330 = vmatprep.subr.bf16.mxu0 0
    %2331 = vmatpush1.bf16.msra.mxu0 0
    %2332 = vmatprep.subr.bf16.mxu0 0
    %2333 = vmatpush1.bf16.msra.mxu0 0
    %2334 = vmatprep.subr.bf16.mxu0 0
    %2335 = vmatpush1.bf16.msra.mxu0 0
    %2336 = vmatprep.subr.bf16.mxu0 0
    %2337 = vmatpush1.bf16.msra.mxu0 0
    %2338 = vmatprep.subr.bf16.mxu0 0
    %2339 = vmatpush1.bf16.msra.mxu0 0
    %2340 = vmatprep.subr.bf16.mxu0 0
    %2341 = vmatpush1.bf16.msra.mxu0 0
    %2342 = vmatprep.subr.bf16.mxu0 0
    %2343 = vmatpush1.bf16.msra.mxu0 0
    %2344 = vmatprep.subr.bf16.mxu0 0
    %2345 = vmatpush1.bf16.msra.mxu0 0
    %2346 = vmatprep.subr.bf16.mxu0 0
    %2347 = vmatpush1.bf16.msra.mxu0 0
    %2348 = vmatprep.subr.bf16.mxu0 0
    %2349 = vmatpush1.bf16.msra.mxu0 0
    %2350 = vmatprep.subr.bf16.mxu0 0
    %2351 = vmatpush1.bf16.msra.mxu0 0
    %2352 = vmatprep.subr.bf16.mxu0 0
    %2353 = vmatpush1.bf16.msra.mxu0 0
    %2354 = vmatprep.subr.bf16.mxu0 0
    %2355 = vmatpush1.bf16.msra.mxu0 0
    %2356 = vmatprep.subr.bf16.mxu0 0
    %2357 = vmatpush1.bf16.msra.mxu0 0
    %2358 = vmatprep.subr.bf16.mxu0 0
    %2359 = vmatpush1.bf16.msra.mxu0 0
    %2360 = vmatprep.mubr.bf16.mxu0 0
    %2361 = vmatmul.mubr.bf16.gmra.mrb[0].mxu0 %v2323
    %v2362 = vpop.f32.mrb[0].mxu0
    %v2363 = vadd.f32 0.0, %v2362
    %v2364 = vpop.f32.mrb[0].mxu0
    %v2365 = vpop.f32.mrb[0].mxu0
    %v2366 = vpop.f32.mrb[0].mxu0
    %2367 = vdwg.mxu0
    %v2369 = vsel %vm1166, %v2319, 0
    %v2372 = vsel %vm1218, %v2083, 0
    %2374 = vmatprep.subr.bf16.mxu0 0
    %2375 = vmatpush1.bf16.msra.mxu0 %v2372
    %2376 = vmatprep.subr.bf16.mxu0 0
    %2377 = vmatpush1.bf16.msra.mxu0 0
    %2378 = vmatprep.subr.bf16.mxu0 0
    %2379 = vmatpush1.bf16.msra.mxu0 0
    %2380 = vmatprep.subr.bf16.mxu0 0
    %2381 = vmatpush1.bf16.msra.mxu0 0
    %2382 = vmatprep.subr.bf16.mxu0 0
    %2383 = vmatpush1.bf16.msra.mxu0 0
    %2384 = vmatprep.subr.bf16.mxu0 0
    %2385 = vmatpush1.bf16.msra.mxu0 0
    %2386 = vmatprep.subr.bf16.mxu0 0
    %2387 = vmatpush1.bf16.msra.mxu0 0
    %2388 = vmatprep.subr.bf16.mxu0 0
    %2389 = vmatpush1.bf16.msra.mxu0 0
    %2390 = vmatprep.subr.bf16.mxu0 0
    %2391 = vmatpush1.bf16.msra.mxu0 0
    %2392 = vmatprep.subr.bf16.mxu0 0
    %2393 = vmatpush1.bf16.msra.mxu0 0
    %2394 = vmatprep.subr.bf16.mxu0 0
    %2395 = vmatpush1.bf16.msra.mxu0 0
    %2396 = vmatprep.subr.bf16.mxu0 0
    %2397 = vmatpush1.bf16.msra.mxu0 0
    %2398 = vmatprep.subr.bf16.mxu0 0
    %2399 = vmatpush1.bf16.msra.mxu0 0
    %2400 = vmatprep.subr.bf16.mxu0 0
    %2401 = vmatpush1.bf16.msra.mxu0 0
    %2402 = vmatprep.subr.bf16.mxu0 0
    %2403 = vmatpush1.bf16.msra.mxu0 0
    %2404 = vmatprep.subr.bf16.mxu0 0
    %2405 = vmatpush1.bf16.msra.mxu0 0
    %2406 = vmatprep.mubr.bf16.mxu0 0
    %2407 = vmatmul.mubr.bf16.gmra.mrb[0].mxu0 %v2369
    %v2408 = vpop.f32.mrb[0].mxu0
    %v2409 = vadd.f32 0.0, %v2408
    %v2410 = vpop.f32.mrb[0].mxu0
    %v2411 = vpop.f32.mrb[0].mxu0
    %v2412 = vpop.f32.mrb[0].mxu0
    %2413 = vdwg.mxu0
    %v2415 = vsel %vm1166, %v2320, 0
    %v2418 = vsel %vm1218, %v2084, 0
    %2420 = vmatprep.subr.bf16.mxu0 0
    %2421 = vmatpush1.bf16.msra.mxu0 %v2418
    %2422 = vmatprep.subr.bf16.mxu0 0
    %2423 = vmatpush1.bf16.msra.mxu0 0
    %2424 = vmatprep.subr.bf16.mxu0 0
    %2425 = vmatpush1.bf16.msra.mxu0 0
    %2426 = vmatprep.subr.bf16.mxu0 0
    %2427 = vmatpush1.bf16.msra.mxu0 0
    %2428 = vmatprep.subr.bf16.mxu0 0
    %2429 = vmatpush1.bf16.msra.mxu0 0
    %2430 = vmatprep.subr.bf16.mxu0 0
    %2431 = vmatpush1.bf16.msra.mxu0 0
    %2432 = vmatprep.subr.bf16.mxu0 0
    %2433 = vmatpush1.bf16.msra.mxu0 0
    %2434 = vmatprep.subr.bf16.mxu0 0
    %2435 = vmatpush1.bf16.msra.mxu0 0
    %2436 = vmatprep.subr.bf16.mxu0 0
    %2437 = vmatpush1.bf16.msra.mxu0 0
    %2438 = vmatprep.subr.bf16.mxu0 0
    %2439 = vmatpush1.bf16.msra.mxu0 0
    %2440 = vmatprep.subr.bf16.mxu0 0
    %2441 = vmatpush1.bf16.msra.mxu0 0
    %2442 = vmatprep.subr.bf16.mxu0 0
    %2443 = vmatpush1.bf16.msra.mxu0 0
    %2444 = vmatprep.subr.bf16.mxu0 0
    %2445 = vmatpush1.bf16.msra.mxu0 0
    %2446 = vmatprep.subr.bf16.mxu0 0
    %2447 = vmatpush1.bf16.msra.mxu0 0
    %2448 = vmatprep.subr.bf16.mxu0 0
    %2449 = vmatpush1.bf16.msra.mxu0 0
    %2450 = vmatprep.subr.bf16.mxu0 0
    %2451 = vmatpush1.bf16.msra.mxu0 0
    %2452 = vmatprep.mubr.bf16.mxu0 0
    %2453 = vmatmul.mubr.bf16.gmra.mrb[0].mxu0 %v2415
    %v2454 = vpop.f32.mrb[0].mxu0
    %v2455 = vadd.f32 0.0, %v2454
    %v2456 = vpop.f32.mrb[0].mxu0
    %v2457 = vpop.f32.mrb[0].mxu0
    %v2458 = vpop.f32.mrb[0].mxu0
    %2459 = vdwg.mxu0
    %v2461 = vsel %vm1166, %v2321, 0
    %v2464 = vsel %vm1218, %v2085, 0
    %2466 = vmatprep.subr.bf16.mxu0 0
    %2467 = vmatpush1.bf16.msra.mxu0 %v2464
    %2468 = vmatprep.subr.bf16.mxu0 0
    %2469 = vmatpush1.bf16.msra.mxu0 0
    %2470 = vmatprep.subr.bf16.mxu0 0
    %2471 = vmatpush1.bf16.msra.mxu0 0
    %2472 = vmatprep.subr.bf16.mxu0 0
    %2473 = vmatpush1.bf16.msra.mxu0 0
    %2474 = vmatprep.subr.bf16.mxu0 0
    %2475 = vmatpush1.bf16.msra.mxu0 0
    %2476 = vmatprep.subr.bf16.mxu0 0
    %2477 = vmatpush1.bf16.msra.mxu0 0
    %2478 = vmatprep.subr.bf16.mxu0 0
    %2479 = vmatpush1.bf16.msra.mxu0 0
    %2480 = vmatprep.subr.bf16.mxu0 0
    %2481 = vmatpush1.bf16.msra.mxu0 0
    %2482 = vmatprep.subr.bf16.mxu0 0
    %2483 = vmatpush1.bf16.msra.mxu0 0
    %2484 = vmatprep.subr.bf16.mxu0 0
    %2485 = vmatpush1.bf16.msra.mxu0 0
    %2486 = vmatprep.subr.bf16.mxu0 0
    %2487 = vmatpush1.bf16.msra.mxu0 0
    %2488 = vmatprep.subr.bf16.mxu0 0
    %2489 = vmatpush1.bf16.msra.mxu0 0
    %2490 = vmatprep.subr.bf16.mxu0 0
    %2491 = vmatpush1.bf16.msra.mxu0 0
    %2492 = vmatprep.subr.bf16.mxu0 0
    %2493 = vmatpush1.bf16.msra.mxu0 0
    %2494 = vmatprep.subr.bf16.mxu0 0
    %2495 = vmatpush1.bf16.msra.mxu0 0
    %2496 = vmatprep.subr.bf16.mxu0 0
    %2497 = vmatpush1.bf16.msra.mxu0 0
    %2498 = vmatprep.mubr.bf16.mxu0 0
    %2499 = vmatmul.mubr.bf16.gmra.mrb[0].mxu0 %v2461
    %v2500 = vpop.f32.mrb[0].mxu0
    %v2501 = vadd.f32 0.0, %v2500
    %v2502 = vpop.f32.mrb[0].mxu0
    %v2503 = vpop.f32.mrb[0].mxu0
    %v2504 = vpop.f32.mrb[0].mxu0
    %2505 = vdwg.mxu0
    %v2506 = vpack.c.bf16 %v2409, %v2363
    %v2507 = vpack.c.bf16 %v2501, %v2455
    %v2516 = vunpack.c.l.b16 %v929
    %v2517 = vunpack.c.h.b16 %v929
    %v2518 = vunpack.c.l.b16 %v930
    %v2519 = vunpack.c.h.b16 %v930
    %v2520 = vunpack.c.l.b16 %v931
    %v2521 = vunpack.c.h.b16 %v931
    %v2522 = vunpack.c.l.b16 %v932
    %v2523 = vunpack.c.h.b16 %v932
    %v2524 = vunpack.c.l.b16 %v933
    %v2525 = vunpack.c.h.b16 %v933
    %v2526 = vunpack.c.l.b16 %v934
    %v2527 = vunpack.c.h.b16 %v934
    %v2528 = vunpack.c.l.b16 %v935
    %v2529 = vunpack.c.h.b16 %v935
    %v2530 = vunpack.c.l.b16 %v936
    %v2531 = vunpack.c.h.b16 %v936
    %v2532 = vpack.c.b16 %v2518, %v2516
    %v2533 = vpack.c.b16 %v2519, %v2517
    %v2534 = vpack.c.b16 %v2522, %v2520
    %v2535 = vpack.c.b16 %v2523, %v2521
    %v2536 = vpack.c.b16 %v2526, %v2524
    %v2537 = vpack.c.b16 %v2527, %v2525
    %v2538 = vpack.c.b16 %v2530, %v2528
    %v2539 = vpack.c.b16 %v2531, %v2529
    %v2549 = vsel %vm977, %v2506, 0
    %v2552 = vsel %vm977, %v2507, 0
    %2554 = vmatprep.subr.bf16.mxu0 %v2533
    %2555 = vmatpush1.bf16.msra.mxu0 %v2532
    %2556 = vmatprep.subr.bf16.mxu0 %v2535
    %2557 = vmatpush1.bf16.msra.mxu0 %v2534
    %2558 = vmatprep.subr.bf16.mxu0 %v2537
    %2559 = vmatpush1.bf16.msra.mxu0 %v2536
    %2560 = vmatprep.subr.bf16.mxu0 %v2539
    %2561 = vmatpush1.bf16.msra.mxu0 %v2538
    %2562 = vmatprep.subr.bf16.mxu0 0
    %2563 = vmatpush1.bf16.msra.mxu0 0
    %2564 = vmatprep.subr.bf16.mxu0 0
    %2565 = vmatpush1.bf16.msra.mxu0 0
    %2566 = vmatprep.subr.bf16.mxu0 0
    %2567 = vmatpush1.bf16.msra.mxu0 0
    %2568 = vmatprep.subr.bf16.mxu0 0
    %2569 = vmatpush1.bf16.msra.mxu0 0
    %2570 = vmatprep.subr.bf16.mxu0 0
    %2571 = vmatpush1.bf16.msra.mxu0 0
    %2572 = vmatprep.subr.bf16.mxu0 0
    %2573 = vmatpush1.bf16.msra.mxu0 0
    %2574 = vmatprep.subr.bf16.mxu0 0
    %2575 = vmatpush1.bf16.msra.mxu0 0
    %2576 = vmatprep.subr.bf16.mxu0 0
    %2577 = vmatpush1.bf16.msra.mxu0 0
    %2578 = vmatprep.subr.bf16.mxu0 0
    %2579 = vmatpush1.bf16.msra.mxu0 0
    %2580 = vmatprep.subr.bf16.mxu0 0
    %2581 = vmatpush1.bf16.msra.mxu0 0
    %2582 = vmatprep.subr.bf16.mxu0 0
    %2583 = vmatpush1.bf16.msra.mxu0 0
    %2584 = vmatprep.subr.bf16.mxu0 0
    %2585 = vmatpush1.bf16.msra.mxu0 0
    %2586 = vmatprep.mubr.bf16.mxu0 0
    %2587 = vmatmul.mubr.bf16.gmra.mrb[0].mxu0 %v2549
    %v2588 = vpop.f32.mrb[0].mxu0
    %v2589 = vadd.f32 0.0, %v2588
    %v2590 = vpop.f32.mrb[0].mxu0
    %v2591 = vadd.f32 0.0, %v2590
    %v2592 = vpop.f32.mrb[0].mxu0
    %v2593 = vadd.f32 0.0, %v2592
    %v2594 = vpop.f32.mrb[0].mxu0
    %v2595 = vadd.f32 0.0, %v2594
    %2596 = vmatprep.mubr.bf16.mxu0 0
    %2597 = vmatmul.mubr.bf16.gmra.mrb[0].mxu0 %v2552
    %v2598 = vpop.f32.mrb[0].mxu0
    %v2599 = vadd.f32 0.0, %v2598
    %v2600 = vpop.f32.mrb[0].mxu0
    %v2601 = vadd.f32 0.0, %v2600
    %v2602 = vpop.f32.mrb[0].mxu0
    %v2603 = vadd.f32 0.0, %v2602
    %v2604 = vpop.f32.mrb[0].mxu0
    %v2605 = vadd.f32 0.0, %v2604
    %2606 = vdwg.mxu0
    %v2607 = vadd.f32 %v2066, %v2589
    %v2608 = vadd.f32 %v2067, %v2591
    %v2609 = vadd.f32 %v2068, %v2593
    %v2610 = vadd.f32 %v2069, %v2595
    %v2611 = vadd.f32 %v2070, %v2599
    %v2612 = vadd.f32 %v2071, %v2601
    %v2613 = vadd.f32 %v2072, %v2603
    %v2614 = vadd.f32 %v2073, %v2605
    %2616 = vrot.lane.b32.xlu0 %v2074, 64
    %v2617 = vpop.permute.xlu0 %2616
    %2619 = vrot.lane.b32.xlu0 %v2078, 64
    %v2620 = vpop.permute.xlu0 %2619
    %v2622 = vsel %vm977, %v2617, 0
    %v2625 = vsel %vm977, %v2620, 0
    %2627 = vmatprep.subr.bf16.mxu0 0
    %2628 = vmatpush1.bf16.xpose.msra.mxu0 %v2625
    %2629 = vmatprep.subr.bf16.mxu0 0
    %2630 = vmatpush1.bf16.xpose.msra.mxu0 0
    %2631 = vmatprep.subr.bf16.mxu0 0
    %2632 = vmatpush1.bf16.xpose.msra.mxu0 0
    %2633 = vmatprep.subr.bf16.mxu0 0
    %2634 = vmatpush1.bf16.xpose.msra.mxu0 0
    %2635 = vmatprep.subr.bf16.mxu0 0
    %2636 = vmatpush1.bf16.xpose.msra.mxu0 0
    %2637 = vmatprep.subr.bf16.mxu0 0
    %2638 = vmatpush1.bf16.xpose.msra.mxu0 0
    %2639 = vmatprep.subr.bf16.mxu0 0
    %2640 = vmatpush1.bf16.xpose.msra.mxu0 0
    %2641 = vmatprep.subr.bf16.mxu0 0
    %2642 = vmatpush1.bf16.xpose.msra.mxu0 0
    %2643 = vmatprep.subr.bf16.mxu0 0
    %2644 = vmatpush1.bf16.xpose.msra.mxu0 0
    %2645 = vmatprep.subr.bf16.mxu0 0
    %2646 = vmatpush1.bf16.xpose.msra.mxu0 0
    %2647 = vmatprep.subr.bf16.mxu0 0
    %2648 = vmatpush1.bf16.xpose.msra.mxu0 0
    %2649 = vmatprep.subr.bf16.mxu0 0
    %2650 = vmatpush1.bf16.xpose.msra.mxu0 0
    %2651 = vmatprep.subr.bf16.mxu0 0
    %2652 = vmatpush1.bf16.xpose.msra.mxu0 0
    %2653 = vmatprep.subr.bf16.mxu0 0
    %2654 = vmatpush1.bf16.xpose.msra.mxu0 0
    %2655 = vmatprep.subr.bf16.mxu0 0
    %2656 = vmatpush1.bf16.xpose.msra.mxu0 0
    %2657 = vmatprep.subr.bf16.mxu0 0
    %2658 = vmatpush1.bf16.xpose.msra.mxu0 0
    %2659 = vmatprep.mubr.bf16.mxu0 0
    %2660 = vmatmul.mubr.bf16.gmra.mrb[0].mxu0 %v2622
    %v2661 = vpop.f32.mrb[0].mxu0
    %v2662 = vadd.f32 0.0, %v2661
    %v2663 = vpop.f32.mrb[0].mxu0
    %v2664 = vpop.f32.mrb[0].mxu0
    %v2665 = vpop.f32.mrb[0].mxu0
    %2666 = vdwg.mxu0
    %2668 = vrot.lane.b32.xlu0 %v2075, 64
    %v2669 = vpop.permute.xlu0 %2668
    %2671 = vrot.lane.b32.xlu0 %v2079, 64
    %v2672 = vpop.permute.xlu0 %2671
    %v2674 = vsel %vm977, %v2669, 0
    %v2677 = vsel %vm977, %v2672, 0
    %2679 = vmatprep.subr.bf16.mxu0 0
    %2680 = vmatpush1.bf16.xpose.msra.mxu0 %v2677
    %2681 = vmatprep.subr.bf16.mxu0 0
    %2682 = vmatpush1.bf16.xpose.msra.mxu0 0
    %2683 = vmatprep.subr.bf16.mxu0 0
    %2684 = vmatpush1.bf16.xpose.msra.mxu0 0
    %2685 = vmatprep.subr.bf16.mxu0 0
    %2686 = vmatpush1.bf16.xpose.msra.mxu0 0
    %2687 = vmatprep.subr.bf16.mxu0 0
    %2688 = vmatpush1.bf16.xpose.msra.mxu0 0
    %2689 = vmatprep.subr.bf16.mxu0 0
    %2690 = vmatpush1.bf16.xpose.msra.mxu0 0
    %2691 = vmatprep.subr.bf16.mxu0 0
    %2692 = vmatpush1.bf16.xpose.msra.mxu0 0
    %2693 = vmatprep.subr.bf16.mxu0 0
    %2694 = vmatpush1.bf16.xpose.msra.mxu0 0
    %2695 = vmatprep.subr.bf16.mxu0 0
    %2696 = vmatpush1.bf16.xpose.msra.mxu0 0
    %2697 = vmatprep.subr.bf16.mxu0 0
    %2698 = vmatpush1.bf16.xpose.msra.mxu0 0
    %2699 = vmatprep.subr.bf16.mxu0 0
    %2700 = vmatpush1.bf16.xpose.msra.mxu0 0
    %2701 = vmatprep.subr.bf16.mxu0 0
    %2702 = vmatpush1.bf16.xpose.msra.mxu0 0
    %2703 = vmatprep.subr.bf16.mxu0 0
    %2704 = vmatpush1.bf16.xpose.msra.mxu0 0
    %2705 = vmatprep.subr.bf16.mxu0 0
    %2706 = vmatpush1.bf16.xpose.msra.mxu0 0
    %2707 = vmatprep.subr.bf16.mxu0 0
    %2708 = vmatpush1.bf16.xpose.msra.mxu0 0
    %2709 = vmatprep.subr.bf16.mxu0 0
    %2710 = vmatpush1.bf16.xpose.msra.mxu0 0
    %2711 = vmatprep.mubr.bf16.mxu0 0
    %2712 = vmatmul.mubr.bf16.gmra.mrb[0].mxu0 %v2674
    %v2713 = vpop.f32.mrb[0].mxu0
    %v2714 = vadd.f32 0.0, %v2713
    %v2715 = vpop.f32.mrb[0].mxu0
    %v2716 = vpop.f32.mrb[0].mxu0
    %v2717 = vpop.f32.mrb[0].mxu0
    %2718 = vdwg.mxu0
    %2720 = vrot.lane.b32.xlu0 %v2076, 64
    %v2721 = vpop.permute.xlu0 %2720
    %2723 = vrot.lane.b32.xlu0 %v2080, 64
    %v2724 = vpop.permute.xlu0 %2723
    %v2726 = vsel %vm977, %v2721, 0
    %v2729 = vsel %vm977, %v2724, 0
    %2731 = vmatprep.subr.bf16.mxu0 0
    %2732 = vmatpush1.bf16.xpose.msra.mxu0 %v2729
    %2733 = vmatprep.subr.bf16.mxu0 0
    %2734 = vmatpush1.bf16.xpose.msra.mxu0 0
    %2735 = vmatprep.subr.bf16.mxu0 0
    %2736 = vmatpush1.bf16.xpose.msra.mxu0 0
    %2737 = vmatprep.subr.bf16.mxu0 0
    %2738 = vmatpush1.bf16.xpose.msra.mxu0 0
    %2739 = vmatprep.subr.bf16.mxu0 0
    %2740 = vmatpush1.bf16.xpose.msra.mxu0 0
    %2741 = vmatprep.subr.bf16.mxu0 0
    %2742 = vmatpush1.bf16.xpose.msra.mxu0 0
    %2743 = vmatprep.subr.bf16.mxu0 0
    %2744 = vmatpush1.bf16.xpose.msra.mxu0 0
    %2745 = vmatprep.subr.bf16.mxu0 0
    %2746 = vmatpush1.bf16.xpose.msra.mxu0 0
    %2747 = vmatprep.subr.bf16.mxu0 0
    %2748 = vmatpush1.bf16.xpose.msra.mxu0 0
    %2749 = vmatprep.subr.bf16.mxu0 0
    %2750 = vmatpush1.bf16.xpose.msra.mxu0 0
    %2751 = vmatprep.subr.bf16.mxu0 0
    %2752 = vmatpush1.bf16.xpose.msra.mxu0 0
    %2753 = vmatprep.subr.bf16.mxu0 0
    %2754 = vmatpush1.bf16.xpose.msra.mxu0 0
    %2755 = vmatprep.subr.bf16.mxu0 0
    %2756 = vmatpush1.bf16.xpose.msra.mxu0 0
    %2757 = vmatprep.subr.bf16.mxu0 0
    %2758 = vmatpush1.bf16.xpose.msra.mxu0 0
    %2759 = vmatprep.subr.bf16.mxu0 0
    %2760 = vmatpush1.bf16.xpose.msra.mxu0 0
    %2761 = vmatprep.subr.bf16.mxu0 0
    %2762 = vmatpush1.bf16.xpose.msra.mxu0 0
    %2763 = vmatprep.mubr.bf16.mxu0 0
    %2764 = vmatmul.mubr.bf16.gmra.mrb[0].mxu0 %v2726
    %v2765 = vpop.f32.mrb[0].mxu0
    %v2766 = vadd.f32 0.0, %v2765
    %v2767 = vpop.f32.mrb[0].mxu0
    %v2768 = vpop.f32.mrb[0].mxu0
    %v2769 = vpop.f32.mrb[0].mxu0
    %2770 = vdwg.mxu0
    %2772 = vrot.lane.b32.xlu0 %v2077, 64
    %v2773 = vpop.permute.xlu0 %2772
    %2775 = vrot.lane.b32.xlu0 %v2081, 64
    %v2776 = vpop.permute.xlu0 %2775
    %v2778 = vsel %vm977, %v2773, 0
    %v2781 = vsel %vm977, %v2776, 0
    %2783 = vmatprep.subr.bf16.mxu0 0
    %2784 = vmatpush1.bf16.xpose.msra.mxu0 %v2781
    %2785 = vmatprep.subr.bf16.mxu0 0
    %2786 = vmatpush1.bf16.xpose.msra.mxu0 0
    %2787 = vmatprep.subr.bf16.mxu0 0
    %2788 = vmatpush1.bf16.xpose.msra.mxu0 0
    %2789 = vmatprep.subr.bf16.mxu0 0
    %2790 = vmatpush1.bf16.xpose.msra.mxu0 0
    %2791 = vmatprep.subr.bf16.mxu0 0
    %2792 = vmatpush1.bf16.xpose.msra.mxu0 0
    %2793 = vmatprep.subr.bf16.mxu0 0
    %2794 = vmatpush1.bf16.xpose.msra.mxu0 0
    %2795 = vmatprep.subr.bf16.mxu0 0
    %2796 = vmatpush1.bf16.xpose.msra.mxu0 0
    %2797 = vmatprep.subr.bf16.mxu0 0
    %2798 = vmatpush1.bf16.xpose.msra.mxu0 0
    %2799 = vmatprep.subr.bf16.mxu0 0
    %2800 = vmatpush1.bf16.xpose.msra.mxu0 0
    %2801 = vmatprep.subr.bf16.mxu0 0
    %2802 = vmatpush1.bf16.xpose.msra.mxu0 0
    %2803 = vmatprep.subr.bf16.mxu0 0
    %2804 = vmatpush1.bf16.xpose.msra.mxu0 0
    %2805 = vmatprep.subr.bf16.mxu0 0
    %2806 = vmatpush1.bf16.xpose.msra.mxu0 0
    %2807 = vmatprep.subr.bf16.mxu0 0
    %2808 = vmatpush1.bf16.xpose.msra.mxu0 0
    %2809 = vmatprep.subr.bf16.mxu0 0
    %2810 = vmatpush1.bf16.xpose.msra.mxu0 0
    %2811 = vmatprep.subr.bf16.mxu0 0
    %2812 = vmatpush1.bf16.xpose.msra.mxu0 0
    %2813 = vmatprep.subr.bf16.mxu0 0
    %2814 = vmatpush1.bf16.xpose.msra.mxu0 0
    %2815 = vmatprep.mubr.bf16.mxu0 0
    %2816 = vmatmul.mubr.bf16.gmra.mrb[0].mxu0 %v2778
    %v2817 = vpop.f32.mrb[0].mxu0
    %v2818 = vadd.f32 0.0, %v2817
    %v2819 = vpop.f32.mrb[0].mxu0
    %v2820 = vpop.f32.mrb[0].mxu0
    %v2821 = vpop.f32.mrb[0].mxu0
    %2822 = vdwg.mxu0
    %v2823 = vmul.f32 %v2662, 0.125
    %v2824 = vmul.f32 %v2714, 0.125
    %v2825 = vmul.f32 %v2766, 0.125
    %v2826 = vmul.f32 %v2818, 0.125
    %v2827 = vsel %vm1166, %v2823, -inf
    %2828 = vmax.xlane.f32.xlu0 %v2827
    %v2829 = vpop.xlane.xlu0 %2828
    %v2830 = vsel %vm1166, %v2824, -inf
    %2831 = vmax.xlane.f32.xlu0 %v2830
    %v2832 = vpop.xlane.xlu0 %2831
    %v2833 = vsel %vm1166, %v2825, -inf
    %2834 = vmax.xlane.f32.xlu0 %v2833
    %v2835 = vpop.xlane.xlu0 %2834
    %v2836 = vsel %vm1166, %v2826, -inf
    %2837 = vmax.xlane.f32.xlu0 %v2836
    %v2838 = vpop.xlane.xlu0 %2837
    %v2839 = vsub.f32 %v2823, %v2829
    %v2840 = vsub.f32 %v2824, %v2832
    %v2841 = vsub.f32 %v2825, %v2835
    %v2842 = vsub.f32 %v2826, %v2838
    %v2843 = vmul.f32 %v2839, 1.442695
    %v2844 = vpow.pop %v2843
    %v2845 = vmul.f32 %v2840, 1.442695
    %v2846 = vpow.pop %v2845
    %v2847 = vmul.f32 %v2841, 1.442695
    %v2848 = vpow.pop %v2847
    %v2849 = vmul.f32 %v2842, 1.442695
    %v2850 = vpow.pop %v2849
    %v2851 = vsel %vm1166, %v2844, 0.0
    %2852 = vadd.xlane.f32.xlu0 %v2851
    %v2853 = vpop.xlane.xlu0 %2852
    %v2854 = vsel %vm1166, %v2846, 0.0
    %2855 = vadd.xlane.f32.xlu0 %v2854
    %v2856 = vpop.xlane.xlu0 %2855
    %v2857 = vsel %vm1166, %v2848, 0.0
    %2858 = vadd.xlane.f32.xlu0 %v2857
    %v2859 = vpop.xlane.xlu0 %2858
    %v2860 = vsel %vm1166, %v2850, 0.0
    %2861 = vadd.xlane.f32.xlu0 %v2860
    %v2862 = vpop.xlane.xlu0 %2861
    %v2863 = vrcp.pop %v2853
    %v2864 = vrcp.pop %v2856
    %v2865 = vrcp.pop %v2859
    %v2866 = vrcp.pop %v2862
    %v2867 = vmul.f32 %v2844, %v2863
    %v2868 = vmul.f32 %v2846, %v2864
    %v2869 = vmul.f32 %v2848, %v2865
    %v2870 = vmul.f32 %v2850, %v2866
    %v2871 = vpack.c.bf16 %v2867, %v2867
    %v2872 = vpack.c.bf16 %v2868, %v2868
    %v2873 = vpack.c.bf16 %v2869, %v2869
    %v2874 = vpack.c.bf16 %v2870, %v2870
    %2876 = vrot.lane.b32.xlu0 %v2082, 64
    %v2877 = vpop.permute.xlu0 %2876
    %v2879 = vsel %vm1166, %v2871, 0
    %v2882 = vsel %vm1218, %v2877, 0
    %2884 = vmatprep.subr.bf16.mxu0 0
    %2885 = vmatpush1.bf16.msra.mxu0 %v2882
    %2886 = vmatprep.subr.bf16.mxu0 0
    %2887 = vmatpush1.bf16.msra.mxu0 0
    %2888 = vmatprep.subr.bf16.mxu0 0
    %2889 = vmatpush1.bf16.msra.mxu0 0
    %2890 = vmatprep.subr.bf16.mxu0 0
    %2891 = vmatpush1.bf16.msra.mxu0 0
    %2892 = vmatprep.subr.bf16.mxu0 0
    %2893 = vmatpush1.bf16.msra.mxu0 0
    %2894 = vmatprep.subr.bf16.mxu0 0
    %2895 = vmatpush1.bf16.msra.mxu0 0
    %2896 = vmatprep.subr.bf16.mxu0 0
    %2897 = vmatpush1.bf16.msra.mxu0 0
    %2898 = vmatprep.subr.bf16.mxu0 0
    %2899 = vmatpush1.bf16.msra.mxu0 0
    %2900 = vmatprep.subr.bf16.mxu0 0
    %2901 = vmatpush1.bf16.msra.mxu0 0
    %2902 = vmatprep.subr.bf16.mxu0 0
    %2903 = vmatpush1.bf16.msra.mxu0 0
    %2904 = vmatprep.subr.bf16.mxu0 0
    %2905 = vmatpush1.bf16.msra.mxu0 0
    %2906 = vmatprep.subr.bf16.mxu0 0
    %2907 = vmatpush1.bf16.msra.mxu0 0
    %2908 = vmatprep.subr.bf16.mxu0 0
    %2909 = vmatpush1.bf16.msra.mxu0 0
    %2910 = vmatprep.subr.bf16.mxu0 0
    %2911 = vmatpush1.bf16.msra.mxu0 0
    %2912 = vmatprep.subr.bf16.mxu0 0
    %2913 = vmatpush1.bf16.msra.mxu0 0
    %2914 = vmatprep.subr.bf16.mxu0 0
    %2915 = vmatpush1.bf16.msra.mxu0 0
    %2916 = vmatprep.mubr.bf16.mxu0 0
    %2917 = vmatmul.mubr.bf16.gmra.mrb[0].mxu0 %v2879
    %v2918 = vpop.f32.mrb[0].mxu0
    %v2919 = vadd.f32 0.0, %v2918
    %v2920 = vpop.f32.mrb[0].mxu0
    %v2921 = vpop.f32.mrb[0].mxu0
    %v2922 = vpop.f32.mrb[0].mxu0
    %2923 = vdwg.mxu0
    %2925 = vrot.lane.b32.xlu0 %v2083, 64
    %v2926 = vpop.permute.xlu0 %2925
    %v2928 = vsel %vm1166, %v2872, 0
    %v2931 = vsel %vm1218, %v2926, 0
    %2933 = vmatprep.subr.bf16.mxu0 0
    %2934 = vmatpush1.bf16.msra.mxu0 %v2931
    %2935 = vmatprep.subr.bf16.mxu0 0
    %2936 = vmatpush1.bf16.msra.mxu0 0
    %2937 = vmatprep.subr.bf16.mxu0 0
    %2938 = vmatpush1.bf16.msra.mxu0 0
    %2939 = vmatprep.subr.bf16.mxu0 0
    %2940 = vmatpush1.bf16.msra.mxu0 0
    %2941 = vmatprep.subr.bf16.mxu0 0
    %2942 = vmatpush1.bf16.msra.mxu0 0
    %2943 = vmatprep.subr.bf16.mxu0 0
    %2944 = vmatpush1.bf16.msra.mxu0 0
    %2945 = vmatprep.subr.bf16.mxu0 0
    %2946 = vmatpush1.bf16.msra.mxu0 0
    %2947 = vmatprep.subr.bf16.mxu0 0
    %2948 = vmatpush1.bf16.msra.mxu0 0
    %2949 = vmatprep.subr.bf16.mxu0 0
    %2950 = vmatpush1.bf16.msra.mxu0 0
    %2951 = vmatprep.subr.bf16.mxu0 0
    %2952 = vmatpush1.bf16.msra.mxu0 0
    %2953 = vmatprep.subr.bf16.mxu0 0
    %2954 = vmatpush1.bf16.msra.mxu0 0
    %2955 = vmatprep.subr.bf16.mxu0 0
    %2956 = vmatpush1.bf16.msra.mxu0 0
    %2957 = vmatprep.subr.bf16.mxu0 0
    %2958 = vmatpush1.bf16.msra.mxu0 0
    %2959 = vmatprep.subr.bf16.mxu0 0
    %2960 = vmatpush1.bf16.msra.mxu0 0
    %2961 = vmatprep.subr.bf16.mxu0 0
    %2962 = vmatpush1.bf16.msra.mxu0 0
    %2963 = vmatprep.subr.bf16.mxu0 0
    %2964 = vmatpush1.bf16.msra.mxu0 0
    %2965 = vmatprep.mubr.bf16.mxu0 0
    %2966 = vmatmul.mubr.bf16.gmra.mrb[0].mxu0 %v2928
    %v2967 = vpop.f32.mrb[0].mxu0
    %v2968 = vadd.f32 0.0, %v2967
    %v2969 = vpop.f32.mrb[0].mxu0
    %v2970 = vpop.f32.mrb[0].mxu0
    %v2971 = vpop.f32.mrb[0].mxu0
    %2972 = vdwg.mxu0
    %2974 = vrot.lane.b32.xlu0 %v2084, 64
    %v2975 = vpop.permute.xlu0 %2974
    %v2977 = vsel %vm1166, %v2873, 0
    %v2980 = vsel %vm1218, %v2975, 0
    %2982 = vmatprep.subr.bf16.mxu0 0
    %2983 = vmatpush1.bf16.msra.mxu0 %v2980
    %2984 = vmatprep.subr.bf16.mxu0 0
    %2985 = vmatpush1.bf16.msra.mxu0 0
    %2986 = vmatprep.subr.bf16.mxu0 0
    %2987 = vmatpush1.bf16.msra.mxu0 0
    %2988 = vmatprep.subr.bf16.mxu0 0
    %2989 = vmatpush1.bf16.msra.mxu0 0
    %2990 = vmatprep.subr.bf16.mxu0 0
    %2991 = vmatpush1.bf16.msra.mxu0 0
    %2992 = vmatprep.subr.bf16.mxu0 0
    %2993 = vmatpush1.bf16.msra.mxu0 0
    %2994 = vmatprep.subr.bf16.mxu0 0
    %2995 = vmatpush1.bf16.msra.mxu0 0
    %2996 = vmatprep.subr.bf16.mxu0 0
    %2997 = vmatpush1.bf16.msra.mxu0 0
    %2998 = vmatprep.subr.bf16.mxu0 0
    %2999 = vmatpush1.bf16.msra.mxu0 0
    %3000 = vmatprep.subr.bf16.mxu0 0
    %3001 = vmatpush1.bf16.msra.mxu0 0
    %3002 = vmatprep.subr.bf16.mxu0 0
    %3003 = vmatpush1.bf16.msra.mxu0 0
    %3004 = vmatprep.subr.bf16.mxu0 0
    %3005 = vmatpush1.bf16.msra.mxu0 0
    %3006 = vmatprep.subr.bf16.mxu0 0
    %3007 = vmatpush1.bf16.msra.mxu0 0
    %3008 = vmatprep.subr.bf16.mxu0 0
    %3009 = vmatpush1.bf16.msra.mxu0 0
    %3010 = vmatprep.subr.bf16.mxu0 0
    %3011 = vmatpush1.bf16.msra.mxu0 0
    %3012 = vmatprep.subr.bf16.mxu0 0
    %3013 = vmatpush1.bf16.msra.mxu0 0
    %3014 = vmatprep.mubr.bf16.mxu0 0
    %3015 = vmatmul.mubr.bf16.gmra.mrb[0].mxu0 %v2977
    %v3016 = vpop.f32.mrb[0].mxu0
    %v3017 = vadd.f32 0.0, %v3016
    %v3018 = vpop.f32.mrb[0].mxu0
    %v3019 = vpop.f32.mrb[0].mxu0
    %v3020 = vpop.f32.mrb[0].mxu0
    %3021 = vdwg.mxu0
    %3023 = vrot.lane.b32.xlu0 %v2085, 64
    %v3024 = vpop.permute.xlu0 %3023
    %v3026 = vsel %vm1166, %v2874, 0
    %v3029 = vsel %vm1218, %v3024, 0
    %3031 = vmatprep.subr.bf16.mxu0 0
    %3032 = vmatpush1.bf16.msra.mxu0 %v3029
    %3033 = vmatprep.subr.bf16.mxu0 0
    %3034 = vmatpush1.bf16.msra.mxu0 0
    %3035 = vmatprep.subr.bf16.mxu0 0
    %3036 = vmatpush1.bf16.msra.mxu0 0
    %3037 = vmatprep.subr.bf16.mxu0 0
    %3038 = vmatpush1.bf16.msra.mxu0 0
    %3039 = vmatprep.subr.bf16.mxu0 0
    %3040 = vmatpush1.bf16.msra.mxu0 0
    %3041 = vmatprep.subr.bf16.mxu0 0
    %3042 = vmatpush1.bf16.msra.mxu0 0
    %3043 = vmatprep.subr.bf16.mxu0 0
    %3044 = vmatpush1.bf16.msra.mxu0 0
    %3045 = vmatprep.subr.bf16.mxu0 0
    %3046 = vmatpush1.bf16.msra.mxu0 0
    %3047 = vmatprep.subr.bf16.mxu0 0
    %3048 = vmatpush1.bf16.msra.mxu0 0
    %3049 = vmatprep.subr.bf16.mxu0 0
    %3050 = vmatpush1.bf16.msra.mxu0 0
    %3051 = vmatprep.subr.bf16.mxu0 0
    %3052 = vmatpush1.bf16.msra.mxu0 0
    %3053 = vmatprep.subr.bf16.mxu0 0
    %3054 = vmatpush1.bf16.msra.mxu0 0
    %3055 = vmatprep.subr.bf16.mxu0 0
    %3056 = vmatpush1.bf16.msra.mxu0 0
    %3057 = vmatprep.subr.bf16.mxu0 0
    %3058 = vmatpush1.bf16.msra.mxu0 0
    %3059 = vmatprep.subr.bf16.mxu0 0
    %3060 = vmatpush1.bf16.msra.mxu0 0
    %3061 = vmatprep.subr.bf16.mxu0 0
    %3062 = vmatpush1.bf16.msra.mxu0 0
    %3063 = vmatprep.mubr.bf16.mxu0 0
    %3064 = vmatmul.mubr.bf16.gmra.mrb[0].mxu0 %v3026
    %v3065 = vpop.f32.mrb[0].mxu0
    %v3066 = vadd.f32 0.0, %v3065
    %v3067 = vpop.f32.mrb[0].mxu0
    %v3068 = vpop.f32.mrb[0].mxu0
    %v3069 = vpop.f32.mrb[0].mxu0
    %3070 = vdwg.mxu0
    %v3071 = vpack.c.bf16 %v2968, %v2919
    %v3072 = vpack.c.bf16 %v3066, %v3017
    %v3081 = vunpack.c.l.b16 %v937
    %v3082 = vunpack.c.h.b16 %v937
    %v3083 = vunpack.c.l.b16 %v938
    %v3084 = vunpack.c.h.b16 %v938
    %v3085 = vunpack.c.l.b16 %v939
    %v3086 = vunpack.c.h.b16 %v939
    %v3087 = vunpack.c.l.b16 %v940
    %v3088 = vunpack.c.h.b16 %v940
    %v3089 = vunpack.c.l.b16 %v941
    %v3090 = vunpack.c.h.b16 %v941
    %v3091 = vunpack.c.l.b16 %v942
    %v3092 = vunpack.c.h.b16 %v942
    %v3093 = vunpack.c.l.b16 %v943
    %v3094 = vunpack.c.h.b16 %v943
    %v3095 = vunpack.c.l.b16 %v944
    %v3096 = vunpack.c.h.b16 %v944
    %v3097 = vpack.c.b16 %v3083, %v3081
    %v3098 = vpack.c.b16 %v3084, %v3082
    %v3099 = vpack.c.b16 %v3087, %v3085
    %v3100 = vpack.c.b16 %v3088, %v3086
    %v3101 = vpack.c.b16 %v3091, %v3089
    %v3102 = vpack.c.b16 %v3092, %v3090
    %v3103 = vpack.c.b16 %v3095, %v3093
    %v3104 = vpack.c.b16 %v3096, %v3094
    %v3114 = vsel %vm977, %v3071, 0
    %v3117 = vsel %vm977, %v3072, 0
    %3119 = vmatprep.subr.bf16.mxu0 %v3098
    %3120 = vmatpush1.bf16.msra.mxu0 %v3097
    %3121 = vmatprep.subr.bf16.mxu0 %v3100
    %3122 = vmatpush1.bf16.msra.mxu0 %v3099
    %3123 = vmatprep.subr.bf16.mxu0 %v3102
    %3124 = vmatpush1.bf16.msra.mxu0 %v3101
    %3125 = vmatprep.subr.bf16.mxu0 %v3104
    %3126 = vmatpush1.bf16.msra.mxu0 %v3103
    %3127 = vmatprep.subr.bf16.mxu0 0
    %3128 = vmatpush1.bf16.msra.mxu0 0
    %3129 = vmatprep.subr.bf16.mxu0 0
    %3130 = vmatpush1.bf16.msra.mxu0 0
    %3131 = vmatprep.subr.bf16.mxu0 0
    %3132 = vmatpush1.bf16.msra.mxu0 0
    %3133 = vmatprep.subr.bf16.mxu0 0
    %3134 = vmatpush1.bf16.msra.mxu0 0
    %3135 = vmatprep.subr.bf16.mxu0 0
    %3136 = vmatpush1.bf16.msra.mxu0 0
    %3137 = vmatprep.subr.bf16.mxu0 0
    %3138 = vmatpush1.bf16.msra.mxu0 0
    %3139 = vmatprep.subr.bf16.mxu0 0
    %3140 = vmatpush1.bf16.msra.mxu0 0
    %3141 = vmatprep.subr.bf16.mxu0 0
    %3142 = vmatpush1.bf16.msra.mxu0 0
    %3143 = vmatprep.subr.bf16.mxu0 0
    %3144 = vmatpush1.bf16.msra.mxu0 0
    %3145 = vmatprep.subr.bf16.mxu0 0
    %3146 = vmatpush1.bf16.msra.mxu0 0
    %3147 = vmatprep.subr.bf16.mxu0 0
    %3148 = vmatpush1.bf16.msra.mxu0 0
    %3149 = vmatprep.subr.bf16.mxu0 0
    %3150 = vmatpush1.bf16.msra.mxu0 0
    %3151 = vmatprep.mubr.bf16.mxu0 0
    %3152 = vmatmul.mubr.bf16.gmra.mrb[0].mxu0 %v3114
    %v3153 = vpop.f32.mrb[0].mxu0
    %v3154 = vadd.f32 0.0, %v3153
    %v3155 = vpop.f32.mrb[0].mxu0
    %v3156 = vadd.f32 0.0, %v3155
    %v3157 = vpop.f32.mrb[0].mxu0
    %v3158 = vadd.f32 0.0, %v3157
    %v3159 = vpop.f32.mrb[0].mxu0
    %v3160 = vadd.f32 0.0, %v3159
    %3161 = vmatprep.mubr.bf16.mxu0 0
    %3162 = vmatmul.mubr.bf16.gmra.mrb[0].mxu0 %v3117
    %v3163 = vpop.f32.mrb[0].mxu0
    %v3164 = vadd.f32 0.0, %v3163
    %v3165 = vpop.f32.mrb[0].mxu0
    %v3166 = vadd.f32 0.0, %v3165
    %v3167 = vpop.f32.mrb[0].mxu0
    %v3168 = vadd.f32 0.0, %v3167
    %v3169 = vpop.f32.mrb[0].mxu0
    %v3170 = vadd.f32 0.0, %v3169
    %3171 = vdwg.mxu0
    %v3172 = vadd.f32 %v2607, %v3154
    %v3173 = vadd.f32 %v2608, %v3156
    %v3174 = vadd.f32 %v2609, %v3158
    %v3175 = vadd.f32 %v2610, %v3160
    %v3176 = vadd.f32 %v2611, %v3164
    %v3177 = vadd.f32 %v2612, %v3166
    %v3178 = vadd.f32 %v2613, %v3168
    %v3179 = vadd.f32 %v2614, %v3170
    %v3180 = vld [vmem:[%s5] sm:$0x3]
    %v3181 = vld [vmem:[%s6] sm:$0x3]
    %v3182 = vadd.f32 %v3172, %v3173
    %3183 = vadd.xlane.f32.xlu0 %v3182
    %v3184 = vpop.xlane.xlu0 %3183
    %v3185 = vadd.f32 %v3174, %v3175
    %3186 = vadd.xlane.f32.xlu0 %v3185
    %v3187 = vpop.xlane.xlu0 %3186
    %v3188 = vadd.f32 %v3176, %v3177
    %3189 = vadd.xlane.f32.xlu0 %v3188
    %v3190 = vpop.xlane.xlu0 %3189
    %v3191 = vadd.f32 %v3178, %v3179
    %3192 = vadd.xlane.f32.xlu0 %v3191
    %v3193 = vpop.xlane.xlu0 %3192
    %v3194 = vrcp.pop 256.0
    %v3195 = vmul.f32 %v3184, %v3194
    %v3196 = vmul.f32 %v3187, %v3194
    %v3197 = vmul.f32 %v3190, %v3194
    %v3198 = vmul.f32 %v3193, %v3194
    %v3199 = vsub.f32 %v3172, %v3195
    %v3200 = vsub.f32 %v3173, %v3195
    %v3201 = vsub.f32 %v3174, %v3196
    %v3202 = vsub.f32 %v3175, %v3196
    %v3203 = vsub.f32 %v3176, %v3197
    %v3204 = vsub.f32 %v3177, %v3197
    %v3205 = vsub.f32 %v3178, %v3198
    %v3206 = vsub.f32 %v3179, %v3198
    %v3207 = vmul.f32 %v3199, %v3199
    %v3208 = vmul.f32 %v3200, %v3200
    %v3209 = vmul.f32 %v3201, %v3201
    %v3210 = vmul.f32 %v3202, %v3202
    %v3211 = vmul.f32 %v3203, %v3203
    %v3212 = vmul.f32 %v3204, %v3204
    %v3213 = vmul.f32 %v3205, %v3205
    %v3214 = vmul.f32 %v3206, %v3206
    %v3215 = vadd.f32 %v3207, %v3208
    %3216 = vadd.xlane.f32.xlu0 %v3215
    %v3217 = vpop.xlane.xlu0 %3216
    %v3218 = vadd.f32 %v3209, %v3210
    %3219 = vadd.xlane.f32.xlu0 %v3218
    %v3220 = vpop.xlane.xlu0 %3219
    %v3221 = vadd.f32 %v3211, %v3212
    %3222 = vadd.xlane.f32.xlu0 %v3221
    %v3223 = vpop.xlane.xlu0 %3222
    %v3224 = vadd.f32 %v3213, %v3214
    %3225 = vadd.xlane.f32.xlu0 %v3224
    %v3226 = vpop.xlane.xlu0 %3225
    %v3227 = vmul.f32 %v3217, %v3194
    %v3228 = vmul.f32 %v3220, %v3194
    %v3229 = vmul.f32 %v3223, %v3194
    %v3230 = vmul.f32 %v3226, %v3194
    %v3231 = vadd.f32 %v3227, 1e-05
    %v3232 = vadd.f32 %v3228, 1e-05
    %v3233 = vadd.f32 %v3229, 1e-05
    %v3234 = vadd.f32 %v3230, 1e-05
    %v3235 = vrsqrt.pop %v3231
    %v3236 = vrsqrt.pop %v3232
    %v3237 = vrsqrt.pop %v3233
    %v3238 = vrsqrt.pop %v3234
    %v3239 = vmul.f32 %v3199, %v3235
    %v3240 = vmul.f32 %v3200, %v3235
    %v3241 = vmul.f32 %v3201, %v3236
    %v3242 = vmul.f32 %v3202, %v3236
    %v3243 = vmul.f32 %v3203, %v3237
    %v3244 = vmul.f32 %v3204, %v3237
    %v3245 = vmul.f32 %v3205, %v3238
    %v3246 = vmul.f32 %v3206, %v3238
    %v3248 = vlaneseq
    %v3249 = vshrl.u32 %v3248, 7
    %v3250 = vsub.s32 0, %v3249
    %v3251 = vrot.slane %v3180, %v3250
    %v3252 = vlaneseq
    %v3253 = vshrl.u32 %v3252, 7
    %v3254 = vsub.s32 1, %v3253
    %v3255 = vrot.slane %v3180, %v3254
    %v3258 = vmul.f32 %v3239, %v3251
    %v3259 = vmul.f32 %v3240, %v3255
    %v3260 = vmul.f32 %v3241, %v3251
    %v3261 = vmul.f32 %v3242, %v3255
    %v3262 = vmul.f32 %v3243, %v3251
    %v3263 = vmul.f32 %v3244, %v3255
    %v3264 = vmul.f32 %v3245, %v3251
    %v3265 = vmul.f32 %v3246, %v3255
    %v3267 = vlaneseq
    %v3268 = vshrl.u32 %v3267, 7
    %v3269 = vsub.s32 0, %v3268
    %v3270 = vrot.slane %v3181, %v3269
    %v3271 = vlaneseq
    %v3272 = vshrl.u32 %v3271, 7
    %v3273 = vsub.s32 1, %v3272
    %v3274 = vrot.slane %v3181, %v3273
    %v3277 = vadd.f32 %v3258, %v3270
    %v3278 = vadd.f32 %v3259, %v3274
    %v3279 = vadd.f32 %v3260, %v3270
    %v3280 = vadd.f32 %v3261, %v3274
    %v3281 = vadd.f32 %v3262, %v3270
    %v3282 = vadd.f32 %v3263, %v3274
    %v3283 = vadd.f32 %v3264, %v3270
    %v3284 = vadd.f32 %v3265, %v3274
    %v3285 = vpack.c.bf16 %v3279, %v3277
    %v3286 = vpack.c.bf16 %v3280, %v3278
    %v3287 = vpack.c.bf16 %v3283, %v3281
    %v3288 = vpack.c.bf16 %v3284, %v3282
    %v3289 = vld [vmem:[#allocation8] sm:$0xff]
    %v3290 = vld [vmem:[#allocation8 + $0x8] sm:$0xff]
    %v3291 = vld [vmem:[#allocation8 + $0x10] sm:$0xff]
    %v3292 = vld [vmem:[#allocation8 + $0x18] sm:$0xff]
    %v3293 = vld [vmem:[#allocation8 + $0x20] sm:$0xff]
    %v3294 = vld [vmem:[#allocation8 + $0x28] sm:$0xff]
    %v3295 = vld [vmem:[#allocation8 + $0x30] sm:$0xff]
    %v3296 = vld [vmem:[#allocation8 + $0x38] sm:$0xff]
    %v3297 = vld [vmem:[#allocation8 + $0x40] sm:$0xff]
    %v3298 = vld [vmem:[#allocation8 + $0x48] sm:$0xff]
    %v3299 = vld [vmem:[#allocation8 + $0x50] sm:$0xff]
    %v3300 = vld [vmem:[#allocation8 + $0x58] sm:$0xff]
    %v3301 = vld [vmem:[#allocation8 + $0x60] sm:$0xff]
    %v3302 = vld [vmem:[#allocation8 + $0x68] sm:$0xff]
    %v3303 = vld [vmem:[#allocation8 + $0x70] sm:$0xff]
    %v3304 = vld [vmem:[#allocation8 + $0x78] sm:$0xff]
    %v3305 = vld [vmem:[#allocation8 + $0x80] sm:$0xff]
    %v3306 = vld [vmem:[#allocation8 + $0x88] sm:$0xff]
    %v3307 = vld [vmem:[#allocation8 + $0x90] sm:$0xff]
    %v3308 = vld [vmem:[#allocation8 + $0x98] sm:$0xff]
    %v3309 = vld [vmem:[#allocation8 + $0xa0] sm:$0xff]
    %v3310 = vld [vmem:[#allocation8 + $0xa8] sm:$0xff]
    %v3311 = vld [vmem:[#allocation8 + $0xb0] sm:$0xff]
    %v3312 = vld [vmem:[#allocation8 + $0xb8] sm:$0xff]
    %v3313 = vld [vmem:[#allocation8 + $0xc0] sm:$0xff]
    %v3314 = vld [vmem:[#allocation8 + $0xc8] sm:$0xff]
    %v3315 = vld [vmem:[#allocation8 + $0xd0] sm:$0xff]
    %v3316 = vld [vmem:[#allocation8 + $0xd8] sm:$0xff]
    %v3317 = vld [vmem:[#allocation8 + $0xe0] sm:$0xff]
    %v3318 = vld [vmem:[#allocation8 + $0xe8] sm:$0xff]
    %v3319 = vld [vmem:[#allocation8 + $0xf0] sm:$0xff]
    %v3320 = vld [vmem:[#allocation8 + $0xf8] sm:$0xff]
    %v3321 = vld [vmem:[#allocation8 + $0x100] sm:$0xff]
    %v3322 = vld [vmem:[#allocation8 + $0x108] sm:$0xff]
    %v3323 = vld [vmem:[#allocation8 + $0x110] sm:$0xff]
    %v3324 = vld [vmem:[#allocation8 + $0x118] sm:$0xff]
    %v3325 = vld [vmem:[#allocation8 + $0x120] sm:$0xff]
    %v3326 = vld [vmem:[#allocation8 + $0x128] sm:$0xff]
    %v3327 = vld [vmem:[#allocation8 + $0x130] sm:$0xff]
    %v3328 = vld [vmem:[#allocation8 + $0x138] sm:$0xff]
    %v3329 = vld [vmem:[#allocation8 + $0x140] sm:$0xff]
    %v3330 = vld [vmem:[#allocation8 + $0x148] sm:$0xff]
    %v3331 = vld [vmem:[#allocation8 + $0x150] sm:$0xff]
    %v3332 = vld [vmem:[#allocation8 + $0x158] sm:$0xff]
    %v3333 = vld [vmem:[#allocation8 + $0x160] sm:$0xff]
    %v3334 = vld [vmem:[#allocation8 + $0x168] sm:$0xff]
    %v3335 = vld [vmem:[#allocation8 + $0x170] sm:$0xff]
    %v3336 = vld [vmem:[#allocation8 + $0x178] sm:$0xff]
    %v3337 = vld [vmem:[#allocation8 + $0x180] sm:$0xff]
    %v3338 = vld [vmem:[#allocation8 + $0x188] sm:$0xff]
    %v3339 = vld [vmem:[#allocation8 + $0x190] sm:$0xff]
    %v3340 = vld [vmem:[#allocation8 + $0x198] sm:$0xff]
    %v3341 = vld [vmem:[#allocation8 + $0x1a0] sm:$0xff]
    %v3342 = vld [vmem:[#allocation8 + $0x1a8] sm:$0xff]
    %v3343 = vld [vmem:[#allocation8 + $0x1b0] sm:$0xff]
    %v3344 = vld [vmem:[#allocation8 + $0x1b8] sm:$0xff]
    %v3345 = vld [vmem:[#allocation8 + $0x1c0] sm:$0xff]
    %v3346 = vld [vmem:[#allocation8 + $0x1c8] sm:$0xff]
    %v3347 = vld [vmem:[#allocation8 + $0x1d0] sm:$0xff]
    %v3348 = vld [vmem:[#allocation8 + $0x1d8] sm:$0xff]
    %v3349 = vld [vmem:[#allocation8 + $0x1e0] sm:$0xff]
    %v3350 = vld [vmem:[#allocation8 + $0x1e8] sm:$0xff]
    %v3351 = vld [vmem:[#allocation8 + $0x1f0] sm:$0xff]
    %v3352 = vld [vmem:[#allocation8 + $0x1f8] sm:$0xff]
    %v3353 = vld [vmem:[%s8] sm:$0xf]
    %v3355 = vlaneseq
    %v3356 = vshrl.u32 %v3355, 7
    %v3357 = vsub.s32 0, %v3356
    %v3358 = vrot.slane %v3353, %v3357
    %v3359 = vlaneseq
    %v3360 = vshrl.u32 %v3359, 7
    %v3361 = vsub.s32 1, %v3360
    %v3362 = vrot.slane %v3353, %v3361
    %v3363 = vlaneseq
    %v3364 = vshrl.u32 %v3363, 7
    %v3365 = vsub.s32 2, %v3364
    %v3366 = vrot.slane %v3353, %v3365
    %v3367 = vlaneseq
    %v3368 = vshrl.u32 %v3367, 7
    %v3369 = vsub.s32 3, %v3368
    %v3370 = vrot.slane %v3353, %v3369
    %v3439 = vunpack.c.l.b16 %v3289
    %v3440 = vunpack.c.h.b16 %v3289
    %v3441 = vunpack.c.l.b16 %v3290
    %v3442 = vunpack.c.h.b16 %v3290
    %v3443 = vunpack.c.l.b16 %v3291
    %v3444 = vunpack.c.h.b16 %v3291
    %v3445 = vunpack.c.l.b16 %v3292
    %v3446 = vunpack.c.h.b16 %v3292
    %v3447 = vunpack.c.l.b16 %v3293
    %v3448 = vunpack.c.h.b16 %v3293
    %v3449 = vunpack.c.l.b16 %v3294
    %v3450 = vunpack.c.h.b16 %v3294
    %v3451 = vunpack.c.l.b16 %v3295
    %v3452 = vunpack.c.h.b16 %v3295
    %v3453 = vunpack.c.l.b16 %v3296
    %v3454 = vunpack.c.h.b16 %v3296
    %v3455 = vunpack.c.l.b16 %v3297
    %v3456 = vunpack.c.h.b16 %v3297
    %v3457 = vunpack.c.l.b16 %v3298
    %v3458 = vunpack.c.h.b16 %v3298
    %v3459 = vunpack.c.l.b16 %v3299
    %v3460 = vunpack.c.h.b16 %v3299
    %v3461 = vunpack.c.l.b16 %v3300
    %v3462 = vunpack.c.h.b16 %v3300
    %v3463 = vunpack.c.l.b16 %v3301
    %v3464 = vunpack.c.h.b16 %v3301
    %v3465 = vunpack.c.l.b16 %v3302
    %v3466 = vunpack.c.h.b16 %v3302
    %v3467 = vunpack.c.l.b16 %v3303
    %v3468 = vunpack.c.h.b16 %v3303
    %v3469 = vunpack.c.l.b16 %v3304
    %v3470 = vunpack.c.h.b16 %v3304
    %v3471 = vunpack.c.l.b16 %v3305
    %v3472 = vunpack.c.h.b16 %v3305
    %v3473 = vunpack.c.l.b16 %v3306
    %v3474 = vunpack.c.h.b16 %v3306
    %v3475 = vunpack.c.l.b16 %v3307
    %v3476 = vunpack.c.h.b16 %v3307
    %v3477 = vunpack.c.l.b16 %v3308
    %v3478 = vunpack.c.h.b16 %v3308
    %v3479 = vunpack.c.l.b16 %v3309
    %v3480 = vunpack.c.h.b16 %v3309
    %v3481 = vunpack.c.l.b16 %v3310
    %v3482 = vunpack.c.h.b16 %v3310
    %v3483 = vunpack.c.l.b16 %v3311
    %v3484 = vunpack.c.h.b16 %v3311
    %v3485 = vunpack.c.l.b16 %v3312
    %v3486 = vunpack.c.h.b16 %v3312
    %v3487 = vunpack.c.l.b16 %v3313
    %v3488 = vunpack.c.h.b16 %v3313
    %v3489 = vunpack.c.l.b16 %v3314
    %v3490 = vunpack.c.h.b16 %v3314
    %v3491 = vunpack.c.l.b16 %v3315
    %v3492 = vunpack.c.h.b16 %v3315
    %v3493 = vunpack.c.l.b16 %v3316
    %v3494 = vunpack.c.h.b16 %v3316
    %v3495 = vunpack.c.l.b16 %v3317
    %v3496 = vunpack.c.h.b16 %v3317
    %v3497 = vunpack.c.l.b16 %v3318
    %v3498 = vunpack.c.h.b16 %v3318
    %v3499 = vunpack.c.l.b16 %v3319
    %v3500 = vunpack.c.h.b16 %v3319
    %v3501 = vunpack.c.l.b16 %v3320
    %v3502 = vunpack.c.h.b16 %v3320
    %v3503 = vunpack.c.l.b16 %v3321
    %v3504 = vunpack.c.h.b16 %v3321
    %v3505 = vunpack.c.l.b16 %v3322
    %v3506 = vunpack.c.h.b16 %v3322
    %v3507 = vunpack.c.l.b16 %v3323
    %v3508 = vunpack.c.h.b16 %v3323
    %v3509 = vunpack.c.l.b16 %v3324
    %v3510 = vunpack.c.h.b16 %v3324
    %v3511 = vunpack.c.l.b16 %v3325
    %v3512 = vunpack.c.h.b16 %v3325
    %v3513 = vunpack.c.l.b16 %v3326
    %v3514 = vunpack.c.h.b16 %v3326
    %v3515 = vunpack.c.l.b16 %v3327
    %v3516 = vunpack.c.h.b16 %v3327
    %v3517 = vunpack.c.l.b16 %v3328
    %v3518 = vunpack.c.h.b16 %v3328
    %v3519 = vunpack.c.l.b16 %v3329
    %v3520 = vunpack.c.h.b16 %v3329
    %v3521 = vunpack.c.l.b16 %v3330
    %v3522 = vunpack.c.h.b16 %v3330
    %v3523 = vunpack.c.l.b16 %v3331
    %v3524 = vunpack.c.h.b16 %v3331
    %v3525 = vunpack.c.l.b16 %v3332
    %v3526 = vunpack.c.h.b16 %v3332
    %v3527 = vunpack.c.l.b16 %v3333
    %v3528 = vunpack.c.h.b16 %v3333
    %v3529 = vunpack.c.l.b16 %v3334
    %v3530 = vunpack.c.h.b16 %v3334
    %v3531 = vunpack.c.l.b16 %v3335
    %v3532 = vunpack.c.h.b16 %v3335
    %v3533 = vunpack.c.l.b16 %v3336
    %v3534 = vunpack.c.h.b16 %v3336
    %v3535 = vunpack.c.l.b16 %v3337
    %v3536 = vunpack.c.h.b16 %v3337
    %v3537 = vunpack.c.l.b16 %v3338
    %v3538 = vunpack.c.h.b16 %v3338
    %v3539 = vunpack.c.l.b16 %v3339
    %v3540 = vunpack.c.h.b16 %v3339
    %v3541 = vunpack.c.l.b16 %v3340
    %v3542 = vunpack.c.h.b16 %v3340
    %v3543 = vunpack.c.l.b16 %v3341
    %v3544 = vunpack.c.h.b16 %v3341
    %v3545 = vunpack.c.l.b16 %v3342
    %v3546 = vunpack.c.h.b16 %v3342
    %v3547 = vunpack.c.l.b16 %v3343
    %v3548 = vunpack.c.h.b16 %v3343
    %v3549 = vunpack.c.l.b16 %v3344
    %v3550 = vunpack.c.h.b16 %v3344
    %v3551 = vunpack.c.l.b16 %v3345
    %v3552 = vunpack.c.h.b16 %v3345
    %v3553 = vunpack.c.l.b16 %v3346
    %v3554 = vunpack.c.h.b16 %v3346
    %v3555 = vunpack.c.l.b16 %v3347
    %v3556 = vunpack.c.h.b16 %v3347
    %v3557 = vunpack.c.l.b16 %v3348
    %v3558 = vunpack.c.h.b16 %v3348
    %v3559 = vunpack.c.l.b16 %v3349
    %v3560 = vunpack.c.h.b16 %v3349
    %v3561 = vunpack.c.l.b16 %v3350
    %v3562 = vunpack.c.h.b16 %v3350
    %v3563 = vunpack.c.l.b16 %v3351
    %v3564 = vunpack.c.h.b16 %v3351
    %v3565 = vunpack.c.l.b16 %v3352
    %v3566 = vunpack.c.h.b16 %v3352
    %v3567 = vpack.c.b16 %v3443, %v3439
    %v3568 = vpack.c.b16 %v3444, %v3440
    %v3569 = vpack.c.b16 %v3445, %v3441
    %v3570 = vpack.c.b16 %v3446, %v3442
    %v3571 = vpack.c.b16 %v3451, %v3447
    %v3572 = vpack.c.b16 %v3452, %v3448
    %v3573 = vpack.c.b16 %v3453, %v3449
    %v3574 = vpack.c.b16 %v3454, %v3450
    %v3575 = vpack.c.b16 %v3459, %v3455
    %v3576 = vpack.c.b16 %v3460, %v3456
    %v3577 = vpack.c.b16 %v3461, %v3457
    %v3578 = vpack.c.b16 %v3462, %v3458
    %v3579 = vpack.c.b16 %v3467, %v3463
    %v3580 = vpack.c.b16 %v3468, %v3464
    %v3581 = vpack.c.b16 %v3469, %v3465
    %v3582 = vpack.c.b16 %v3470, %v3466
    %v3583 = vpack.c.b16 %v3475, %v3471
    %v3584 = vpack.c.b16 %v3476, %v3472
    %v3585 = vpack.c.b16 %v3477, %v3473
    %v3586 = vpack.c.b16 %v3478, %v3474
    %v3587 = vpack.c.b16 %v3483, %v3479
    %v3588 = vpack.c.b16 %v3484, %v3480
    %v3589 = vpack.c.b16 %v3485, %v3481
    %v3590 = vpack.c.b16 %v3486, %v3482
    %v3591 = vpack.c.b16 %v3491, %v3487
    %v3592 = vpack.c.b16 %v3492, %v3488
    %v3593 = vpack.c.b16 %v3493, %v3489
    %v3594 = vpack.c.b16 %v3494, %v3490
    %v3595 = vpack.c.b16 %v3499, %v3495
    %v3596 = vpack.c.b16 %v3500, %v3496
    %v3597 = vpack.c.b16 %v3501, %v3497
    %v3598 = vpack.c.b16 %v3502, %v3498
    %v3599 = vpack.c.b16 %v3507, %v3503
    %v3600 = vpack.c.b16 %v3508, %v3504
    %v3601 = vpack.c.b16 %v3509, %v3505
    %v3602 = vpack.c.b16 %v3510, %v3506
    %v3603 = vpack.c.b16 %v3515, %v3511
    %v3604 = vpack.c.b16 %v3516, %v3512
    %v3605 = vpack.c.b16 %v3517, %v3513
    %v3606 = vpack.c.b16 %v3518, %v3514
    %v3607 = vpack.c.b16 %v3523, %v3519
    %v3608 = vpack.c.b16 %v3524, %v3520
    %v3609 = vpack.c.b16 %v3525, %v3521
    %v3610 = vpack.c.b16 %v3526, %v3522
    %v3611 = vpack.c.b16 %v3531, %v3527
    %v3612 = vpack.c.b16 %v3532, %v3528
    %v3613 = vpack.c.b16 %v3533, %v3529
    %v3614 = vpack.c.b16 %v3534, %v3530
    %v3615 = vpack.c.b16 %v3539, %v3535
    %v3616 = vpack.c.b16 %v3540, %v3536
    %v3617 = vpack.c.b16 %v3541, %v3537
    %v3618 = vpack.c.b16 %v3542, %v3538
    %v3619 = vpack.c.b16 %v3547, %v3543
    %v3620 = vpack.c.b16 %v3548, %v3544
    %v3621 = vpack.c.b16 %v3549, %v3545
    %v3622 = vpack.c.b16 %v3550, %v3546
    %v3623 = vpack.c.b16 %v3555, %v3551
    %v3624 = vpack.c.b16 %v3556, %v3552
    %v3625 = vpack.c.b16 %v3557, %v3553
    %v3626 = vpack.c.b16 %v3558, %v3554
    %v3627 = vpack.c.b16 %v3563, %v3559
    %v3628 = vpack.c.b16 %v3564, %v3560
    %v3629 = vpack.c.b16 %v3565, %v3561
    %v3630 = vpack.c.b16 %v3566, %v3562
    %3695 = vmatprep.subr.bf16.mxu0 %v3568
    %3696 = vmatpush1.bf16.msra.mxu0 %v3567
    %3697 = vmatprep.subr.bf16.mxu0 %v3572
    %3698 = vmatpush1.bf16.msra.mxu0 %v3571
    %3699 = vmatprep.subr.bf16.mxu0 %v3576
    %3700 = vmatpush1.bf16.msra.mxu0 %v3575
    %3701 = vmatprep.subr.bf16.mxu0 %v3580
    %3702 = vmatpush1.bf16.msra.mxu0 %v3579
    %3703 = vmatprep.subr.bf16.mxu0 %v3584
    %3704 = vmatpush1.bf16.msra.mxu0 %v3583
    %3705 = vmatprep.subr.bf16.mxu0 %v3588
    %3706 = vmatpush1.bf16.msra.mxu0 %v3587
    %3707 = vmatprep.subr.bf16.mxu0 %v3592
    %3708 = vmatpush1.bf16.msra.mxu0 %v3591
    %3709 = vmatprep.subr.bf16.mxu0 %v3596
    %3710 = vmatpush1.bf16.msra.mxu0 %v3595
    %3711 = vmatprep.subr.bf16.mxu0 %v3600
    %3712 = vmatpush1.bf16.msra.mxu0 %v3599
    %3713 = vmatprep.subr.bf16.mxu0 %v3604
    %3714 = vmatpush1.bf16.msra.mxu0 %v3603
    %3715 = vmatprep.subr.bf16.mxu0 %v3608
    %3716 = vmatpush1.bf16.msra.mxu0 %v3607
    %3717 = vmatprep.subr.bf16.mxu0 %v3612
    %3718 = vmatpush1.bf16.msra.mxu0 %v3611
    %3719 = vmatprep.subr.bf16.mxu0 %v3616
    %3720 = vmatpush1.bf16.msra.mxu0 %v3615
    %3721 = vmatprep.subr.bf16.mxu0 %v3620
    %3722 = vmatpush1.bf16.msra.mxu0 %v3619
    %3723 = vmatprep.subr.bf16.mxu0 %v3624
    %3724 = vmatpush1.bf16.msra.mxu0 %v3623
    %3725 = vmatprep.subr.bf16.mxu0 %v3628
    %3726 = vmatpush1.bf16.msra.mxu0 %v3627
    %3727 = vmatprep.mubr.bf16.mxu0 %v3286
    %3728 = vmatmul.mubr.bf16.gmra.mrb[0].mxu0 %v3285
    %v3729 = vpop.f32.mrb[0].mxu0
    %v3730 = vadd.f32 %v3358, %v3729
    %v3731 = vpop.f32.mrb[0].mxu0
    %v3732 = vadd.f32 %v3362, %v3731
    %v3733 = vpop.f32.mrb[0].mxu0
    %v3734 = vadd.f32 %v3358, %v3733
    %v3735 = vpop.f32.mrb[0].mxu0
    %v3736 = vadd.f32 %v3362, %v3735
    %3737 = vmatprep.mubr.bf16.mxu0 %v3288
    %3738 = vmatmul.mubr.bf16.gmra.mrb[0].mxu0 %v3287
    %v3739 = vpop.f32.mrb[0].mxu0
    %v3740 = vadd.f32 %v3358, %v3739
    %v3741 = vpop.f32.mrb[0].mxu0
    %v3742 = vadd.f32 %v3362, %v3741
    %v3743 = vpop.f32.mrb[0].mxu0
    %v3744 = vadd.f32 %v3358, %v3743
    %v3745 = vpop.f32.mrb[0].mxu0
    %v3746 = vadd.f32 %v3362, %v3745
    %3747 = vdwg.mxu0
    %3748 = vmatprep.subr.bf16.mxu0 %v3570
    %3749 = vmatpush1.bf16.msra.mxu0 %v3569
    %3750 = vmatprep.subr.bf16.mxu0 %v3574
    %3751 = vmatpush1.bf16.msra.mxu0 %v3573
    %3752 = vmatprep.subr.bf16.mxu0 %v3578
    %3753 = vmatpush1.bf16.msra.mxu0 %v3577
    %3754 = vmatprep.subr.bf16.mxu0 %v3582
    %3755 = vmatpush1.bf16.msra.mxu0 %v3581
    %3756 = vmatprep.subr.bf16.mxu0 %v3586
    %3757 = vmatpush1.bf16.msra.mxu0 %v3585
    %3758 = vmatprep.subr.bf16.mxu0 %v3590
    %3759 = vmatpush1.bf16.msra.mxu0 %v3589
    %3760 = vmatprep.subr.bf16.mxu0 %v3594
    %3761 = vmatpush1.bf16.msra.mxu0 %v3593
    %3762 = vmatprep.subr.bf16.mxu0 %v3598
    %3763 = vmatpush1.bf16.msra.mxu0 %v3597
    %3764 = vmatprep.subr.bf16.mxu0 %v3602
    %3765 = vmatpush1.bf16.msra.mxu0 %v3601
    %3766 = vmatprep.subr.bf16.mxu0 %v3606
    %3767 = vmatpush1.bf16.msra.mxu0 %v3605
    %3768 = vmatprep.subr.bf16.mxu0 %v3610
    %3769 = vmatpush1.bf16.msra.mxu0 %v3609
    %3770 = vmatprep.subr.bf16.mxu0 %v3614
    %3771 = vmatpush1.bf16.msra.mxu0 %v3613
    %3772 = vmatprep.subr.bf16.mxu0 %v3618
    %3773 = vmatpush1.bf16.msra.mxu0 %v3617
    %3774 = vmatprep.subr.bf16.mxu0 %v3622
    %3775 = vmatpush1.bf16.msra.mxu0 %v3621
    %3776 = vmatprep.subr.bf16.mxu0 %v3626
    %3777 = vmatpush1.bf16.msra.mxu0 %v3625
    %3778 = vmatprep.subr.bf16.mxu0 %v3630
    %3779 = vmatpush1.bf16.msra.mxu0 %v3629
    %3780 = vmatprep.mubr.bf16.mxu0 %v3286
    %3781 = vmatmul.mubr.bf16.gmra.mrb[0].mxu0 %v3285
    %v3782 = vpop.f32.mrb[0].mxu0
    %v3783 = vadd.f32 %v3366, %v3782
    %v3784 = vpop.f32.mrb[0].mxu0
    %v3785 = vadd.f32 %v3370, %v3784
    %v3786 = vpop.f32.mrb[0].mxu0
    %v3787 = vadd.f32 %v3366, %v3786
    %v3788 = vpop.f32.mrb[0].mxu0
    %v3789 = vadd.f32 %v3370, %v3788
    %3790 = vmatprep.mubr.bf16.mxu0 %v3288
    %3791 = vmatmul.mubr.bf16.gmra.mrb[0].mxu0 %v3287
    %v3792 = vpop.f32.mrb[0].mxu0
    %v3793 = vadd.f32 %v3366, %v3792
    %v3794 = vpop.f32.mrb[0].mxu0
    %v3795 = vadd.f32 %v3370, %v3794
    %v3796 = vpop.f32.mrb[0].mxu0
    %v3797 = vadd.f32 %v3366, %v3796
    %v3798 = vpop.f32.mrb[0].mxu0
    %v3799 = vadd.f32 %v3370, %v3798
    %3800 = vdwg.mxu0
    %v3801 = vmax.f32 %v3730, 0.0
    %v3802 = vmax.f32 %v3732, 0.0
    %v3803 = vmax.f32 %v3783, 0.0
    %v3804 = vmax.f32 %v3785, 0.0
    %v3805 = vmax.f32 %v3734, 0.0
    %v3806 = vmax.f32 %v3736, 0.0
    %v3807 = vmax.f32 %v3787, 0.0
    %v3808 = vmax.f32 %v3789, 0.0
    %v3809 = vmax.f32 %v3740, 0.0
    %v3810 = vmax.f32 %v3742, 0.0
    %v3811 = vmax.f32 %v3793, 0.0
    %v3812 = vmax.f32 %v3795, 0.0
    %v3813 = vmax.f32 %v3744, 0.0
    %v3814 = vmax.f32 %v3746, 0.0
    %v3815 = vmax.f32 %v3797, 0.0
    %v3816 = vmax.f32 %v3799, 0.0
    %v3817 = vpack.c.bf16 %v3805, %v3801
    %v3818 = vpack.c.bf16 %v3806, %v3802
    %v3819 = vpack.c.bf16 %v3807, %v3803
    %v3820 = vpack.c.bf16 %v3808, %v3804
    %v3821 = vpack.c.bf16 %v3813, %v3809
    %v3822 = vpack.c.bf16 %v3814, %v3810
    %v3823 = vpack.c.bf16 %v3815, %v3811
    %v3824 = vpack.c.bf16 %v3816, %v3812
    %v3825 = vld [vmem:[#allocation10] sm:$0xff]
    %v3826 = vld [vmem:[#allocation10 + $0x8] sm:$0xff]
    %v3827 = vld [vmem:[#allocation10 + $0x10] sm:$0xff]
    %v3828 = vld [vmem:[#allocation10 + $0x18] sm:$0xff]
    %v3829 = vld [vmem:[#allocation10 + $0x20] sm:$0xff]
    %v3830 = vld [vmem:[#allocation10 + $0x28] sm:$0xff]
    %v3831 = vld [vmem:[#allocation10 + $0x30] sm:$0xff]
    %v3832 = vld [vmem:[#allocation10 + $0x38] sm:$0xff]
    %v3833 = vld [vmem:[#allocation10 + $0x40] sm:$0xff]
    %v3834 = vld [vmem:[#allocation10 + $0x48] sm:$0xff]
    %v3835 = vld [vmem:[#allocation10 + $0x50] sm:$0xff]
    %v3836 = vld [vmem:[#allocation10 + $0x58] sm:$0xff]
    %v3837 = vld [vmem:[#allocation10 + $0x60] sm:$0xff]
    %v3838 = vld [vmem:[#allocation10 + $0x68] sm:$0xff]
    %v3839 = vld [vmem:[#allocation10 + $0x70] sm:$0xff]
    %v3840 = vld [vmem:[#allocation10 + $0x78] sm:$0xff]
    %v3841 = vld [vmem:[#allocation10 + $0x80] sm:$0xff]
    %v3842 = vld [vmem:[#allocation10 + $0x88] sm:$0xff]
    %v3843 = vld [vmem:[#allocation10 + $0x90] sm:$0xff]
    %v3844 = vld [vmem:[#allocation10 + $0x98] sm:$0xff]
    %v3845 = vld [vmem:[#allocation10 + $0xa0] sm:$0xff]
    %v3846 = vld [vmem:[#allocation10 + $0xa8] sm:$0xff]
    %v3847 = vld [vmem:[#allocation10 + $0xb0] sm:$0xff]
    %v3848 = vld [vmem:[#allocation10 + $0xb8] sm:$0xff]
    %v3849 = vld [vmem:[#allocation10 + $0xc0] sm:$0xff]
    %v3850 = vld [vmem:[#allocation10 + $0xc8] sm:$0xff]
    %v3851 = vld [vmem:[#allocation10 + $0xd0] sm:$0xff]
    %v3852 = vld [vmem:[#allocation10 + $0xd8] sm:$0xff]
    %v3853 = vld [vmem:[#allocation10 + $0xe0] sm:$0xff]
    %v3854 = vld [vmem:[#allocation10 + $0xe8] sm:$0xff]
    %v3855 = vld [vmem:[#allocation10 + $0xf0] sm:$0xff]
    %v3856 = vld [vmem:[#allocation10 + $0xf8] sm:$0xff]
    %v3857 = vld [vmem:[#allocation10 + $0x100] sm:$0xff]
    %v3858 = vld [vmem:[#allocation10 + $0x108] sm:$0xff]
    %v3859 = vld [vmem:[#allocation10 + $0x110] sm:$0xff]
    %v3860 = vld [vmem:[#allocation10 + $0x118] sm:$0xff]
    %v3861 = vld [vmem:[#allocation10 + $0x120] sm:$0xff]
    %v3862 = vld [vmem:[#allocation10 + $0x128] sm:$0xff]
    %v3863 = vld [vmem:[#allocation10 + $0x130] sm:$0xff]
    %v3864 = vld [vmem:[#allocation10 + $0x138] sm:$0xff]
    %v3865 = vld [vmem:[#allocation10 + $0x140] sm:$0xff]
    %v3866 = vld [vmem:[#allocation10 + $0x148] sm:$0xff]
    %v3867 = vld [vmem:[#allocation10 + $0x150] sm:$0xff]
    %v3868 = vld [vmem:[#allocation10 + $0x158] sm:$0xff]
    %v3869 = vld [vmem:[#allocation10 + $0x160] sm:$0xff]
    %v3870 = vld [vmem:[#allocation10 + $0x168] sm:$0xff]
    %v3871 = vld [vmem:[#allocation10 + $0x170] sm:$0xff]
    %v3872 = vld [vmem:[#allocation10 + $0x178] sm:$0xff]
    %v3873 = vld [vmem:[#allocation10 + $0x180] sm:$0xff]
    %v3874 = vld [vmem:[#allocation10 + $0x188] sm:$0xff]
    %v3875 = vld [vmem:[#allocation10 + $0x190] sm:$0xff]
    %v3876 = vld [vmem:[#allocation10 + $0x198] sm:$0xff]
    %v3877 = vld [vmem:[#allocation10 + $0x1a0] sm:$0xff]
    %v3878 = vld [vmem:[#allocation10 + $0x1a8] sm:$0xff]
    %v3879 = vld [vmem:[#allocation10 + $0x1b0] sm:$0xff]
    %v3880 = vld [vmem:[#allocation10 + $0x1b8] sm:$0xff]
    %v3881 = vld [vmem:[#allocation10 + $0x1c0] sm:$0xff]
    %v3882 = vld [vmem:[#allocation10 + $0x1c8] sm:$0xff]
    %v3883 = vld [vmem:[#allocation10 + $0x1d0] sm:$0xff]
    %v3884 = vld [vmem:[#allocation10 + $0x1d8] sm:$0xff]
    %v3885 = vld [vmem:[#allocation10 + $0x1e0] sm:$0xff]
    %v3886 = vld [vmem:[#allocation10 + $0x1e8] sm:$0xff]
    %v3887 = vld [vmem:[#allocation10 + $0x1f0] sm:$0xff]
    %v3888 = vld [vmem:[#allocation10 + $0x1f8] sm:$0xff]
    %v3889 = vld [vmem:[%s10] sm:$0x3]
    %v3891 = vlaneseq
    %v3892 = vshrl.u32 %v3891, 7
    %v3893 = vsub.s32 0, %v3892
    %v3894 = vrot.slane %v3889, %v3893
    %v3895 = vlaneseq
    %v3896 = vshrl.u32 %v3895, 7
    %v3897 = vsub.s32 1, %v3896
    %v3898 = vrot.slane %v3889, %v3897
    %v3965 = vunpack.c.l.b16 %v3825
    %v3966 = vunpack.c.h.b16 %v3825
    %v3967 = vunpack.c.l.b16 %v3826
    %v3968 = vunpack.c.h.b16 %v3826
    %v3969 = vunpack.c.l.b16 %v3827
    %v3970 = vunpack.c.h.b16 %v3827
    %v3971 = vunpack.c.l.b16 %v3828
    %v3972 = vunpack.c.h.b16 %v3828
    %v3973 = vunpack.c.l.b16 %v3829
    %v3974 = vunpack.c.h.b16 %v3829
    %v3975 = vunpack.c.l.b16 %v3830
    %v3976 = vunpack.c.h.b16 %v3830
    %v3977 = vunpack.c.l.b16 %v3831
    %v3978 = vunpack.c.h.b16 %v3831
    %v3979 = vunpack.c.l.b16 %v3832
    %v3980 = vunpack.c.h.b16 %v3832
    %v3981 = vunpack.c.l.b16 %v3833
    %v3982 = vunpack.c.h.b16 %v3833
    %v3983 = vunpack.c.l.b16 %v3834
    %v3984 = vunpack.c.h.b16 %v3834
    %v3985 = vunpack.c.l.b16 %v3835
    %v3986 = vunpack.c.h.b16 %v3835
    %v3987 = vunpack.c.l.b16 %v3836
    %v3988 = vunpack.c.h.b16 %v3836
    %v3989 = vunpack.c.l.b16 %v3837
    %v3990 = vunpack.c.h.b16 %v3837
    %v3991 = vunpack.c.l.b16 %v3838
    %v3992 = vunpack.c.h.b16 %v3838
    %v3993 = vunpack.c.l.b16 %v3839
    %v3994 = vunpack.c.h.b16 %v3839
    %v3995 = vunpack.c.l.b16 %v3840
    %v3996 = vunpack.c.h.b16 %v3840
    %v3997 = vunpack.c.l.b16 %v3841
    %v3998 = vunpack.c.h.b16 %v3841
    %v3999 = vunpack.c.l.b16 %v3842
    %v4000 = vunpack.c.h.b16 %v3842
    %v4001 = vunpack.c.l.b16 %v3843
    %v4002 = vunpack.c.h.b16 %v3843
    %v4003 = vunpack.c.l.b16 %v3844
    %v4004 = vunpack.c.h.b16 %v3844
    %v4005 = vunpack.c.l.b16 %v3845
    %v4006 = vunpack.c.h.b16 %v3845
    %v4007 = vunpack.c.l.b16 %v3846
    %v4008 = vunpack.c.h.b16 %v3846
    %v4009 = vunpack.c.l.b16 %v3847
    %v4010 = vunpack.c.h.b16 %v3847
    %v4011 = vunpack.c.l.b16 %v3848
    %v4012 = vunpack.c.h.b16 %v3848
    %v4013 = vunpack.c.l.b16 %v3849
    %v4014 = vunpack.c.h.b16 %v3849
    %v4015 = vunpack.c.l.b16 %v3850
    %v4016 = vunpack.c.h.b16 %v3850
    %v4017 = vunpack.c.l.b16 %v3851
    %v4018 = vunpack.c.h.b16 %v3851
    %v4019 = vunpack.c.l.b16 %v3852
    %v4020 = vunpack.c.h.b16 %v3852
    %v4021 = vunpack.c.l.b16 %v3853
    %v4022 = vunpack.c.h.b16 %v3853
    %v4023 = vunpack.c.l.b16 %v3854
    %v4024 = vunpack.c.h.b16 %v3854
    %v4025 = vunpack.c.l.b16 %v3855
    %v4026 = vunpack.c.h.b16 %v3855
    %v4027 = vunpack.c.l.b16 %v3856
    %v4028 = vunpack.c.h.b16 %v3856
    %v4029 = vunpack.c.l.b16 %v3857
    %v4030 = vunpack.c.h.b16 %v3857
    %v4031 = vunpack.c.l.b16 %v3858
    %v4032 = vunpack.c.h.b16 %v3858
    %v4033 = vunpack.c.l.b16 %v3859
    %v4034 = vunpack.c.h.b16 %v3859
    %v4035 = vunpack.c.l.b16 %v3860
    %v4036 = vunpack.c.h.b16 %v3860
    %v4037 = vunpack.c.l.b16 %v3861
    %v4038 = vunpack.c.h.b16 %v3861
    %v4039 = vunpack.c.l.b16 %v3862
    %v4040 = vunpack.c.h.b16 %v3862
    %v4041 = vunpack.c.l.b16 %v3863
    %v4042 = vunpack.c.h.b16 %v3863
    %v4043 = vunpack.c.l.b16 %v3864
    %v4044 = vunpack.c.h.b16 %v3864
    %v4045 = vunpack.c.l.b16 %v3865
    %v4046 = vunpack.c.h.b16 %v3865
    %v4047 = vunpack.c.l.b16 %v3866
    %v4048 = vunpack.c.h.b16 %v3866
    %v4049 = vunpack.c.l.b16 %v3867
    %v4050 = vunpack.c.h.b16 %v3867
    %v4051 = vunpack.c.l.b16 %v3868
    %v4052 = vunpack.c.h.b16 %v3868
    %v4053 = vunpack.c.l.b16 %v3869
    %v4054 = vunpack.c.h.b16 %v3869
    %v4055 = vunpack.c.l.b16 %v3870
    %v4056 = vunpack.c.h.b16 %v3870
    %v4057 = vunpack.c.l.b16 %v3871
    %v4058 = vunpack.c.h.b16 %v3871
    %v4059 = vunpack.c.l.b16 %v3872
    %v4060 = vunpack.c.h.b16 %v3872
    %v4061 = vunpack.c.l.b16 %v3873
    %v4062 = vunpack.c.h.b16 %v3873
    %v4063 = vunpack.c.l.b16 %v3874
    %v4064 = vunpack.c.h.b16 %v3874
    %v4065 = vunpack.c.l.b16 %v3875
    %v4066 = vunpack.c.h.b16 %v3875
    %v4067 = vunpack.c.l.b16 %v3876
    %v4068 = vunpack.c.h.b16 %v3876
    %v4069 = vunpack.c.l.b16 %v3877
    %v4070 = vunpack.c.h.b16 %v3877
    %v4071 = vunpack.c.l.b16 %v3878
    %v4072 = vunpack.c.h.b16 %v3878
    %v4073 = vunpack.c.l.b16 %v3879
    %v4074 = vunpack.c.h.b16 %v3879
    %v4075 = vunpack.c.l.b16 %v3880
    %v4076 = vunpack.c.h.b16 %v3880
    %v4077 = vunpack.c.l.b16 %v3881
    %v4078 = vunpack.c.h.b16 %v3881
    %v4079 = vunpack.c.l.b16 %v3882
    %v4080 = vunpack.c.h.b16 %v3882
    %v4081 = vunpack.c.l.b16 %v3883
    %v4082 = vunpack.c.h.b16 %v3883
    %v4083 = vunpack.c.l.b16 %v3884
    %v4084 = vunpack.c.h.b16 %v3884
    %v4085 = vunpack.c.l.b16 %v3885
    %v4086 = vunpack.c.h.b16 %v3885
    %v4087 = vunpack.c.l.b16 %v3886
    %v4088 = vunpack.c.h.b16 %v3886
    %v4089 = vunpack.c.l.b16 %v3887
    %v4090 = vunpack.c.h.b16 %v3887
    %v4091 = vunpack.c.l.b16 %v3888
    %v4092 = vunpack.c.h.b16 %v3888
    %v4093 = vpack.c.b16 %v3967, %v3965
    %v4094 = vpack.c.b16 %v3968, %v3966
    %v4095 = vpack.c.b16 %v3971, %v3969
    %v4096 = vpack.c.b16 %v3972, %v3970
    %v4097 = vpack.c.b16 %v3975, %v3973
    %v4098 = vpack.c.b16 %v3976, %v3974
    %v4099 = vpack.c.b16 %v3979, %v3977
    %v4100 = vpack.c.b16 %v3980, %v3978
    %v4101 = vpack.c.b16 %v3983, %v3981
    %v4102 = vpack.c.b16 %v3984, %v3982
    %v4103 = vpack.c.b16 %v3987, %v3985
    %v4104 = vpack.c.b16 %v3988, %v3986
    %v4105 = vpack.c.b16 %v3991, %v3989
    %v4106 = vpack.c.b16 %v3992, %v3990
    %v4107 = vpack.c.b16 %v3995, %v3993
    %v4108 = vpack.c.b16 %v3996, %v3994
    %v4109 = vpack.c.b16 %v3999, %v3997
    %v4110 = vpack.c.b16 %v4000, %v3998
    %v4111 = vpack.c.b16 %v4003, %v4001
    %v4112 = vpack.c.b16 %v4004, %v4002
    %v4113 = vpack.c.b16 %v4007, %v4005
    %v4114 = vpack.c.b16 %v4008, %v4006
    %v4115 = vpack.c.b16 %v4011, %v4009
    %v4116 = vpack.c.b16 %v4012, %v4010
    %v4117 = vpack.c.b16 %v4015, %v4013
    %v4118 = vpack.c.b16 %v4016, %v4014
    %v4119 = vpack.c.b16 %v4019, %v4017
    %v4120 = vpack.c.b16 %v4020, %v4018
    %v4121 = vpack.c.b16 %v4023, %v4021
    %v4122 = vpack.c.b16 %v4024, %v4022
    %v4123 = vpack.c.b16 %v4027, %v4025
    %v4124 = vpack.c.b16 %v4028, %v4026
    %v4125 = vpack.c.b16 %v4031, %v4029
    %v4126 = vpack.c.b16 %v4032, %v4030
    %v4127 = vpack.c.b16 %v4035, %v4033
    %v4128 = vpack.c.b16 %v4036, %v4034
    %v4129 = vpack.c.b16 %v4039, %v4037
    %v4130 = vpack.c.b16 %v4040, %v4038
    %v4131 = vpack.c.b16 %v4043, %v4041
    %v4132 = vpack.c.b16 %v4044, %v4042
    %v4133 = vpack.c.b16 %v4047, %v4045
    %v4134 = vpack.c.b16 %v4048, %v4046
    %v4135 = vpack.c.b16 %v4051, %v4049
    %v4136 = vpack.c.b16 %v4052, %v4050
    %v4137 = vpack.c.b16 %v4055, %v4053
    %v4138 = vpack.c.b16 %v4056, %v4054
    %v4139 = vpack.c.b16 %v4059, %v4057
    %v4140 = vpack.c.b16 %v4060, %v4058
    %v4141 = vpack.c.b16 %v4063, %v4061
    %v4142 = vpack.c.b16 %v4064, %v4062
    %v4143 = vpack.c.b16 %v4067, %v4065
    %v4144 = vpack.c.b16 %v4068, %v4066
    %v4145 = vpack.c.b16 %v4071, %v4069
    %v4146 = vpack.c.b16 %v4072, %v4070
    %v4147 = vpack.c.b16 %v4075, %v4073
    %v4148 = vpack.c.b16 %v4076, %v4074
    %v4149 = vpack.c.b16 %v4079, %v4077
    %v4150 = vpack.c.b16 %v4080, %v4078
    %v4151 = vpack.c.b16 %v4083, %v4081
    %v4152 = vpack.c.b16 %v4084, %v4082
    %v4153 = vpack.c.b16 %v4087, %v4085
    %v4154 = vpack.c.b16 %v4088, %v4086
    %v4155 = vpack.c.b16 %v4091, %v4089
    %v4156 = vpack.c.b16 %v4092, %v4090
    %4221 = vmatprep.subr.bf16.mxu0 %v4094
    %4222 = vmatpush1.bf16.msra.mxu0 %v4093
    %4223 = vmatprep.subr.bf16.mxu0 %v4096
    %4224 = vmatpush1.bf16.msra.mxu0 %v4095
    %4225 = vmatprep.subr.bf16.mxu0 %v4098
    %4226 = vmatpush1.bf16.msra.mxu0 %v4097
    %4227 = vmatprep.subr.bf16.mxu0 %v4100
    %4228 = vmatpush1.bf16.msra.mxu0 %v4099
    %4229 = vmatprep.subr.bf16.mxu0 %v4102
    %4230 = vmatpush1.bf16.msra.mxu0 %v4101
    %4231 = vmatprep.subr.bf16.mxu0 %v4104
    %4232 = vmatpush1.bf16.msra.mxu0 %v4103
    %4233 = vmatprep.subr.bf16.mxu0 %v4106
    %4234 = vmatpush1.bf16.msra.mxu0 %v4105
    %4235 = vmatprep.subr.bf16.mxu0 %v4108
    %4236 = vmatpush1.bf16.msra.mxu0 %v4107
    %4237 = vmatprep.subr.bf16.mxu0 %v4110
    %4238 = vmatpush1.bf16.msra.mxu0 %v4109
    %4239 = vmatprep.subr.bf16.mxu0 %v4112
    %4240 = vmatpush1.bf16.msra.mxu0 %v4111
    %4241 = vmatprep.subr.bf16.mxu0 %v4114
    %4242 = vmatpush1.bf16.msra.mxu0 %v4113
    %4243 = vmatprep.subr.bf16.mxu0 %v4116
    %4244 = vmatpush1.bf16.msra.mxu0 %v4115
    %4245 = vmatprep.subr.bf16.mxu0 %v4118
    %4246 = vmatpush1.bf16.msra.mxu0 %v4117
    %4247 = vmatprep.subr.bf16.mxu0 %v4120
    %4248 = vmatpush1.bf16.msra.mxu0 %v4119
    %4249 = vmatprep.subr.bf16.mxu0 %v4122
    %4250 = vmatpush1.bf16.msra.mxu0 %v4121
    %4251 = vmatprep.subr.bf16.mxu0 %v4124
    %4252 = vmatpush1.bf16.msra.mxu0 %v4123
    %4253 = vmatprep.mubr.bf16.mxu0 %v3818
    %4254 = vmatmul.mubr.bf16.gmra.mrb[0].mxu0 %v3817
    %v4255 = vpop.f32.mrb[0].mxu0
    %v4256 = vadd.f32 %v3894, %v4255
    %v4257 = vpop.f32.mrb[0].mxu0
    %v4258 = vadd.f32 %v3898, %v4257
    %v4259 = vpop.f32.mrb[0].mxu0
    %v4260 = vadd.f32 %v3894, %v4259
    %v4261 = vpop.f32.mrb[0].mxu0
    %v4262 = vadd.f32 %v3898, %v4261
    %4263 = vmatprep.mubr.bf16.mxu0 %v3822
    %4264 = vmatmul.mubr.bf16.gmra.mrb[0].mxu0 %v3821
    %v4265 = vpop.f32.mrb[0].mxu0
    %v4266 = vadd.f32 %v3894, %v4265
    %v4267 = vpop.f32.mrb[0].mxu0
    %v4268 = vadd.f32 %v3898, %v4267
    %v4269 = vpop.f32.mrb[0].mxu0
    %v4270 = vadd.f32 %v3894, %v4269
    %v4271 = vpop.f32.mrb[0].mxu0
    %v4272 = vadd.f32 %v3898, %v4271
    %4273 = vdwg.mxu0
    %4274 = vmatprep.subr.bf16.mxu0 %v4126
    %4275 = vmatpush1.bf16.msra.mxu0 %v4125
    %4276 = vmatprep.subr.bf16.mxu0 %v4128
    %4277 = vmatpush1.bf16.msra.mxu0 %v4127
    %4278 = vmatprep.subr.bf16.mxu0 %v4130
    %4279 = vmatpush1.bf16.msra.mxu0 %v4129
    %4280 = vmatprep.subr.bf16.mxu0 %v4132
    %4281 = vmatpush1.bf16.msra.mxu0 %v4131
    %4282 = vmatprep.subr.bf16.mxu0 %v4134
    %4283 = vmatpush1.bf16.msra.mxu0 %v4133
    %4284 = vmatprep.subr.bf16.mxu0 %v4136
    %4285 = vmatpush1.bf16.msra.mxu0 %v4135
    %4286 = vmatprep.subr.bf16.mxu0 %v4138
    %4287 = vmatpush1.bf16.msra.mxu0 %v4137
    %4288 = vmatprep.subr.bf16.mxu0 %v4140
    %4289 = vmatpush1.bf16.msra.mxu0 %v4139
    %4290 = vmatprep.subr.bf16.mxu0 %v4142
    %4291 = vmatpush1.bf16.msra.mxu0 %v4141
    %4292 = vmatprep.subr.bf16.mxu0 %v4144
    %4293 = vmatpush1.bf16.msra.mxu0 %v4143
    %4294 = vmatprep.subr.bf16.mxu0 %v4146
    %4295 = vmatpush1.bf16.msra.mxu0 %v4145
    %4296 = vmatprep.subr.bf16.mxu0 %v4148
    %4297 = vmatpush1.bf16.msra.mxu0 %v4147
    %4298 = vmatprep.subr.bf16.mxu0 %v4150
    %4299 = vmatpush1.bf16.msra.mxu0 %v4149
    %4300 = vmatprep.subr.bf16.mxu0 %v4152
    %4301 = vmatpush1.bf16.msra.mxu0 %v4151
    %4302 = vmatprep.subr.bf16.mxu0 %v4154
    %4303 = vmatpush1.bf16.msra.mxu0 %v4153
    %4304 = vmatprep.subr.bf16.mxu0 %v4156
    %4305 = vmatpush1.bf16.msra.mxu0 %v4155
    %4306 = vmatprep.mubr.bf16.mxu0 %v3820
    %4307 = vmatmul.mubr.bf16.gmra.mrb[0].mxu0 %v3819
    %v4308 = vpop.f32.mrb[0].mxu0
    %v4309 = vadd.f32 %v4256, %v4308
    %v4310 = vpop.f32.mrb[0].mxu0
    %v4311 = vadd.f32 %v4258, %v4310
    %v4312 = vpop.f32.mrb[0].mxu0
    %v4313 = vadd.f32 %v4260, %v4312
    %v4314 = vpop.f32.mrb[0].mxu0
    %v4315 = vadd.f32 %v4262, %v4314
    %4316 = vmatprep.mubr.bf16.mxu0 %v3824
    %4317 = vmatmul.mubr.bf16.gmra.mrb[0].mxu0 %v3823
    %v4318 = vpop.f32.mrb[0].mxu0
    %v4319 = vadd.f32 %v4266, %v4318
    %v4320 = vpop.f32.mrb[0].mxu0
    %v4321 = vadd.f32 %v4268, %v4320
    %v4322 = vpop.f32.mrb[0].mxu0
    %v4323 = vadd.f32 %v4270, %v4322
    %v4324 = vpop.f32.mrb[0].mxu0
    %v4325 = vadd.f32 %v4272, %v4324
    %4326 = vdwg.mxu0
    %v4327 = vadd.f32 %v4309, %v3277
    %v4328 = vadd.f32 %v4311, %v3278
    %v4329 = vadd.f32 %v4313, %v3279
    %v4330 = vadd.f32 %v4315, %v3280
    %v4331 = vadd.f32 %v4319, %v3281
    %v4332 = vadd.f32 %v4321, %v3282
    %v4333 = vadd.f32 %v4323, %v3283
    %v4334 = vadd.f32 %v4325, %v3284
    %v4335 = vld [vmem:[%s11] sm:$0x3]
    %v4336 = vld [vmem:[%s12] sm:$0x3]
    %v4337 = vadd.f32 %v4327, %v4328
    %4338 = vadd.xlane.f32.xlu0 %v4337
    %v4339 = vpop.xlane.xlu0 %4338
    %v4340 = vadd.f32 %v4329, %v4330
    %4341 = vadd.xlane.f32.xlu0 %v4340
    %v4342 = vpop.xlane.xlu0 %4341
    %v4343 = vadd.f32 %v4331, %v4332
    %4344 = vadd.xlane.f32.xlu0 %v4343
    %v4345 = vpop.xlane.xlu0 %4344
    %v4346 = vadd.f32 %v4333, %v4334
    %4347 = vadd.xlane.f32.xlu0 %v4346
    %v4348 = vpop.xlane.xlu0 %4347
    %v4349 = vmul.f32 %v4339, %v3194
    %v4350 = vmul.f32 %v4342, %v3194
    %v4351 = vmul.f32 %v4345, %v3194
    %v4352 = vmul.f32 %v4348, %v3194
    %v4353 = vsub.f32 %v4327, %v4349
    %v4354 = vsub.f32 %v4328, %v4349
    %v4355 = vsub.f32 %v4329, %v4350
    %v4356 = vsub.f32 %v4330, %v4350
    %v4357 = vsub.f32 %v4331, %v4351
    %v4358 = vsub.f32 %v4332, %v4351
    %v4359 = vsub.f32 %v4333, %v4352
    %v4360 = vsub.f32 %v4334, %v4352
    %v4361 = vmul.f32 %v4353, %v4353
    %v4362 = vmul.f32 %v4354, %v4354
    %v4363 = vmul.f32 %v4355, %v4355
    %v4364 = vmul.f32 %v4356, %v4356
    %v4365 = vmul.f32 %v4357, %v4357
    %v4366 = vmul.f32 %v4358, %v4358
    %v4367 = vmul.f32 %v4359, %v4359
    %v4368 = vmul.f32 %v4360, %v4360
    %v4369 = vadd.f32 %v4361, %v4362
    %4370 = vadd.xlane.f32.xlu0 %v4369
    %v4371 = vpop.xlane.xlu0 %4370
    %v4372 = vadd.f32 %v4363, %v4364
    %4373 = vadd.xlane.f32.xlu0 %v4372
    %v4374 = vpop.xlane.xlu0 %4373
    %v4375 = vadd.f32 %v4365, %v4366
    %4376 = vadd.xlane.f32.xlu0 %v4375
    %v4377 = vpop.xlane.xlu0 %4376
    %v4378 = vadd.f32 %v4367, %v4368
    %4379 = vadd.xlane.f32.xlu0 %v4378
    %v4380 = vpop.xlane.xlu0 %4379
    %v4381 = vmul.f32 %v4371, %v3194
    %v4382 = vmul.f32 %v4374, %v3194
    %v4383 = vmul.f32 %v4377, %v3194
    %v4384 = vmul.f32 %v4380, %v3194
    %v4385 = vadd.f32 %v4381, 1e-05
    %v4386 = vadd.f32 %v4382, 1e-05
    %v4387 = vadd.f32 %v4383, 1e-05
    %v4388 = vadd.f32 %v4384, 1e-05
    %v4389 = vrsqrt.pop %v4385
    %v4390 = vrsqrt.pop %v4386
    %v4391 = vrsqrt.pop %v4387
    %v4392 = vrsqrt.pop %v4388
    %v4393 = vmul.f32 %v4353, %v4389
    %v4394 = vmul.f32 %v4354, %v4389
    %v4395 = vmul.f32 %v4355, %v4390
    %v4396 = vmul.f32 %v4356, %v4390
    %v4397 = vmul.f32 %v4357, %v4391
    %v4398 = vmul.f32 %v4358, %v4391
    %v4399 = vmul.f32 %v4359, %v4392
    %v4400 = vmul.f32 %v4360, %v4392
    %v4402 = vlaneseq
    %v4403 = vshrl.u32 %v4402, 7
    %v4404 = vsub.s32 0, %v4403
    %v4405 = vrot.slane %v4335, %v4404
    %v4406 = vlaneseq
    %v4407 = vshrl.u32 %v4406, 7
    %v4408 = vsub.s32 1, %v4407
    %v4409 = vrot.slane %v4335, %v4408
    %v4412 = vmul.f32 %v4393, %v4405
    %v4413 = vmul.f32 %v4394, %v4409
    %v4414 = vmul.f32 %v4395, %v4405
    %v4415 = vmul.f32 %v4396, %v4409
    %v4416 = vmul.f32 %v4397, %v4405
    %v4417 = vmul.f32 %v4398, %v4409
    %v4418 = vmul.f32 %v4399, %v4405
    %v4419 = vmul.f32 %v4400, %v4409
    %v4421 = vlaneseq
    %v4422 = vshrl.u32 %v4421, 7
    %v4423 = vsub.s32 0, %v4422
    %v4424 = vrot.slane %v4336, %v4423
    %v4425 = vlaneseq
    %v4426 = vshrl.u32 %v4425, 7
    %v4427 = vsub.s32 1, %v4426
    %v4428 = vrot.slane %v4336, %v4427
    %v4431 = vadd.f32 %v4412, %v4424
    %v4432 = vadd.f32 %v4413, %v4428
    %v4433 = vadd.f32 %v4414, %v4424
    %v4434 = vadd.f32 %v4415, %v4428
    %v4435 = vadd.f32 %v4416, %v4424
    %v4436 = vadd.f32 %v4417, %v4428
    %v4437 = vadd.f32 %v4418, %v4424
    %v4438 = vadd.f32 %v4419, %v4428
    %v4439 = vpack.c.bf16 %v4431, %v4431
    %v4440 = vpack.c.bf16 %v4432, %v4432
    %v4441 = vpack.c.bf16 %v4433, %v4433
    %v4442 = vpack.c.bf16 %v4434, %v4434
    %v4443 = vpack.c.bf16 %v4435, %v4435
    %v4444 = vpack.c.bf16 %v4436, %v4436
    %v4445 = vpack.c.bf16 %v4437, %v4437
    %v4446 = vpack.c.bf16 %v4438, %v4438
    %v4455 = vunpack.c.l.b16 %v4439
    %v4456 = vunpack.c.l.b16 %v4440
    %v4457 = vunpack.c.l.b16 %v4441
    %v4458 = vunpack.c.l.b16 %v4442
    %v4459 = vunpack.c.l.b16 %v4443
    %v4460 = vunpack.c.l.b16 %v4444
    %v4461 = vunpack.c.l.b16 %v4445
    %v4462 = vunpack.c.l.b16 %v4446
    %v4463 = vpack.c.b16 %v4456, %v4455
    %v4464 = vpack.c.b16 %v4458, %v4457
    %v4465 = vpack.c.b16 %v4460, %v4459
    %v4466 = vpack.c.b16 %v4462, %v4461
    %4471 = vst [vmem:[#allocation11] sm:$0xff] %v4463
    %4472 = vst [vmem:[#allocation11 + $0x8] sm:$0xff] %v4464
    %4473 = vst [vmem:[#allocation11 + $0x10] sm:$0xff] %v4465
    %4474 = vst [vmem:[#allocation11 + $0x18] sm:$0xff] %v4466
    // Predicated region
    $region74: #{tpu_custom_call.1} parent=1 // pred_check
      _
    $region75: #{tpu_custom_call.1} parent=1 // pred_check_branch
      %4476 = sbr.rel (0) target = $region77
    $region76: #{tpu_custom_call.1} parent=1 // pred_region
      %s4478 = ssub.s32 512, 512
      %4479 = vsyncadd [#allocation4], %s4478
      %s4480 = sshll.u32 [#allocation11], 4
      %s4481 = int_to_ptr.vmem [resolvable:$true] %s4480
      %4486 = dma.vmem_to_hbm [thread:$0]  %s4481, 512, %s13, [#allocation4], 128, 128, 8
    $region77: #{tpu_custom_call.1} parent=1 // pred_fallthru
      _
    // Predicated region
    $region78: #{tpu_custom_call.1} parent=1 // pred_check
      _
    $region79: #{tpu_custom_call.1} parent=1 // pred_check_branch
      %4488 = sbr.rel (0) target = $region81
    $region80: #{tpu_custom_call.1} parent=1 // pred_region
      %4489 = dma.done [#allocation4], 512
    $region81: #{tpu_custom_call.1} parent=1 // pred_fallthru
      _
    %4490 = vsyncpa [#allocation3], 1
    %4491 = vsyncpa [#allocation6], 1
    %4492 = vsyncpa [#allocation9], 1
    %4493 = vsyncpa [#allocation4], 1

</llo_original>
